<compile_context>
chip_gen: v7x
topology: tpu7x:2x2x1
jax: 0.10.0
libtpu: 0.0.40
codegen_flags: <defaults>
</compile_context>

<pallas_src>
import functools

import jax
import jax.numpy as jnp
from jax import lax
from jax.experimental import pallas as pl
from jax.experimental.pallas import tpu as pltpu
from jax.scipy.special import digamma, gammaln

_LN_EPS = 1e-5  # torch.nn.LayerNorm default

# row layout of the packed per-modality vector table vec_d (3, 11, D)
_LN1G, _LN1B, _BO, _LN2G, _LN2B, _B2, _DBP, _PB1, _PB2, _PLNG, _PLNB = range(11)


# ----------------------------- in-kernel math helpers -----------------------------

def _gelu(x):
    # tanh-based GELU (EUP-friendly).  TODO(synk): torch default is exact erf GELU.
    c = 0.7978845608028654  # sqrt(2/pi)
    return 0.5 * x * (1.0 + jnp.tanh(c * (x + 0.044715 * x * x * x)))


def _softplus(x):
    # matches torch.nn.Softplus(beta=1, threshold=20)
    return jnp.where(x > 20.0, x, jnp.log(1.0 + jnp.exp(jnp.minimum(x, 20.0))))


def _layernorm(v, g, b):
    mu = jnp.mean(v, axis=-1, keepdims=True)
    var = jnp.mean(jnp.square(v - mu), axis=-1, keepdims=True)
    return (v - mu) * lax.rsqrt(var + _LN_EPS) * g + b


def _bf16(x):
    return x.astype(jnp.bfloat16)


# ----------------------------- the fused TDFM kernel -----------------------------

def _tdfm_kernel(x_ref, wqkv_ref, wo_ref, w1_ref, b1_ref, w2_ref,
                 dwp_ref, dwc_ref, dbc_ref, pw1_ref, pw2_ref, vec_ref,
                 fwp_ref, fbp_ref, fwc_ref, fbc_ref,
                 ev_ref, cls_ref, acc_ref, *, heads, dim_head, classes):
    # grid = (batch tiles, modalities); modality (reduction) axis last.
    m = pl.program_id(1)
    TB, N, D = x_ref.shape
    rows = TB * N

    vd = vec_ref[m]                                    # (11, D) f32 — one tiny resident load
    ln1g, ln1b = vd[_LN1G:_LN1G + 1], vd[_LN1B:_LN1B + 1]
    bo = vd[_BO:_BO + 1]
    ln2g, ln2b = vd[_LN2G:_LN2G + 1], vd[_LN2B:_LN2B + 1]
    b2 = vd[_B2:_B2 + 1]
    dbp = vd[_DBP:_DBP + 1]
    pb1, pb2 = vd[_PB1:_PB1 + 1], vd[_PB2:_PB2 + 1]
    plng, plnb = vd[_PLNG:_PLNG + 1], vd[_PLNB:_PLNB + 1]

    x_bf = x_ref[...].reshape(rows, D)                 # bf16 residual stream (halved input DMA)
    x32 = x_bf.astype(jnp.float32)

    # ---------------- pre-norm transformer block + TDFM outer residual ----------------
    xn = _bf16(_layernorm(x32, ln1g, ln1b))

    attn = jnp.zeros((rows, D), jnp.float32)
    for h in range(heads):                             # unrolled; no lane slicing / concatenate
        qh = jnp.dot(xn, wqkv_ref[m, 0, h], preferred_element_type=jnp.float32)  # scale folded
        kh = jnp.dot(xn, wqkv_ref[m, 1, h], preferred_element_type=jnp.float32)
        vh = jnp.dot(xn, wqkv_ref[m, 2, h], preferred_element_type=jnp.float32)
        q3 = _bf16(qh).reshape(TB, N, dim_head)        # cast once, keep only the bf16 copy
        k3 = _bf16(kh).reshape(TB, N, dim_head)
        v3 = _bf16(vh).reshape(TB, N, dim_head)
        s = jnp.einsum('bqd,bkd->bqk', q3, k3, preferred_element_type=jnp.float32)
        s = s - jnp.max(s, axis=-1, keepdims=True)
        e = jnp.exp(s)
        p = e * pl.reciprocal(jnp.sum(e, axis=-1, keepdims=True), approx=True)
        oh = jnp.einsum('bqk,bkd->bqd', _bf16(p), v3, preferred_element_type=jnp.float32)
        # accumulate the per-head output projection immediately (no concat, low vreg pressure)
        attn += jnp.dot(_bf16(oh.reshape(rows, dim_head)), wo_ref[m, h],
                        preferred_element_type=jnp.float32)
    attn = attn + bo

    x1 = x32 + attn                                    # attention residual
    xn2 = _bf16(_layernorm(x1, ln2g, ln2b))
    hid = _gelu(jnp.dot(xn2, w1_ref[m], preferred_element_type=jnp.float32) + b1_ref[m])
    ff = jnp.dot(_bf16(hid), w2_ref[m], preferred_element_type=jnp.float32) + b2
    xr = x1 + ff + x32                                 # block(x) + x (TDFM outer residual)
    xr_bf = _bf16(xr)

    # ---------------- Dirichlet classifier (seq-mean commuted before affine layers) ----------------
    xr_mean = jnp.mean(xr.reshape(TB, N, D), axis=1)                        # (TB, D)
    pm = jnp.dot(_bf16(xr_mean), dwp_ref[m], preferred_element_type=jnp.float32) + dbp
    logits = jnp.dot(_bf16(pm), dwc_ref[m], preferred_element_type=jnp.float32) + dbc_ref[m]
    ev = _softplus(logits)                                                  # (TB, C)
    ev_ref[...] = ev
    # NOTE: C is tiny (lane-sparse masked store) — negligible volume at C=4.

    # u = C / sum(alpha);  fusion weight = 1 - u
    alpha_sum = jnp.sum(ev, axis=-1, keepdims=True) + classes               # sum(ev + 1)
    w_scale = 1.0 - classes / alpha_sum                                     # (TB, 1)

    # ---------------- proj_m + residual; only its seq-mean survives downstream ----------------
    hp = _gelu(jnp.dot(xr_bf, pw1_ref[m], preferred_element_type=jnp.float32) + pb1)
    pr = jnp.dot(_bf16(hp), pw2_ref[m], preferred_element_type=jnp.float32) + pb2
    pr = _layernorm(pr, plng, plnb)
    xm_mean = jnp.mean((pr + xr).reshape(TB, N, D), axis=1)                 # (TB, D)

    @pl.when(m == 0)
    def _():
        acc_ref[...] = jnp.zeros_like(acc_ref)

    acc_ref[...] += w_scale * xm_mean

    # ---------------- FuseClassifier on the completed fused mean (its proj is affine) ----------------
    @pl.when(m == pl.num_programs(1) - 1)
    def _():
        pf = jnp.dot(_bf16(acc_ref[...]), fwp_ref[...],
                     preferred_element_type=jnp.float32) + fbp_ref[...]
        cls_ref[...] = jnp.dot(_bf16(pf), fwc_ref[...],
                               preferred_element_type=jnp.float32) + fbc_ref[...]


# ----------------------------- tiling / VMEM heuristics -----------------------------

def _vmem_limit_bytes():
    try:
        cap = int(pltpu.get_tpu_info().vmem_capacity_bytes)
    except Exception:
        cap = 64 * 1024 * 1024          # conservative default (v7x per-core VMEM)
    # leave headroom for Mosaic scratch: v5e/v6e (128 MiB) -> ~96 MiB, v7x (64 MiB) -> 48 MiB
    return min(int(cap * 3 // 4), 100 * 1024 * 1024)


def _estimate_tile_bytes(TB, N, D, heads, dim_head, mlp_dim):
    rows = TB * N
    f32_rows = 4 * rows * (7 * D + 2 * mlp_dim + 2 * dim_head)     # live f32 intermediates
    bf16_rows = 2 * rows * (4 * D + mlp_dim + 3 * dim_head)        # bf16 matmul operands
    scores = 4 * TB * N * N * 3                                    # s / e / p (one head live)
    io = 2 * 2 * (TB * N * D * 2 + TB * D * 4)                     # double-buffered x + outs
    return f32_rows + bf16_rows + scores + io


def _weight_bytes(p):
    total = 0
    for v in p.values():
        if hasattr(v, "dtype") and hasattr(v, "size"):
            total += int(v.size) * v.dtype.itemsize
    return 2 * total   # allow for double buffering even on resident blocks


def _pick_batch_tile(B, N, D, heads, dim_head, mlp_dim, vmem_limit, weight_bytes):
    budget = max(int(vmem_limit * 0.8) - weight_bytes, vmem_limit // 4)
    cands = sorted({d for d in range(1, B + 1)
                    if B % d == 0 and (d % 8 == 0 or d == B)}, reverse=True)
    fitting = [tb for tb in cands
               if _estimate_tile_bytes(tb, N, D, heads, dim_head, mlp_dim) <= budget]
    if not fitting:
        fitting = [cands[-1]]
    for tb in fitting:                  # prefer >=2 batch tiles so megacore (v7x) has work
        if B // tb >= 2:
            return tb
    return fitting[0]


# ----------------------------- pallas_call wrapper -----------------------------

def run_tdfm(x, p, classes, *, batch_tile=None):
    """x: (3, B, N, D) bf16 -> (evidences (3,B,C) f32, x_cls (B,C) f32)."""
    M3, B, N, D = x.shape
    heads, dim_head = p["heads"], p["dim_head"]
    mlp_dim = p["w1"].shape[-1]
    C = p["dwc"].shape[-1]

    vmem_limit = _vmem_limit_bytes()
    TB = batch_tile or _pick_batch_tile(B, N, D, heads, dim_head, mlp_dim,
                                        vmem_limit, _weight_bytes(p))
    assert B % TB == 0
    Bt = B // TB

    kernel = functools.partial(_tdfm_kernel, heads=heads, dim_head=dim_head,
                               classes=float(classes))

    def resident(arr):  # full stacked block, constant index_map -> fetched once, stays in VMEM
        nd = arr.ndim
        return pl.BlockSpec(tuple(arr.shape), lambda b, m, _n=nd: (0,) * _n)

    in_specs = [
        pl.BlockSpec((None, TB, N, D), lambda b, m: (m, b, 0, 0)),   # x block per (modality, tile)
        resident(p["wqkv_h"]), resident(p["wo_h"]),
        resident(p["w1"]), resident(p["b1"]), resident(p["w2"]),
        resident(p["dwp"]), resident(p["dwc"]), resident(p["dbc"]),
        resident(p["pw1"]), resident(p["pw2"]),
        resident(p["vec_d"]),
        resident(p["fwp"]), resident(p["fbp"]), resident(p["fwc"]), resident(p["fbc"]),
    ]
    out_specs = (
        pl.BlockSpec((None, TB, C), lambda b, m: (m, b, 0)),
        pl.BlockSpec((TB, C), lambda b, m: (b, 0)),      # resident across the modality axis
    )

    return pl.pallas_call(
        kernel,
        out_shape=(jax.ShapeDtypeStruct((M3, B, C), jnp.float32),
                   jax.ShapeDtypeStruct((B, C), jnp.float32)),
        grid=(Bt, M3),
        in_specs=in_specs,
        out_specs=out_specs,
        scratch_shapes=[pltpu.VMEM((TB, D), jnp.float32)],           # fused-mean accumulator
        compiler_params=pltpu.CompilerParams(
            dimension_semantics=("parallel", "arbitrary"),
            vmem_limit_bytes=vmem_limit),
    )(x, p["wqkv_h"], p["wo_h"], p["w1"], p["b1"], p["w2"],
      p["dwp"], p["dwc"], p["dbc"], p["pw1"], p["pw2"], p["vec_d"],
      p["fwp"], p["fbp"], p["fwc"], p["fbc"])


# --------------------- Dirichlet ACE / KL loss (plain JAX glue) ---------------------
# TODO(synk): digamma/lgamma on tiny (B, classes) tensors stays outside Pallas (no in-kernel win).

def kl_loss_jax(alpha, num_class):
    beta = jnp.ones((1, num_class), alpha.dtype)
    s_a = jnp.sum(alpha, axis=1, keepdims=True)
    s_b = jnp.sum(beta, axis=1, keepdims=True)
    log_alpha = gammaln(s_a) - jnp.sum(gammaln(alpha), axis=1, keepdims=True)
    log_beta = jnp.sum(gammaln(beta), axis=1, keepdims=True) - gammaln(s_b)
    dg0 = digamma(s_a)
    dg1 = digamma(alpha)
    kl = jnp.sum((alpha - beta) * (dg1 - dg0), axis=1, keepdims=True) + log_alpha + log_beta
    return kl


def ace_loss_jax(y, alpha, num_class, global_step, annealing_step=1):
    s = jnp.sum(alpha, axis=1, keepdims=True)
    evidences = alpha - 1.0
    label = jax.nn.one_hot(y, num_class, dtype=alpha.dtype)
    acl = jnp.sum(label * (digamma(s) - digamma(alpha)), axis=1, keepdims=True)
    annealing_coefficient = jnp.minimum(1.0, global_step / annealing_step)
    alp = evidences * (1.0 - label) + 1.0
    dkl = annealing_coefficient * kl_loss_jax(alp, num_class)
    return jnp.mean(acl + dkl)


# ----------------------------- parameters & forward -----------------------------

def init_params(key, dim, classes, heads, dim_head, mlp_dim):
    M3 = 3
    hd = heads * dim_head
    keys = iter(jax.random.split(key, 24))

    def w(shape, scale=0.05):
        return scale * jax.random.normal(next(keys), shape, jnp.float32)

    # transformer block weights in the torch-like (x @ W) layout, then repacked per head.
    wqkv = w((M3, dim, 3 * hd))                     # bias-free qkv projection
    wo = w((M3, hd, dim))
    scale = dim_head ** -0.5
    wq = wqkv[:, :, 0 * hd:1 * hd].reshape(M3, dim, heads, dim_head) * scale  # fold attn scale
    wk = wqkv[:, :, 1 * hd:2 * hd].reshape(M3, dim, heads, dim_head)
    wv = wqkv[:, :, 2 * hd:3 * hd].reshape(M3, dim, heads, dim_head)
    wqkv_h = jnp.stack([jnp.transpose(wq, (0, 2, 1, 3)),
                        jnp.transpose(wk, (0, 2, 1, 3)),
                        jnp.transpose(wv, (0, 2, 1, 3))], axis=1)   # (3, 3, H, D, dh)
    wo_h = wo.reshape(M3, heads, dim_head, dim)                     # (3, H, dh, D)

    w1 = w((M3, dim, mlp_dim))
    b1 = jnp.zeros((M3, 1, mlp_dim), jnp.float32)
    w2 = w((M3, mlp_dim, dim))

    dwp = w((M3, dim, dim))                                         # Dirichlet classifiers
    dwc = w((M3, dim, classes))
    dbc = jnp.zeros((M3, 1, classes), jnp.float32)
    pw1 = w((M3, dim, dim))                                         # proj0/1/2
    pw2 = w((M3, dim, dim))
    fwp = w((dim, dim))                                             # fuse classifier
    fbp = jnp.zeros((1, dim), jnp.float32)
    fwc = w((dim, classes))
    fbc = jnp.zeros((1, classes), jnp.float32)

    # pack all tiny per-modality (., dim) vectors into one (3, 11, dim) table:
    # [ln1_g, ln1_b, bo, ln2_g, ln2_b, b2, dbp, pb1, pb2, plng, plnb]
    ones = jnp.ones((M3, dim), jnp.float32)
    zeros = jnp.zeros((M3, dim), jnp.float32)
    vec_d = jnp.stack([ones, zeros, zeros, ones, zeros, zeros,
                       zeros, zeros, zeros, ones, zeros], axis=1)

    # matmul weights stored in bf16 once (no per-call re-casts); vectors stay f32.
    return dict(
        heads=heads, dim_head=dim_head,
        wqkv_h=_bf16(wqkv_h), wo_h=_bf16(wo_h),
        w1=_bf16(w1), b1=b1, w2=_bf16(w2),
        dwp=_bf16(dwp), dwc=_bf16(dwc), dbc=dbc,
        pw1=_bf16(pw1), pw2=_bf16(pw2),
        vec_d=vec_d,
        fwp=_bf16(fwp), fbp=fbp, fwc=_bf16(fwc), fbc=fbc,
    )


def tdfm_forward(params, x0, x1, x2, y, global_step, classes, annealing_epoch=1):
    x = jnp.stack([x0, x1, x2], axis=0).astype(jnp.bfloat16)       # (3, B, N, D) bf16 input DMA
    evidences, x_cls = run_tdfm(x, params, classes)                # single fused kernel
    alpha = evidences + 1.0
    s = jnp.sum(alpha, axis=-1, keepdims=True)                     # (3, B, 1)
    uncertainties = classes / s
    losses = jnp.stack(
        [ace_loss_jax(y, alpha[mi], classes, global_step, annealing_epoch) for mi in range(3)],
        axis=0)
    mean_losses = jnp.mean(losses)
    return x_cls, mean_losses, evidences, uncertainties


# ----------------------------- demo -----------------------------

if __name__ == "__main__":
    # NOTE: demo dims are intentionally tiny; realistic D / heads*dim_head / mlp_dim should be
    # multiples of 128 (v5e) or 256 (v6e/v7x) for full MXU/lane utilization.
    B, N, DIM = 2, 8, 32
    CLASSES, HEADS, DIM_HEAD, MLP_DIM = 4, 4, 64, 256

    key = jax.random.PRNGKey(0)
    k0, k1, k2, ky, kp = jax.random.split(key, 5)
    x0 = jax.random.normal(k0, (B, N, DIM), jnp.float32)
    x1 = jax.random.normal(k1, (B, N, DIM), jnp.float32)
    x2 = jax.random.normal(k2, (B, N, DIM), jnp.float32)
    y = jax.random.randint(ky, (B,), 0, CLASSES)

    params = init_params(kp, DIM, CLASSES, HEADS, DIM_HEAD, MLP_DIM)

    x_cls, mean_losses, evidences, uncertainties = tdfm_forward(
        params, x0, x1, x2, y, global_step=1, classes=CLASSES, annealing_epoch=1)

    jax.block_until_ready((x_cls, mean_losses, evidences, uncertainties))
    assert x_cls.shape == (B, CLASSES)
    assert evidences.shape == (3, B, CLASSES)
    assert uncertainties.shape == (3, B, 1)
    assert mean_losses.shape == ()
    assert bool(jnp.isfinite(x_cls).all()) and bool(jnp.isfinite(mean_losses))
    print("KERNEL_OK")
</pallas_src>

<mosaic_0001>
module attributes {stable_mosaic.version = 11 : i64} {
  func.func @_tdfm_kernel(%arg0: i32, %arg1: i32, %arg2: memref<1x2x8x32xbf16, #tpu.memory_space<vmem>>, %arg3: memref<3x3x4x32x64xbf16, #tpu.memory_space<vmem>>, %arg4: memref<3x4x64x32xbf16, #tpu.memory_space<vmem>>, %arg5: memref<3x32x256xbf16, #tpu.memory_space<vmem>>, %arg6: memref<3x1x256xf32, #tpu.memory_space<vmem>>, %arg7: memref<3x256x32xbf16, #tpu.memory_space<vmem>>, %arg8: memref<3x32x32xbf16, #tpu.memory_space<vmem>>, %arg9: memref<3x32x4xbf16, #tpu.memory_space<vmem>>, %arg10: memref<3x1x4xf32, #tpu.memory_space<vmem>>, %arg11: memref<3x32x32xbf16, #tpu.memory_space<vmem>>, %arg12: memref<3x32x32xbf16, #tpu.memory_space<vmem>>, %arg13: memref<3x11x32xf32, #tpu.memory_space<vmem>>, %arg14: memref<32x32xbf16, #tpu.memory_space<vmem>>, %arg15: memref<1x32xf32, #tpu.memory_space<vmem>>, %arg16: memref<32x4xbf16, #tpu.memory_space<vmem>>, %arg17: memref<1x4xf32, #tpu.memory_space<vmem>>, %arg18: memref<1x2x4xf32, #tpu.memory_space<vmem>>, %arg19: memref<2x4xf32, #tpu.memory_space<vmem>>, %arg20: memref<2x32xf32, #tpu.memory_space<vmem>>) attributes {dimension_semantics = [#tpu.dimension_semantics<parallel>, #tpu.dimension_semantics<arbitrary>], iteration_bounds = array<i64: 1, 3>, scalar_prefetch = 0 : i64, scratch_operands = 1 : i64, tpu.core_type = #tpu.core_type<tc>, window_params = [{transform_indices = @transform_0, window_bounds = array<i64: 1, 2, 8, 32>}, {pipeline_mode = #tpu.pipeline_mode<synchronous>, transform_indices = @transform_1, window_bounds = array<i64: 3, 3, 4, 32, 64>}, {pipeline_mode = #tpu.pipeline_mode<synchronous>, transform_indices = @transform_2, window_bounds = array<i64: 3, 4, 64, 32>}, {pipeline_mode = #tpu.pipeline_mode<synchronous>, transform_indices = @transform_3, window_bounds = array<i64: 3, 32, 256>}, {pipeline_mode = #tpu.pipeline_mode<synchronous>, transform_indices = @transform_4, window_bounds = array<i64: 3, 1, 256>}, {pipeline_mode = #tpu.pipeline_mode<synchronous>, transform_indices = @transform_5, window_bounds = array<i64: 3, 256, 32>}, {pipeline_mode = #tpu.pipeline_mode<synchronous>, transform_indices = @transform_6, window_bounds = array<i64: 3, 32, 32>}, {pipeline_mode = #tpu.pipeline_mode<synchronous>, transform_indices = @transform_7, window_bounds = array<i64: 3, 32, 4>}, {pipeline_mode = #tpu.pipeline_mode<synchronous>, transform_indices = @transform_8, window_bounds = array<i64: 3, 1, 4>}, {pipeline_mode = #tpu.pipeline_mode<synchronous>, transform_indices = @transform_9, window_bounds = array<i64: 3, 32, 32>}, {pipeline_mode = #tpu.pipeline_mode<synchronous>, transform_indices = @transform_10, window_bounds = array<i64: 3, 32, 32>}, {pipeline_mode = #tpu.pipeline_mode<synchronous>, transform_indices = @transform_11, window_bounds = array<i64: 3, 11, 32>}, {pipeline_mode = #tpu.pipeline_mode<synchronous>, transform_indices = @transform_12, window_bounds = array<i64: 32, 32>}, {pipeline_mode = #tpu.pipeline_mode<synchronous>, transform_indices = @transform_13, window_bounds = array<i64: 1, 32>}, {pipeline_mode = #tpu.pipeline_mode<synchronous>, transform_indices = @transform_14, window_bounds = array<i64: 32, 4>}, {pipeline_mode = #tpu.pipeline_mode<synchronous>, transform_indices = @transform_15, window_bounds = array<i64: 1, 4>}, {transform_indices = @transform_16, window_bounds = array<i64: 1, 2, 4>}, {transform_indices = @transform_17, window_bounds = array<i64: 2, 4>}]} {
    %0 = arith.index_cast %arg1 : i32 to index
    %c0 = arith.constant 0 : index
    %c0_0 = arith.constant 0 : index
    %1 = vector.load %arg13[%0, %c0, %c0_0] : memref<3x11x32xf32, #tpu.memory_space<vmem>>, vector<1x11x32xf32>
    %2 = vector.shape_cast %1 : vector<1x11x32xf32> to vector<11x32xf32>
    %3 = vector.extract_strided_slice %2 {offsets = [0, 0], sizes = [1, 32], strides = [1, 1]} : vector<11x32xf32> to vector<1x32xf32>
    %4 = vector.extract_strided_slice %2 {offsets = [1, 0], sizes = [1, 32], strides = [1, 1]} : vector<11x32xf32> to vector<1x32xf32>
    %5 = vector.extract_strided_slice %2 {offsets = [2, 0], sizes = [1, 32], strides = [1, 1]} : vector<11x32xf32> to vector<1x32xf32>
    %6 = vector.extract_strided_slice %2 {offsets = [3, 0], sizes = [1, 32], strides = [1, 1]} : vector<11x32xf32> to vector<1x32xf32>
    %7 = vector.extract_strided_slice %2 {offsets = [4, 0], sizes = [1, 32], strides = [1, 1]} : vector<11x32xf32> to vector<1x32xf32>
    %8 = vector.extract_strided_slice %2 {offsets = [5, 0], sizes = [1, 32], strides = [1, 1]} : vector<11x32xf32> to vector<1x32xf32>
    %9 = vector.extract_strided_slice %2 {offsets = [6, 0], sizes = [1, 32], strides = [1, 1]} : vector<11x32xf32> to vector<1x32xf32>
    %10 = vector.extract_strided_slice %2 {offsets = [7, 0], sizes = [1, 32], strides = [1, 1]} : vector<11x32xf32> to vector<1x32xf32>
    %11 = vector.extract_strided_slice %2 {offsets = [8, 0], sizes = [1, 32], strides = [1, 1]} : vector<11x32xf32> to vector<1x32xf32>
    %12 = vector.extract_strided_slice %2 {offsets = [9, 0], sizes = [1, 32], strides = [1, 1]} : vector<11x32xf32> to vector<1x32xf32>
    %13 = vector.extract_strided_slice %2 {offsets = [10, 0], sizes = [1, 32], strides = [1, 1]} : vector<11x32xf32> to vector<1x32xf32>
    %c0_1 = arith.constant 0 : index
    %c0_2 = arith.constant 0 : index
    %c0_3 = arith.constant 0 : index
    %c0_4 = arith.constant 0 : index
    %14 = vector.load %arg2[%c0_1, %c0_2, %c0_3, %c0_4] : memref<1x2x8x32xbf16, #tpu.memory_space<vmem>>, vector<1x2x8x32xbf16>
    %15 = vector.shape_cast %14 : vector<1x2x8x32xbf16> to vector<2x8x32xbf16>
    %16 = vector.shape_cast %15 : vector<2x8x32xbf16> to vector<16x32xbf16>
    %17 = arith.extf %16 : vector<16x32xbf16> to vector<16x32xf32>
    %cst = arith.constant dense<0.000000e+00> : vector<16xf32>
    %18 = vector.multi_reduction <add>, %17, %cst [1] : vector<16x32xf32> to vector<16xf32>
    %19 = vector.shape_cast %18 : vector<16xf32> to vector<16x1xf32>
    %cst_5 = arith.constant 3.200000e+01 : f32
    %20 = vector.broadcast %cst_5 : f32 to vector<16x1xf32>
    %21 = arith.divf %19, %20 : vector<16x1xf32>
    %22 = vector.broadcast %21 : vector<16x1xf32> to vector<16x32xf32>
    %23 = arith.subf %17, %22 : vector<16x32xf32>
    %24 = arith.mulf %23, %23 : vector<16x32xf32>
    %cst_6 = arith.constant dense<0.000000e+00> : vector<16xf32>
    %25 = vector.multi_reduction <add>, %24, %cst_6 [1] : vector<16x32xf32> to vector<16xf32>
    %26 = vector.shape_cast %25 : vector<16xf32> to vector<16x1xf32>
    %cst_7 = arith.constant 3.200000e+01 : f32
    %27 = vector.broadcast %cst_7 : f32 to vector<16x1xf32>
    %28 = arith.divf %26, %27 : vector<16x1xf32>
    %29 = vector.broadcast %21 : vector<16x1xf32> to vector<16x32xf32>
    %30 = arith.subf %17, %29 : vector<16x32xf32>
    %cst_8 = arith.constant 9.99999974E-6 : f32
    %31 = vector.broadcast %cst_8 : f32 to vector<16x1xf32>
    %32 = arith.addf %28, %31 : vector<16x1xf32>
    %33 = math.rsqrt %32 : vector<16x1xf32>
    %34 = vector.broadcast %33 : vector<16x1xf32> to vector<16x32xf32>
    %35 = arith.mulf %30, %34 : vector<16x32xf32>
    %36 = vector.broadcast %3 : vector<1x32xf32> to vector<16x32xf32>
    %37 = arith.mulf %35, %36 : vector<16x32xf32>
    %38 = vector.broadcast %4 : vector<1x32xf32> to vector<16x32xf32>
    %39 = arith.addf %37, %38 : vector<16x32xf32>
    %40 = arith.truncf %39 : vector<16x32xf32> to vector<16x32xbf16>
    %cst_9 = arith.constant 0.000000e+00 : f32
    %41 = vector.broadcast %cst_9 : f32 to vector<16x32xf32>
    %42 = arith.index_cast %arg1 : i32 to index
    %c0_10 = arith.constant 0 : index
    %c0_11 = arith.constant 0 : index
    %c0_12 = arith.constant 0 : index
    %c0_13 = arith.constant 0 : index
    %43 = vector.load %arg3[%42, %c0_10, %c0_11, %c0_12, %c0_13] : memref<3x3x4x32x64xbf16, #tpu.memory_space<vmem>>, vector<1x1x1x32x64xbf16>
    %44 = vector.shape_cast %43 : vector<1x1x1x32x64xbf16> to vector<32x64xbf16>
    %cst_14 = arith.constant dense<0.000000e+00> : vector<16x64xf32>
    %45 = tpu.matmul %40, %44, %cst_14 {dimension_numbers = #tpu.dot_dimension_numbers<[1], [0], [0], [1], [0, 0, 1, 1], [], []>} : vector<16x32xbf16>, vector<32x64xbf16>, vector<16x64xf32> -> vector<16x64xf32>
    %46 = arith.index_cast %arg1 : i32 to index
    %c1 = arith.constant 1 : index
    %c0_15 = arith.constant 0 : index
    %c0_16 = arith.constant 0 : index
    %c0_17 = arith.constant 0 : index
    %47 = vector.load %arg3[%46, %c1, %c0_15, %c0_16, %c0_17] : memref<3x3x4x32x64xbf16, #tpu.memory_space<vmem>>, vector<1x1x1x32x64xbf16>
    %48 = vector.shape_cast %47 : vector<1x1x1x32x64xbf16> to vector<32x64xbf16>
    %cst_18 = arith.constant dense<0.000000e+00> : vector<16x64xf32>
    %49 = tpu.matmul %40, %48, %cst_18 {dimension_numbers = #tpu.dot_dimension_numbers<[1], [0], [0], [1], [0, 0, 1, 1], [], []>} : vector<16x32xbf16>, vector<32x64xbf16>, vector<16x64xf32> -> vector<16x64xf32>
    %50 = arith.index_cast %arg1 : i32 to index
    %c2 = arith.constant 2 : index
    %c0_19 = arith.constant 0 : index
    %c0_20 = arith.constant 0 : index
    %c0_21 = arith.constant 0 : index
    %51 = vector.load %arg3[%50, %c2, %c0_19, %c0_20, %c0_21] : memref<3x3x4x32x64xbf16, #tpu.memory_space<vmem>>, vector<1x1x1x32x64xbf16>
    %52 = vector.shape_cast %51 : vector<1x1x1x32x64xbf16> to vector<32x64xbf16>
    %cst_22 = arith.constant dense<0.000000e+00> : vector<16x64xf32>
    %53 = tpu.matmul %40, %52, %cst_22 {dimension_numbers = #tpu.dot_dimension_numbers<[1], [0], [0], [1], [0, 0, 1, 1], [], []>} : vector<16x32xbf16>, vector<32x64xbf16>, vector<16x64xf32> -> vector<16x64xf32>
    %54 = arith.truncf %45 : vector<16x64xf32> to vector<16x64xbf16>
    %55 = vector.shape_cast %54 : vector<16x64xbf16> to vector<2x8x64xbf16>
    %56 = arith.truncf %49 : vector<16x64xf32> to vector<16x64xbf16>
    %57 = vector.shape_cast %56 : vector<16x64xbf16> to vector<2x8x64xbf16>
    %58 = arith.truncf %53 : vector<16x64xf32> to vector<16x64xbf16>
    %59 = vector.shape_cast %58 : vector<16x64xbf16> to vector<2x8x64xbf16>
    "tpu.trace_start"() <{level = 10 : i32, message = "bqd,bkd->bqk"}> : () -> ()
    %cst_23 = arith.constant dense<0.000000e+00> : vector<2x8x8xf32>
    %60 = tpu.matmul %55, %57, %cst_23 {dimension_numbers = #tpu.dot_dimension_numbers<[2], [2], [1], [1], [0, 0, 0, 1, 1, 1], [0], [0]>} : vector<2x8x64xbf16>, vector<2x8x64xbf16>, vector<2x8x8xf32> -> vector<2x8x8xf32>
    "tpu.trace_stop"() : () -> ()
    %cst_24 = arith.constant dense<0xFF800000> : vector<2x8xf32>
    %61 = vector.multi_reduction <maximumf>, %60, %cst_24 [2] : vector<2x8x8xf32> to vector<2x8xf32>
    %62 = vector.shape_cast %61 : vector<2x8xf32> to vector<2x8x1xf32>
    %63 = vector.broadcast %62 : vector<2x8x1xf32> to vector<2x8x8xf32>
    %64 = arith.subf %60, %63 : vector<2x8x8xf32>
    %65 = math.exp %64 : vector<2x8x8xf32>
    %cst_25 = arith.constant dense<0.000000e+00> : vector<2x8xf32>
    %66 = vector.multi_reduction <add>, %65, %cst_25 [2] : vector<2x8x8xf32> to vector<2x8xf32>
    %67 = vector.shape_cast %66 : vector<2x8xf32> to vector<2x8x1xf32>
    %68 = tpu.reciprocal %67 {approx = true} : vector<2x8x1xf32> -> vector<2x8x1xf32>
    %69 = vector.broadcast %68 : vector<2x8x1xf32> to vector<2x8x8xf32>
    %70 = arith.mulf %65, %69 : vector<2x8x8xf32>
    %71 = arith.truncf %70 : vector<2x8x8xf32> to vector<2x8x8xbf16>
    "tpu.trace_start"() <{level = 10 : i32, message = "bqk,bkd->bqd"}> : () -> ()
    %cst_26 = arith.constant dense<0.000000e+00> : vector<2x8x64xf32>
    %72 = tpu.matmul %71, %59, %cst_26 {dimension_numbers = #tpu.dot_dimension_numbers<[2], [1], [1], [2], [0, 0, 0, 1, 1, 2], [0], [0]>} : vector<2x8x8xbf16>, vector<2x8x64xbf16>, vector<2x8x64xf32> -> vector<2x8x64xf32>
    "tpu.trace_stop"() : () -> ()
    %73 = vector.shape_cast %72 : vector<2x8x64xf32> to vector<16x64xf32>
    %74 = arith.truncf %73 : vector<16x64xf32> to vector<16x64xbf16>
    %75 = arith.index_cast %arg1 : i32 to index
    %c0_27 = arith.constant 0 : index
    %c0_28 = arith.constant 0 : index
    %c0_29 = arith.constant 0 : index
    %76 = vector.load %arg4[%75, %c0_27, %c0_28, %c0_29] : memref<3x4x64x32xbf16, #tpu.memory_space<vmem>>, vector<1x1x64x32xbf16>
    %77 = vector.shape_cast %76 : vector<1x1x64x32xbf16> to vector<64x32xbf16>
    %cst_30 = arith.constant dense<0.000000e+00> : vector<16x32xf32>
    %78 = tpu.matmul %74, %77, %cst_30 {dimension_numbers = #tpu.dot_dimension_numbers<[1], [0], [0], [1], [0, 0, 1, 1], [], []>} : vector<16x64xbf16>, vector<64x32xbf16>, vector<16x32xf32> -> vector<16x32xf32>
    %79 = arith.addf %41, %78 : vector<16x32xf32>
    %80 = arith.index_cast %arg1 : i32 to index
    %c0_31 = arith.constant 0 : index
    %c1_32 = arith.constant 1 : index
    %c0_33 = arith.constant 0 : index
    %c0_34 = arith.constant 0 : index
    %81 = vector.load %arg3[%80, %c0_31, %c1_32, %c0_33, %c0_34] : memref<3x3x4x32x64xbf16, #tpu.memory_space<vmem>>, vector<1x1x1x32x64xbf16>
    %82 = vector.shape_cast %81 : vector<1x1x1x32x64xbf16> to vector<32x64xbf16>
    %cst_35 = arith.constant dense<0.000000e+00> : vector<16x64xf32>
    %83 = tpu.matmul %40, %82, %cst_35 {dimension_numbers = #tpu.dot_dimension_numbers<[1], [0], [0], [1], [0, 0, 1, 1], [], []>} : vector<16x32xbf16>, vector<32x64xbf16>, vector<16x64xf32> -> vector<16x64xf32>
    %84 = arith.index_cast %arg1 : i32 to index
    %c1_36 = arith.constant 1 : index
    %c1_37 = arith.constant 1 : index
    %c0_38 = arith.constant 0 : index
    %c0_39 = arith.constant 0 : index
    %85 = vector.load %arg3[%84, %c1_36, %c1_37, %c0_38, %c0_39] : memref<3x3x4x32x64xbf16, #tpu.memory_space<vmem>>, vector<1x1x1x32x64xbf16>
    %86 = vector.shape_cast %85 : vector<1x1x1x32x64xbf16> to vector<32x64xbf16>
    %cst_40 = arith.constant dense<0.000000e+00> : vector<16x64xf32>
    %87 = tpu.matmul %40, %86, %cst_40 {dimension_numbers = #tpu.dot_dimension_numbers<[1], [0], [0], [1], [0, 0, 1, 1], [], []>} : vector<16x32xbf16>, vector<32x64xbf16>, vector<16x64xf32> -> vector<16x64xf32>
    %88 = arith.index_cast %arg1 : i32 to index
    %c2_41 = arith.constant 2 : index
    %c1_42 = arith.constant 1 : index
    %c0_43 = arith.constant 0 : index
    %c0_44 = arith.constant 0 : index
    %89 = vector.load %arg3[%88, %c2_41, %c1_42, %c0_43, %c0_44] : memref<3x3x4x32x64xbf16, #tpu.memory_space<vmem>>, vector<1x1x1x32x64xbf16>
    %90 = vector.shape_cast %89 : vector<1x1x1x32x64xbf16> to vector<32x64xbf16>
    %cst_45 = arith.constant dense<0.000000e+00> : vector<16x64xf32>
    %91 = tpu.matmul %40, %90, %cst_45 {dimension_numbers = #tpu.dot_dimension_numbers<[1], [0], [0], [1], [0, 0, 1, 1], [], []>} : vector<16x32xbf16>, vector<32x64xbf16>, vector<16x64xf32> -> vector<16x64xf32>
    %92 = arith.truncf %83 : vector<16x64xf32> to vector<16x64xbf16>
    %93 = vector.shape_cast %92 : vector<16x64xbf16> to vector<2x8x64xbf16>
    %94 = arith.truncf %87 : vector<16x64xf32> to vector<16x64xbf16>
    %95 = vector.shape_cast %94 : vector<16x64xbf16> to vector<2x8x64xbf16>
    %96 = arith.truncf %91 : vector<16x64xf32> to vector<16x64xbf16>
    %97 = vector.shape_cast %96 : vector<16x64xbf16> to vector<2x8x64xbf16>
    "tpu.trace_start"() <{level = 10 : i32, message = "bqd,bkd->bqk"}> : () -> ()
    %cst_46 = arith.constant dense<0.000000e+00> : vector<2x8x8xf32>
    %98 = tpu.matmul %93, %95, %cst_46 {dimension_numbers = #tpu.dot_dimension_numbers<[2], [2], [1], [1], [0, 0, 0, 1, 1, 1], [0], [0]>} : vector<2x8x64xbf16>, vector<2x8x64xbf16>, vector<2x8x8xf32> -> vector<2x8x8xf32>
    "tpu.trace_stop"() : () -> ()
    %cst_47 = arith.constant dense<0xFF800000> : vector<2x8xf32>
    %99 = vector.multi_reduction <maximumf>, %98, %cst_47 [2] : vector<2x8x8xf32> to vector<2x8xf32>
    %100 = vector.shape_cast %99 : vector<2x8xf32> to vector<2x8x1xf32>
    %101 = vector.broadcast %100 : vector<2x8x1xf32> to vector<2x8x8xf32>
    %102 = arith.subf %98, %101 : vector<2x8x8xf32>
    %103 = math.exp %102 : vector<2x8x8xf32>
    %cst_48 = arith.constant dense<0.000000e+00> : vector<2x8xf32>
    %104 = vector.multi_reduction <add>, %103, %cst_48 [2] : vector<2x8x8xf32> to vector<2x8xf32>
    %105 = vector.shape_cast %104 : vector<2x8xf32> to vector<2x8x1xf32>
    %106 = tpu.reciprocal %105 {approx = true} : vector<2x8x1xf32> -> vector<2x8x1xf32>
    %107 = vector.broadcast %106 : vector<2x8x1xf32> to vector<2x8x8xf32>
    %108 = arith.mulf %103, %107 : vector<2x8x8xf32>
    %109 = arith.truncf %108 : vector<2x8x8xf32> to vector<2x8x8xbf16>
    "tpu.trace_start"() <{level = 10 : i32, message = "bqk,bkd->bqd"}> : () -> ()
    %cst_49 = arith.constant dense<0.000000e+00> : vector<2x8x64xf32>
    %110 = tpu.matmul %109, %97, %cst_49 {dimension_numbers = #tpu.dot_dimension_numbers<[2], [1], [1], [2], [0, 0, 0, 1, 1, 2], [0], [0]>} : vector<2x8x8xbf16>, vector<2x8x64xbf16>, vector<2x8x64xf32> -> vector<2x8x64xf32>
    "tpu.trace_stop"() : () -> ()
    %111 = vector.shape_cast %110 : vector<2x8x64xf32> to vector<16x64xf32>
    %112 = arith.truncf %111 : vector<16x64xf32> to vector<16x64xbf16>
    %113 = arith.index_cast %arg1 : i32 to index
    %c1_50 = arith.constant 1 : index
    %c0_51 = arith.constant 0 : index
    %c0_52 = arith.constant 0 : index
    %114 = vector.load %arg4[%113, %c1_50, %c0_51, %c0_52] : memref<3x4x64x32xbf16, #tpu.memory_space<vmem>>, vector<1x1x64x32xbf16>
    %115 = vector.shape_cast %114 : vector<1x1x64x32xbf16> to vector<64x32xbf16>
    %cst_53 = arith.constant dense<0.000000e+00> : vector<16x32xf32>
    %116 = tpu.matmul %112, %115, %cst_53 {dimension_numbers = #tpu.dot_dimension_numbers<[1], [0], [0], [1], [0, 0, 1, 1], [], []>} : vector<16x64xbf16>, vector<64x32xbf16>, vector<16x32xf32> -> vector<16x32xf32>
    %117 = arith.addf %79, %116 : vector<16x32xf32>
    %118 = arith.index_cast %arg1 : i32 to index
    %c0_54 = arith.constant 0 : index
    %c2_55 = arith.constant 2 : index
    %c0_56 = arith.constant 0 : index
    %c0_57 = arith.constant 0 : index
    %119 = vector.load %arg3[%118, %c0_54, %c2_55, %c0_56, %c0_57] : memref<3x3x4x32x64xbf16, #tpu.memory_space<vmem>>, vector<1x1x1x32x64xbf16>
    %120 = vector.shape_cast %119 : vector<1x1x1x32x64xbf16> to vector<32x64xbf16>
    %cst_58 = arith.constant dense<0.000000e+00> : vector<16x64xf32>
    %121 = tpu.matmul %40, %120, %cst_58 {dimension_numbers = #tpu.dot_dimension_numbers<[1], [0], [0], [1], [0, 0, 1, 1], [], []>} : vector<16x32xbf16>, vector<32x64xbf16>, vector<16x64xf32> -> vector<16x64xf32>
    %122 = arith.index_cast %arg1 : i32 to index
    %c1_59 = arith.constant 1 : index
    %c2_60 = arith.constant 2 : index
    %c0_61 = arith.constant 0 : index
    %c0_62 = arith.constant 0 : index
    %123 = vector.load %arg3[%122, %c1_59, %c2_60, %c0_61, %c0_62] : memref<3x3x4x32x64xbf16, #tpu.memory_space<vmem>>, vector<1x1x1x32x64xbf16>
    %124 = vector.shape_cast %123 : vector<1x1x1x32x64xbf16> to vector<32x64xbf16>
    %cst_63 = arith.constant dense<0.000000e+00> : vector<16x64xf32>
    %125 = tpu.matmul %40, %124, %cst_63 {dimension_numbers = #tpu.dot_dimension_numbers<[1], [0], [0], [1], [0, 0, 1, 1], [], []>} : vector<16x32xbf16>, vector<32x64xbf16>, vector<16x64xf32> -> vector<16x64xf32>
    %126 = arith.index_cast %arg1 : i32 to index
    %c2_64 = arith.constant 2 : index
    %c2_65 = arith.constant 2 : index
    %c0_66 = arith.constant 0 : index
    %c0_67 = arith.constant 0 : index
    %127 = vector.load %arg3[%126, %c2_64, %c2_65, %c0_66, %c0_67] : memref<3x3x4x32x64xbf16, #tpu.memory_space<vmem>>, vector<1x1x1x32x64xbf16>
    %128 = vector.shape_cast %127 : vector<1x1x1x32x64xbf16> to vector<32x64xbf16>
    %cst_68 = arith.constant dense<0.000000e+00> : vector<16x64xf32>
    %129 = tpu.matmul %40, %128, %cst_68 {dimension_numbers = #tpu.dot_dimension_numbers<[1], [0], [0], [1], [0, 0, 1, 1], [], []>} : vector<16x32xbf16>, vector<32x64xbf16>, vector<16x64xf32> -> vector<16x64xf32>
    %130 = arith.truncf %121 : vector<16x64xf32> to vector<16x64xbf16>
    %131 = vector.shape_cast %130 : vector<16x64xbf16> to vector<2x8x64xbf16>
    %132 = arith.truncf %125 : vector<16x64xf32> to vector<16x64xbf16>
    %133 = vector.shape_cast %132 : vector<16x64xbf16> to vector<2x8x64xbf16>
    %134 = arith.truncf %129 : vector<16x64xf32> to vector<16x64xbf16>
    %135 = vector.shape_cast %134 : vector<16x64xbf16> to vector<2x8x64xbf16>
    "tpu.trace_start"() <{level = 10 : i32, message = "bqd,bkd->bqk"}> : () -> ()
    %cst_69 = arith.constant dense<0.000000e+00> : vector<2x8x8xf32>
    %136 = tpu.matmul %131, %133, %cst_69 {dimension_numbers = #tpu.dot_dimension_numbers<[2], [2], [1], [1], [0, 0, 0, 1, 1, 1], [0], [0]>} : vector<2x8x64xbf16>, vector<2x8x64xbf16>, vector<2x8x8xf32> -> vector<2x8x8xf32>
    "tpu.trace_stop"() : () -> ()
    %cst_70 = arith.constant dense<0xFF800000> : vector<2x8xf32>
    %137 = vector.multi_reduction <maximumf>, %136, %cst_70 [2] : vector<2x8x8xf32> to vector<2x8xf32>
    %138 = vector.shape_cast %137 : vector<2x8xf32> to vector<2x8x1xf32>
    %139 = vector.broadcast %138 : vector<2x8x1xf32> to vector<2x8x8xf32>
    %140 = arith.subf %136, %139 : vector<2x8x8xf32>
    %141 = math.exp %140 : vector<2x8x8xf32>
    %cst_71 = arith.constant dense<0.000000e+00> : vector<2x8xf32>
    %142 = vector.multi_reduction <add>, %141, %cst_71 [2] : vector<2x8x8xf32> to vector<2x8xf32>
    %143 = vector.shape_cast %142 : vector<2x8xf32> to vector<2x8x1xf32>
    %144 = tpu.reciprocal %143 {approx = true} : vector<2x8x1xf32> -> vector<2x8x1xf32>
    %145 = vector.broadcast %144 : vector<2x8x1xf32> to vector<2x8x8xf32>
    %146 = arith.mulf %141, %145 : vector<2x8x8xf32>
    %147 = arith.truncf %146 : vector<2x8x8xf32> to vector<2x8x8xbf16>
    "tpu.trace_start"() <{level = 10 : i32, message = "bqk,bkd->bqd"}> : () -> ()
    %cst_72 = arith.constant dense<0.000000e+00> : vector<2x8x64xf32>
    %148 = tpu.matmul %147, %135, %cst_72 {dimension_numbers = #tpu.dot_dimension_numbers<[2], [1], [1], [2], [0, 0, 0, 1, 1, 2], [0], [0]>} : vector<2x8x8xbf16>, vector<2x8x64xbf16>, vector<2x8x64xf32> -> vector<2x8x64xf32>
    "tpu.trace_stop"() : () -> ()
    %149 = vector.shape_cast %148 : vector<2x8x64xf32> to vector<16x64xf32>
    %150 = arith.truncf %149 : vector<16x64xf32> to vector<16x64xbf16>
    %151 = arith.index_cast %arg1 : i32 to index
    %c2_73 = arith.constant 2 : index
    %c0_74 = arith.constant 0 : index
    %c0_75 = arith.constant 0 : index
    %152 = vector.load %arg4[%151, %c2_73, %c0_74, %c0_75] : memref<3x4x64x32xbf16, #tpu.memory_space<vmem>>, vector<1x1x64x32xbf16>
    %153 = vector.shape_cast %152 : vector<1x1x64x32xbf16> to vector<64x32xbf16>
    %cst_76 = arith.constant dense<0.000000e+00> : vector<16x32xf32>
    %154 = tpu.matmul %150, %153, %cst_76 {dimension_numbers = #tpu.dot_dimension_numbers<[1], [0], [0], [1], [0, 0, 1, 1], [], []>} : vector<16x64xbf16>, vector<64x32xbf16>, vector<16x32xf32> -> vector<16x32xf32>
    %155 = arith.addf %117, %154 : vector<16x32xf32>
    %156 = arith.index_cast %arg1 : i32 to index
    %c0_77 = arith.constant 0 : index
    %c3 = arith.constant 3 : index
    %c0_78 = arith.constant 0 : index
    %c0_79 = arith.constant 0 : index
    %157 = vector.load %arg3[%156, %c0_77, %c3, %c0_78, %c0_79] : memref<3x3x4x32x64xbf16, #tpu.memory_space<vmem>>, vector<1x1x1x32x64xbf16>
    %158 = vector.shape_cast %157 : vector<1x1x1x32x64xbf16> to vector<32x64xbf16>
    %cst_80 = arith.constant dense<0.000000e+00> : vector<16x64xf32>
    %159 = tpu.matmul %40, %158, %cst_80 {dimension_numbers = #tpu.dot_dimension_numbers<[1], [0], [0], [1], [0, 0, 1, 1], [], []>} : vector<16x32xbf16>, vector<32x64xbf16>, vector<16x64xf32> -> vector<16x64xf32>
    %160 = arith.index_cast %arg1 : i32 to index
    %c1_81 = arith.constant 1 : index
    %c3_82 = arith.constant 3 : index
    %c0_83 = arith.constant 0 : index
    %c0_84 = arith.constant 0 : index
    %161 = vector.load %arg3[%160, %c1_81, %c3_82, %c0_83, %c0_84] : memref<3x3x4x32x64xbf16, #tpu.memory_space<vmem>>, vector<1x1x1x32x64xbf16>
    %162 = vector.shape_cast %161 : vector<1x1x1x32x64xbf16> to vector<32x64xbf16>
    %cst_85 = arith.constant dense<0.000000e+00> : vector<16x64xf32>
    %163 = tpu.matmul %40, %162, %cst_85 {dimension_numbers = #tpu.dot_dimension_numbers<[1], [0], [0], [1], [0, 0, 1, 1], [], []>} : vector<16x32xbf16>, vector<32x64xbf16>, vector<16x64xf32> -> vector<16x64xf32>
    %164 = arith.index_cast %arg1 : i32 to index
    %c2_86 = arith.constant 2 : index
    %c3_87 = arith.constant 3 : index
    %c0_88 = arith.constant 0 : index
    %c0_89 = arith.constant 0 : index
    %165 = vector.load %arg3[%164, %c2_86, %c3_87, %c0_88, %c0_89] : memref<3x3x4x32x64xbf16, #tpu.memory_space<vmem>>, vector<1x1x1x32x64xbf16>
    %166 = vector.shape_cast %165 : vector<1x1x1x32x64xbf16> to vector<32x64xbf16>
    %cst_90 = arith.constant dense<0.000000e+00> : vector<16x64xf32>
    %167 = tpu.matmul %40, %166, %cst_90 {dimension_numbers = #tpu.dot_dimension_numbers<[1], [0], [0], [1], [0, 0, 1, 1], [], []>} : vector<16x32xbf16>, vector<32x64xbf16>, vector<16x64xf32> -> vector<16x64xf32>
    %168 = arith.truncf %159 : vector<16x64xf32> to vector<16x64xbf16>
    %169 = vector.shape_cast %168 : vector<16x64xbf16> to vector<2x8x64xbf16>
    %170 = arith.truncf %163 : vector<16x64xf32> to vector<16x64xbf16>
    %171 = vector.shape_cast %170 : vector<16x64xbf16> to vector<2x8x64xbf16>
    %172 = arith.truncf %167 : vector<16x64xf32> to vector<16x64xbf16>
    %173 = vector.shape_cast %172 : vector<16x64xbf16> to vector<2x8x64xbf16>
    "tpu.trace_start"() <{level = 10 : i32, message = "bqd,bkd->bqk"}> : () -> ()
    %cst_91 = arith.constant dense<0.000000e+00> : vector<2x8x8xf32>
    %174 = tpu.matmul %169, %171, %cst_91 {dimension_numbers = #tpu.dot_dimension_numbers<[2], [2], [1], [1], [0, 0, 0, 1, 1, 1], [0], [0]>} : vector<2x8x64xbf16>, vector<2x8x64xbf16>, vector<2x8x8xf32> -> vector<2x8x8xf32>
    "tpu.trace_stop"() : () -> ()
    %cst_92 = arith.constant dense<0xFF800000> : vector<2x8xf32>
    %175 = vector.multi_reduction <maximumf>, %174, %cst_92 [2] : vector<2x8x8xf32> to vector<2x8xf32>
    %176 = vector.shape_cast %175 : vector<2x8xf32> to vector<2x8x1xf32>
    %177 = vector.broadcast %176 : vector<2x8x1xf32> to vector<2x8x8xf32>
    %178 = arith.subf %174, %177 : vector<2x8x8xf32>
    %179 = math.exp %178 : vector<2x8x8xf32>
    %cst_93 = arith.constant dense<0.000000e+00> : vector<2x8xf32>
    %180 = vector.multi_reduction <add>, %179, %cst_93 [2] : vector<2x8x8xf32> to vector<2x8xf32>
    %181 = vector.shape_cast %180 : vector<2x8xf32> to vector<2x8x1xf32>
    %182 = tpu.reciprocal %181 {approx = true} : vector<2x8x1xf32> -> vector<2x8x1xf32>
    %183 = vector.broadcast %182 : vector<2x8x1xf32> to vector<2x8x8xf32>
    %184 = arith.mulf %179, %183 : vector<2x8x8xf32>
    %185 = arith.truncf %184 : vector<2x8x8xf32> to vector<2x8x8xbf16>
    "tpu.trace_start"() <{level = 10 : i32, message = "bqk,bkd->bqd"}> : () -> ()
    %cst_94 = arith.constant dense<0.000000e+00> : vector<2x8x64xf32>
    %186 = tpu.matmul %185, %173, %cst_94 {dimension_numbers = #tpu.dot_dimension_numbers<[2], [1], [1], [2], [0, 0, 0, 1, 1, 2], [0], [0]>} : vector<2x8x8xbf16>, vector<2x8x64xbf16>, vector<2x8x64xf32> -> vector<2x8x64xf32>
    "tpu.trace_stop"() : () -> ()
    %187 = vector.shape_cast %186 : vector<2x8x64xf32> to vector<16x64xf32>
    %188 = arith.truncf %187 : vector<16x64xf32> to vector<16x64xbf16>
    %189 = arith.index_cast %arg1 : i32 to index
    %c3_95 = arith.constant 3 : index
    %c0_96 = arith.constant 0 : index
    %c0_97 = arith.constant 0 : index
    %190 = vector.load %arg4[%189, %c3_95, %c0_96, %c0_97] : memref<3x4x64x32xbf16, #tpu.memory_space<vmem>>, vector<1x1x64x32xbf16>
    %191 = vector.shape_cast %190 : vector<1x1x64x32xbf16> to vector<64x32xbf16>
    %cst_98 = arith.constant dense<0.000000e+00> : vector<16x32xf32>
    %192 = tpu.matmul %188, %191, %cst_98 {dimension_numbers = #tpu.dot_dimension_numbers<[1], [0], [0], [1], [0, 0, 1, 1], [], []>} : vector<16x64xbf16>, vector<64x32xbf16>, vector<16x32xf32> -> vector<16x32xf32>
    %193 = arith.addf %155, %192 : vector<16x32xf32>
    %194 = vector.broadcast %5 : vector<1x32xf32> to vector<16x32xf32>
    %195 = arith.addf %193, %194 : vector<16x32xf32>
    %196 = arith.addf %17, %195 : vector<16x32xf32>
    %cst_99 = arith.constant dense<0.000000e+00> : vector<16xf32>
    %197 = vector.multi_reduction <add>, %196, %cst_99 [1] : vector<16x32xf32> to vector<16xf32>
    %198 = vector.shape_cast %197 : vector<16xf32> to vector<16x1xf32>
    %cst_100 = arith.constant 3.200000e+01 : f32
    %199 = vector.broadcast %cst_100 : f32 to vector<16x1xf32>
    %200 = arith.divf %198, %199 : vector<16x1xf32>
    %201 = vector.broadcast %200 : vector<16x1xf32> to vector<16x32xf32>
    %202 = arith.subf %196, %201 : vector<16x32xf32>
    %203 = arith.mulf %202, %202 : vector<16x32xf32>
    %cst_101 = arith.constant dense<0.000000e+00> : vector<16xf32>
    %204 = vector.multi_reduction <add>, %203, %cst_101 [1] : vector<16x32xf32> to vector<16xf32>
    %205 = vector.shape_cast %204 : vector<16xf32> to vector<16x1xf32>
    %cst_102 = arith.constant 3.200000e+01 : f32
    %206 = vector.broadcast %cst_102 : f32 to vector<16x1xf32>
    %207 = arith.divf %205, %206 : vector<16x1xf32>
    %208 = vector.broadcast %200 : vector<16x1xf32> to vector<16x32xf32>
    %209 = arith.subf %196, %208 : vector<16x32xf32>
    %cst_103 = arith.constant 9.99999974E-6 : f32
    %210 = vector.broadcast %cst_103 : f32 to vector<16x1xf32>
    %211 = arith.addf %207, %210 : vector<16x1xf32>
    %212 = math.rsqrt %211 : vector<16x1xf32>
    %213 = vector.broadcast %212 : vector<16x1xf32> to vector<16x32xf32>
    %214 = arith.mulf %209, %213 : vector<16x32xf32>
    %215 = vector.broadcast %6 : vector<1x32xf32> to vector<16x32xf32>
    %216 = arith.mulf %214, %215 : vector<16x32xf32>
    %217 = vector.broadcast %7 : vector<1x32xf32> to vector<16x32xf32>
    %218 = arith.addf %216, %217 : vector<16x32xf32>
    %219 = arith.truncf %218 : vector<16x32xf32> to vector<16x32xbf16>
    %220 = arith.index_cast %arg1 : i32 to index
    %c0_104 = arith.constant 0 : index
    %c0_105 = arith.constant 0 : index
    %221 = vector.load %arg5[%220, %c0_104, %c0_105] : memref<3x32x256xbf16, #tpu.memory_space<vmem>>, vector<1x32x256xbf16>
    %222 = vector.shape_cast %221 : vector<1x32x256xbf16> to vector<32x256xbf16>
    %cst_106 = arith.constant dense<0.000000e+00> : vector<16x256xf32>
    %223 = tpu.matmul %219, %222, %cst_106 {dimension_numbers = #tpu.dot_dimension_numbers<[1], [0], [0], [1], [0, 0, 1, 1], [], []>} : vector<16x32xbf16>, vector<32x256xbf16>, vector<16x256xf32> -> vector<16x256xf32>
    %224 = arith.index_cast %arg1 : i32 to index
    %c0_107 = arith.constant 0 : index
    %c0_108 = arith.constant 0 : index
    %225 = vector.load %arg6[%224, %c0_107, %c0_108] : memref<3x1x256xf32, #tpu.memory_space<vmem>>, vector<1x1x256xf32>
    %226 = vector.shape_cast %225 : vector<1x1x256xf32> to vector<1x256xf32>
    %227 = vector.broadcast %226 : vector<1x256xf32> to vector<16x256xf32>
    %228 = arith.addf %223, %227 : vector<16x256xf32>
    %cst_109 = arith.constant 5.000000e-01 : f32
    %229 = vector.broadcast %cst_109 : f32 to vector<16x256xf32>
    %230 = arith.mulf %229, %228 : vector<16x256xf32>
    %cst_110 = arith.constant 4.471500e-02 : f32
    %231 = vector.broadcast %cst_110 : f32 to vector<16x256xf32>
    %232 = arith.mulf %231, %228 : vector<16x256xf32>
    %233 = arith.mulf %232, %228 : vector<16x256xf32>
    %234 = arith.mulf %233, %228 : vector<16x256xf32>
    %235 = arith.addf %228, %234 : vector<16x256xf32>
    %cst_111 = arith.constant 0.797884583 : f32
    %236 = vector.broadcast %cst_111 : f32 to vector<16x256xf32>
    %237 = arith.mulf %236, %235 : vector<16x256xf32>
    %238 = math.tanh %237 : vector<16x256xf32>
    %cst_112 = arith.constant 1.000000e+00 : f32
    %239 = vector.broadcast %cst_112 : f32 to vector<16x256xf32>
    %240 = arith.addf %239, %238 : vector<16x256xf32>
    %241 = arith.mulf %230, %240 : vector<16x256xf32>
    %242 = arith.truncf %241 : vector<16x256xf32> to vector<16x256xbf16>
    %243 = arith.index_cast %arg1 : i32 to index
    %c0_113 = arith.constant 0 : index
    %c0_114 = arith.constant 0 : index
    %244 = vector.load %arg7[%243, %c0_113, %c0_114] : memref<3x256x32xbf16, #tpu.memory_space<vmem>>, vector<1x256x32xbf16>
    %245 = vector.shape_cast %244 : vector<1x256x32xbf16> to vector<256x32xbf16>
    %cst_115 = arith.constant dense<0.000000e+00> : vector<16x32xf32>
    %246 = tpu.matmul %242, %245, %cst_115 {dimension_numbers = #tpu.dot_dimension_numbers<[1], [0], [0], [1], [0, 0, 1, 1], [], []>} : vector<16x256xbf16>, vector<256x32xbf16>, vector<16x32xf32> -> vector<16x32xf32>
    %247 = vector.broadcast %8 : vector<1x32xf32> to vector<16x32xf32>
    %248 = arith.addf %246, %247 : vector<16x32xf32>
    %249 = arith.addf %196, %248 : vector<16x32xf32>
    %250 = arith.addf %249, %17 : vector<16x32xf32>
    %251 = arith.truncf %250 : vector<16x32xf32> to vector<16x32xbf16>
    %252 = vector.shape_cast %250 : vector<16x32xf32> to vector<2x8x32xf32>
    %cst_116 = arith.constant dense<0.000000e+00> : vector<2x32xf32>
    %253 = vector.multi_reduction <add>, %252, %cst_116 [1] : vector<2x8x32xf32> to vector<2x32xf32>
    %cst_117 = arith.constant 8.000000e+00 : f32
    %254 = vector.broadcast %cst_117 : f32 to vector<2x32xf32>
    %255 = arith.divf %253, %254 : vector<2x32xf32>
    %256 = arith.truncf %255 : vector<2x32xf32> to vector<2x32xbf16>
    %257 = arith.index_cast %arg1 : i32 to index
    %c0_118 = arith.constant 0 : index
    %c0_119 = arith.constant 0 : index
    %258 = vector.load %arg8[%257, %c0_118, %c0_119] : memref<3x32x32xbf16, #tpu.memory_space<vmem>>, vector<1x32x32xbf16>
    %259 = vector.shape_cast %258 : vector<1x32x32xbf16> to vector<32x32xbf16>
    %cst_120 = arith.constant dense<0.000000e+00> : vector<2x32xf32>
    %260 = tpu.matmul %256, %259, %cst_120 {dimension_numbers = #tpu.dot_dimension_numbers<[1], [0], [0], [1], [0, 0, 1, 1], [], []>} : vector<2x32xbf16>, vector<32x32xbf16>, vector<2x32xf32> -> vector<2x32xf32>
    %261 = vector.broadcast %9 : vector<1x32xf32> to vector<2x32xf32>
    %262 = arith.addf %260, %261 : vector<2x32xf32>
    %263 = arith.truncf %262 : vector<2x32xf32> to vector<2x32xbf16>
    %264 = arith.index_cast %arg1 : i32 to index
    %c0_121 = arith.constant 0 : index
    %c0_122 = arith.constant 0 : index
    %265 = vector.load %arg9[%264, %c0_121, %c0_122] : memref<3x32x4xbf16, #tpu.memory_space<vmem>>, vector<1x32x4xbf16>
    %266 = vector.shape_cast %265 : vector<1x32x4xbf16> to vector<32x4xbf16>
    %cst_123 = arith.constant dense<0.000000e+00> : vector<2x4xf32>
    %267 = tpu.matmul %263, %266, %cst_123 {dimension_numbers = #tpu.dot_dimension_numbers<[1], [0], [0], [1], [0, 0, 1, 1], [], []>} : vector<2x32xbf16>, vector<32x4xbf16>, vector<2x4xf32> -> vector<2x4xf32>
    %268 = arith.index_cast %arg1 : i32 to index
    %c0_124 = arith.constant 0 : index
    %c0_125 = arith.constant 0 : index
    %269 = vector.load %arg10[%268, %c0_124, %c0_125] : memref<3x1x4xf32, #tpu.memory_space<vmem>>, vector<1x1x4xf32>
    %270 = vector.shape_cast %269 : vector<1x1x4xf32> to vector<1x4xf32>
    %271 = vector.broadcast %270 : vector<1x4xf32> to vector<2x4xf32>
    %272 = arith.addf %267, %271 : vector<2x4xf32>
    %cst_126 = arith.constant 2.000000e+01 : f32
    %273 = vector.broadcast %cst_126 : f32 to vector<2x4xf32>
    %274 = arith.cmpf ogt, %272, %273 : vector<2x4xf32>
    %cst_127 = arith.constant 2.000000e+01 : f32
    %275 = vector.broadcast %cst_127 : f32 to vector<2x4xf32>
    %276 = arith.minimumf %272, %275 : vector<2x4xf32>
    %277 = math.exp %276 : vector<2x4xf32>
    %cst_128 = arith.constant 1.000000e+00 : f32
    %278 = vector.broadcast %cst_128 : f32 to vector<2x4xf32>
    %279 = arith.addf %278, %277 : vector<2x4xf32>
    %280 = math.log %279 : vector<2x4xf32>
    %281 = arith.select %274, %272, %280 : vector<2x4xi1>, vector<2x4xf32>
    %c0_129 = arith.constant 0 : index
    %c0_130 = arith.constant 0 : index
    %c0_131 = arith.constant 0 : index
    %282 = vector.load %arg18[%c0_129, %c0_130, %c0_131] : memref<1x2x4xf32, #tpu.memory_space<vmem>>, vector<1x2x4xf32>
    %283 = vector.shape_cast %282 : vector<1x2x4xf32> to vector<2x4xf32>
    %284 = vector.shape_cast %281 : vector<2x4xf32> to vector<1x2x4xf32>
    tpu.vector_store %arg18[%c0_129, %c0_130, %c0_131], %284 {strides = array<i32>} : memref<1x2x4xf32, #tpu.memory_space<vmem>>, vector<1x2x4xf32>,
    %cst_132 = arith.constant dense<0.000000e+00> : vector<2xf32>
    %285 = vector.multi_reduction <add>, %281, %cst_132 [1] : vector<2x4xf32> to vector<2xf32>
    %286 = vector.shape_cast %285 : vector<2xf32> to vector<2x1xf32>
    %cst_133 = arith.constant 4.000000e+00 : f32
    %287 = vector.broadcast %cst_133 : f32 to vector<2x1xf32>
    %288 = arith.addf %286, %287 : vector<2x1xf32>
    %cst_134 = arith.constant 4.000000e+00 : f32
    %289 = vector.broadcast %cst_134 : f32 to vector<2x1xf32>
    %290 = arith.divf %289, %288 : vector<2x1xf32>
    %cst_135 = arith.constant 1.000000e+00 : f32
    %291 = vector.broadcast %cst_135 : f32 to vector<2x1xf32>
    %292 = arith.subf %291, %290 : vector<2x1xf32>
    %293 = arith.index_cast %arg1 : i32 to index
    %c0_136 = arith.constant 0 : index
    %c0_137 = arith.constant 0 : index
    %294 = vector.load %arg11[%293, %c0_136, %c0_137] : memref<3x32x32xbf16, #tpu.memory_space<vmem>>, vector<1x32x32xbf16>
    %295 = vector.shape_cast %294 : vector<1x32x32xbf16> to vector<32x32xbf16>
    %cst_138 = arith.constant dense<0.000000e+00> : vector<16x32xf32>
    %296 = tpu.matmul %251, %295, %cst_138 {dimension_numbers = #tpu.dot_dimension_numbers<[1], [0], [0], [1], [0, 0, 1, 1], [], []>} : vector<16x32xbf16>, vector<32x32xbf16>, vector<16x32xf32> -> vector<16x32xf32>
    %297 = vector.broadcast %10 : vector<1x32xf32> to vector<16x32xf32>
    %298 = arith.addf %296, %297 : vector<16x32xf32>
    %cst_139 = arith.constant 5.000000e-01 : f32
    %299 = vector.broadcast %cst_139 : f32 to vector<16x32xf32>
    %300 = arith.mulf %299, %298 : vector<16x32xf32>
    %cst_140 = arith.constant 4.471500e-02 : f32
    %301 = vector.broadcast %cst_140 : f32 to vector<16x32xf32>
    %302 = arith.mulf %301, %298 : vector<16x32xf32>
    %303 = arith.mulf %302, %298 : vector<16x32xf32>
    %304 = arith.mulf %303, %298 : vector<16x32xf32>
    %305 = arith.addf %298, %304 : vector<16x32xf32>
    %cst_141 = arith.constant 0.797884583 : f32
    %306 = vector.broadcast %cst_141 : f32 to vector<16x32xf32>
    %307 = arith.mulf %306, %305 : vector<16x32xf32>
    %308 = math.tanh %307 : vector<16x32xf32>
    %cst_142 = arith.constant 1.000000e+00 : f32
    %309 = vector.broadcast %cst_142 : f32 to vector<16x32xf32>
    %310 = arith.addf %309, %308 : vector<16x32xf32>
    %311 = arith.mulf %300, %310 : vector<16x32xf32>
    %312 = arith.truncf %311 : vector<16x32xf32> to vector<16x32xbf16>
    %313 = arith.index_cast %arg1 : i32 to index
    %c0_143 = arith.constant 0 : index
    %c0_144 = arith.constant 0 : index
    %314 = vector.load %arg12[%313, %c0_143, %c0_144] : memref<3x32x32xbf16, #tpu.memory_space<vmem>>, vector<1x32x32xbf16>
    %315 = vector.shape_cast %314 : vector<1x32x32xbf16> to vector<32x32xbf16>
    %cst_145 = arith.constant dense<0.000000e+00> : vector<16x32xf32>
    %316 = tpu.matmul %312, %315, %cst_145 {dimension_numbers = #tpu.dot_dimension_numbers<[1], [0], [0], [1], [0, 0, 1, 1], [], []>} : vector<16x32xbf16>, vector<32x32xbf16>, vector<16x32xf32> -> vector<16x32xf32>
    %317 = vector.broadcast %11 : vector<1x32xf32> to vector<16x32xf32>
    %318 = arith.addf %316, %317 : vector<16x32xf32>
    %cst_146 = arith.constant dense<0.000000e+00> : vector<16xf32>
    %319 = vector.multi_reduction <add>, %318, %cst_146 [1] : vector<16x32xf32> to vector<16xf32>
    %320 = vector.shape_cast %319 : vector<16xf32> to vector<16x1xf32>
    %cst_147 = arith.constant 3.200000e+01 : f32
    %321 = vector.broadcast %cst_147 : f32 to vector<16x1xf32>
    %322 = arith.divf %320, %321 : vector<16x1xf32>
    %323 = vector.broadcast %322 : vector<16x1xf32> to vector<16x32xf32>
    %324 = arith.subf %318, %323 : vector<16x32xf32>
    %325 = arith.mulf %324, %324 : vector<16x32xf32>
    %cst_148 = arith.constant dense<0.000000e+00> : vector<16xf32>
    %326 = vector.multi_reduction <add>, %325, %cst_148 [1] : vector<16x32xf32> to vector<16xf32>
    %327 = vector.shape_cast %326 : vector<16xf32> to vector<16x1xf32>
    %cst_149 = arith.constant 3.200000e+01 : f32
    %328 = vector.broadcast %cst_149 : f32 to vector<16x1xf32>
    %329 = arith.divf %327, %328 : vector<16x1xf32>
    %330 = vector.broadcast %322 : vector<16x1xf32> to vector<16x32xf32>
    %331 = arith.subf %318, %330 : vector<16x32xf32>
    %cst_150 = arith.constant 9.99999974E-6 : f32
    %332 = vector.broadcast %cst_150 : f32 to vector<16x1xf32>
    %333 = arith.addf %329, %332 : vector<16x1xf32>
    %334 = math.rsqrt %333 : vector<16x1xf32>
    %335 = vector.broadcast %334 : vector<16x1xf32> to vector<16x32xf32>
    %336 = arith.mulf %331, %335 : vector<16x32xf32>
    %337 = vector.broadcast %12 : vector<1x32xf32> to vector<16x32xf32>
    %338 = arith.mulf %336, %337 : vector<16x32xf32>
    %339 = vector.broadcast %13 : vector<1x32xf32> to vector<16x32xf32>
    %340 = arith.addf %338, %339 : vector<16x32xf32>
    %341 = arith.addf %340, %250 : vector<16x32xf32>
    %342 = vector.shape_cast %341 : vector<16x32xf32> to vector<2x8x32xf32>
    %cst_151 = arith.constant dense<0.000000e+00> : vector<2x32xf32>
    %343 = vector.multi_reduction <add>, %342, %cst_151 [1] : vector<2x8x32xf32> to vector<2x32xf32>
    %cst_152 = arith.constant 8.000000e+00 : f32
    %344 = vector.broadcast %cst_152 : f32 to vector<2x32xf32>
    %345 = arith.divf %343, %344 : vector<2x32xf32>
    %c0_i32 = arith.constant 0 : i32
    %346 = arith.cmpi eq, %arg1, %c0_i32 : i32
    %347 = arith.extui %346 : i1 to i32
    %c0_i32_153 = arith.constant 0 : i32
    %348 = arith.cmpi ne, %347, %c0_i32_153 : i32
    scf.if %348 {
      %cst_159 = arith.constant 0.000000e+00 : f32
      %357 = vector.broadcast %cst_159 : f32 to vector<2x32xf32>
      %c0_160 = arith.constant 0 : index
      %c0_161 = arith.constant 0 : index
      %358 = vector.load %arg20[%c0_160, %c0_161] : memref<2x32xf32, #tpu.memory_space<vmem>>, vector<2x32xf32>
      tpu.vector_store %arg20[%c0_160, %c0_161], %357 {strides = array<i32>} : memref<2x32xf32, #tpu.memory_space<vmem>>, vector<2x32xf32>,
    } else {
    }
    %c0_154 = arith.constant 0 : index
    %c0_155 = arith.constant 0 : index
    %349 = vector.load %arg20[%c0_154, %c0_155] : memref<2x32xf32, #tpu.memory_space<vmem>>, vector<2x32xf32>
    %350 = vector.broadcast %292 : vector<2x1xf32> to vector<2x32xf32>
    %351 = arith.mulf %350, %345 : vector<2x32xf32>
    %352 = arith.addf %349, %351 : vector<2x32xf32>
    %c0_156 = arith.constant 0 : index
    %c0_157 = arith.constant 0 : index
    %353 = vector.load %arg20[%c0_156, %c0_157] : memref<2x32xf32, #tpu.memory_space<vmem>>, vector<2x32xf32>
    tpu.vector_store %arg20[%c0_156, %c0_157], %352 {strides = array<i32>} : memref<2x32xf32, #tpu.memory_space<vmem>>, vector<2x32xf32>,
    %c2_i32 = arith.constant 2 : i32
    %354 = arith.cmpi eq, %arg1, %c2_i32 : i32
    %355 = arith.extui %354 : i1 to i32
    %c0_i32_158 = arith.constant 0 : i32
    %356 = arith.cmpi ne, %355, %c0_i32_158 : i32
    scf.if %356 {
      %c0_159 = arith.constant 0 : index
      %c0_160 = arith.constant 0 : index
      %357 = vector.load %arg20[%c0_159, %c0_160] : memref<2x32xf32, #tpu.memory_space<vmem>>, vector<2x32xf32>
      %358 = arith.truncf %357 : vector<2x32xf32> to vector<2x32xbf16>
      %c0_161 = arith.constant 0 : index
      %c0_162 = arith.constant 0 : index
      %359 = vector.load %arg14[%c0_161, %c0_162] : memref<32x32xbf16, #tpu.memory_space<vmem>>, vector<32x32xbf16>
      %cst_163 = arith.constant dense<0.000000e+00> : vector<2x32xf32>
      %360 = tpu.matmul %358, %359, %cst_163 {dimension_numbers = #tpu.dot_dimension_numbers<[1], [0], [0], [1], [0, 0, 1, 1], [], []>} : vector<2x32xbf16>, vector<32x32xbf16>, vector<2x32xf32> -> vector<2x32xf32>
      %c0_164 = arith.constant 0 : index
      %c0_165 = arith.constant 0 : index
      %361 = vector.load %arg15[%c0_164, %c0_165] : memref<1x32xf32, #tpu.memory_space<vmem>>, vector<1x32xf32>
      %362 = vector.broadcast %361 : vector<1x32xf32> to vector<2x32xf32>
      %363 = arith.addf %360, %362 : vector<2x32xf32>
      %364 = arith.truncf %363 : vector<2x32xf32> to vector<2x32xbf16>
      %c0_166 = arith.constant 0 : index
      %c0_167 = arith.constant 0 : index
      %365 = vector.load %arg16[%c0_166, %c0_167] : memref<32x4xbf16, #tpu.memory_space<vmem>>, vector<32x4xbf16>
      %cst_168 = arith.constant dense<0.000000e+00> : vector<2x4xf32>
      %366 = tpu.matmul %364, %365, %cst_168 {dimension_numbers = #tpu.dot_dimension_numbers<[1], [0], [0], [1], [0, 0, 1, 1], [], []>} : vector<2x32xbf16>, vector<32x4xbf16>, vector<2x4xf32> -> vector<2x4xf32>
      %c0_169 = arith.constant 0 : index
      %c0_170 = arith.constant 0 : index
      %367 = vector.load %arg17[%c0_169, %c0_170] : memref<1x4xf32, #tpu.memory_space<vmem>>, vector<1x4xf32>
      %368 = vector.broadcast %367 : vector<1x4xf32> to vector<2x4xf32>
      %369 = arith.addf %366, %368 : vector<2x4xf32>
      %c0_171 = arith.constant 0 : index
      %c0_172 = arith.constant 0 : index
      %370 = vector.load %arg19[%c0_171, %c0_172] : memref<2x4xf32, #tpu.memory_space<vmem>>, vector<2x4xf32>
      tpu.vector_store %arg19[%c0_171, %c0_172], %369 {strides = array<i32>} : memref<2x4xf32, #tpu.memory_space<vmem>>, vector<2x4xf32>,
    } else {
    }
    return
  }
  func.func @transform_0(%arg0: i32, %arg1: i32) -> (i32, i32, i32, i32) {
    %c0_i32 = arith.constant 0 : i32
    %c0_i32_0 = arith.constant 0 : i32
    %c0_i32_1 = arith.constant 0 : i32
    return %arg1, %arg0, %c0_i32, %c0_i32_0 : i32, i32, i32, i32
  }
  func.func @transform_1(%arg0: i32, %arg1: i32) -> (i32, i32, i32, i32, i32) {
    %c0_i32 = arith.constant 0 : i32
    %c0_i32_0 = arith.constant 0 : i32
    %c0_i32_1 = arith.constant 0 : i32
    %c0_i32_2 = arith.constant 0 : i32
    %c0_i32_3 = arith.constant 0 : i32
    %c0_i32_4 = arith.constant 0 : i32
    return %c0_i32, %c0_i32_0, %c0_i32_1, %c0_i32_2, %c0_i32_3 : i32, i32, i32, i32, i32
  }
  func.func @transform_2(%arg0: i32, %arg1: i32) -> (i32, i32, i32, i32) {
    %c0_i32 = arith.constant 0 : i32
    %c0_i32_0 = arith.constant 0 : i32
    %c0_i32_1 = arith.constant 0 : i32
    %c0_i32_2 = arith.constant 0 : i32
    %c0_i32_3 = arith.constant 0 : i32
    return %c0_i32, %c0_i32_0, %c0_i32_1, %c0_i32_2 : i32, i32, i32, i32
  }
  func.func @transform_3(%arg0: i32, %arg1: i32) -> (i32, i32, i32) {
    %c0_i32 = arith.constant 0 : i32
    %c0_i32_0 = arith.constant 0 : i32
    %c0_i32_1 = arith.constant 0 : i32
    %c0_i32_2 = arith.constant 0 : i32
    return %c0_i32, %c0_i32_0, %c0_i32_1 : i32, i32, i32
  }
  func.func @transform_4(%arg0: i32, %arg1: i32) -> (i32, i32, i32) {
    %c0_i32 = arith.constant 0 : i32
    %c0_i32_0 = arith.constant 0 : i32
    %c0_i32_1 = arith.constant 0 : i32
    %c0_i32_2 = arith.constant 0 : i32
    return %c0_i32, %c0_i32_0, %c0_i32_1 : i32, i32, i32
  }
  func.func @transform_5(%arg0: i32, %arg1: i32) -> (i32, i32, i32) {
    %c0_i32 = arith.constant 0 : i32
    %c0_i32_0 = arith.constant 0 : i32
    %c0_i32_1 = arith.constant 0 : i32
    %c0_i32_2 = arith.constant 0 : i32
    return %c0_i32, %c0_i32_0, %c0_i32_1 : i32, i32, i32
  }
  func.func @transform_6(%arg0: i32, %arg1: i32) -> (i32, i32, i32) {
    %c0_i32 = arith.constant 0 : i32
    %c0_i32_0 = arith.constant 0 : i32
    %c0_i32_1 = arith.constant 0 : i32
    %c0_i32_2 = arith.constant 0 : i32
    return %c0_i32, %c0_i32_0, %c0_i32_1 : i32, i32, i32
  }
  func.func @transform_7(%arg0: i32, %arg1: i32) -> (i32, i32, i32) {
    %c0_i32 = arith.constant 0 : i32
    %c0_i32_0 = arith.constant 0 : i32
    %c0_i32_1 = arith.constant 0 : i32
    %c0_i32_2 = arith.constant 0 : i32
    return %c0_i32, %c0_i32_0, %c0_i32_1 : i32, i32, i32
  }
  func.func @transform_8(%arg0: i32, %arg1: i32) -> (i32, i32, i32) {
    %c0_i32 = arith.constant 0 : i32
    %c0_i32_0 = arith.constant 0 : i32
    %c0_i32_1 = arith.constant 0 : i32
    %c0_i32_2 = arith.constant 0 : i32
    return %c0_i32, %c0_i32_0, %c0_i32_1 : i32, i32, i32
  }
  func.func @transform_9(%arg0: i32, %arg1: i32) -> (i32, i32, i32) {
    %c0_i32 = arith.constant 0 : i32
    %c0_i32_0 = arith.constant 0 : i32
    %c0_i32_1 = arith.constant 0 : i32
    %c0_i32_2 = arith.constant 0 : i32
    return %c0_i32, %c0_i32_0, %c0_i32_1 : i32, i32, i32
  }
  func.func @transform_10(%arg0: i32, %arg1: i32) -> (i32, i32, i32) {
    %c0_i32 = arith.constant 0 : i32
    %c0_i32_0 = arith.constant 0 : i32
    %c0_i32_1 = arith.constant 0 : i32
    %c0_i32_2 = arith.constant 0 : i32
    return %c0_i32, %c0_i32_0, %c0_i32_1 : i32, i32, i32
  }
  func.func @transform_11(%arg0: i32, %arg1: i32) -> (i32, i32, i32) {
    %c0_i32 = arith.constant 0 : i32
    %c0_i32_0 = arith.constant 0 : i32
    %c0_i32_1 = arith.constant 0 : i32
    %c0_i32_2 = arith.constant 0 : i32
    return %c0_i32, %c0_i32_0, %c0_i32_1 : i32, i32, i32
  }
  func.func @transform_12(%arg0: i32, %arg1: i32) -> (i32, i32) {
    %c0_i32 = arith.constant 0 : i32
    %c0_i32_0 = arith.constant 0 : i32
    %c0_i32_1 = arith.constant 0 : i32
    return %c0_i32, %c0_i32_0 : i32, i32
  }
  func.func @transform_13(%arg0: i32, %arg1: i32) -> (i32, i32) {
    %c0_i32 = arith.constant 0 : i32
    %c0_i32_0 = arith.constant 0 : i32
    %c0_i32_1 = arith.constant 0 : i32
    return %c0_i32, %c0_i32_0 : i32, i32
  }
  func.func @transform_14(%arg0: i32, %arg1: i32) -> (i32, i32) {
    %c0_i32 = arith.constant 0 : i32
    %c0_i32_0 = arith.constant 0 : i32
    %c0_i32_1 = arith.constant 0 : i32
    return %c0_i32, %c0_i32_0 : i32, i32
  }
  func.func @transform_15(%arg0: i32, %arg1: i32) -> (i32, i32) {
    %c0_i32 = arith.constant 0 : i32
    %c0_i32_0 = arith.constant 0 : i32
    %c0_i32_1 = arith.constant 0 : i32
    return %c0_i32, %c0_i32_0 : i32, i32
  }
  func.func @transform_16(%arg0: i32, %arg1: i32) -> (i32, i32, i32) {
    %c0_i32 = arith.constant 0 : i32
    %c0_i32_0 = arith.constant 0 : i32
    return %arg1, %arg0, %c0_i32 : i32, i32, i32
  }
  func.func @transform_17(%arg0: i32, %arg1: i32) -> (i32, i32) {
    %c0_i32 = arith.constant 0 : i32
    %c0_i32_0 = arith.constant 0 : i32
    return %arg0, %c0_i32 : i32, i32
  }
}

</mosaic_0001>

<llo_original>
// kernel: tpu_custom_call.1
$region0: #{tpu_custom_call.1}
  #allocation0 [shape = 'u32[]', space=smem, size = 0x4, offset = 0x4, fixed_abs, tag = 'smem constant byte address 0x4 - core index']
  #allocation1 [shape = 'u32[144,128]{1,0:T(1,128)}', space=vmem, size = 0x12000, scoped, tag = 'internal scratch']
  #allocation2 [shape = 'f32[2,32]{1,0:T(2,128)}', space=vmem, size = 0x400, scoped, tag = 'scratch operand']
  %s0 = inlined_call_operand.vmem [shape: bf16[3,2,8,32], index: 0, kind: input, shape index: {}]
  %s1 = inlined_call_operand.vmem [shape: bf16[3,3,4,32,64], index: 1, kind: input, shape index: {}]
  %s2 = inlined_call_operand.vmem [shape: bf16[3,4,64,32], index: 2, kind: input, shape index: {}]
  %s3 = inlined_call_operand.vmem [shape: bf16[3,32,256], index: 3, kind: input, shape index: {}]
  %s4 = inlined_call_operand.vmem [shape: f32[3,1,256], index: 4, kind: input, shape index: {}]
  %s5 = inlined_call_operand.vmem [shape: bf16[3,256,32], index: 5, kind: input, shape index: {}]
  %s6 = inlined_call_operand.vmem [shape: bf16[3,32,32], index: 6, kind: input, shape index: {}]
  %s7 = inlined_call_operand.vmem [shape: bf16[3,32,4], index: 7, kind: input, shape index: {}]
  %s8 = inlined_call_operand.vmem [shape: f32[3,1,4], index: 8, kind: input, shape index: {}]
  %s9 = inlined_call_operand.vmem [shape: bf16[3,32,32], index: 9, kind: input, shape index: {}]
  %s10 = inlined_call_operand.vmem [shape: bf16[3,32,32], index: 10, kind: input, shape index: {}]
  %s11 = inlined_call_operand.vmem [shape: f32[3,11,32], index: 11, kind: input, shape index: {}]
  %s12 = inlined_call_operand.vmem [shape: bf16[32,32], index: 12, kind: input, shape index: {}]
  %s13 = inlined_call_operand.vmem [shape: f32[1,32], index: 13, kind: input, shape index: {}]
  %s14 = inlined_call_operand.vmem [shape: bf16[32,4], index: 14, kind: input, shape index: {}]
  %s15 = inlined_call_operand.vmem [shape: f32[1,4], index: 15, kind: input, shape index: {}]
  %s16 = inlined_call_operand.hbm [shape: f32[3,2,4], index: 16, kind: output, shape index: {0}]
  %s17 = inlined_call_operand.hbm [shape: f32[2,4], index: 17, kind: output, shape index: {1}]
  %18 = xla_tuple %s16, %s17
  %s19 = sld [smem:[#allocation0]]
  $region113: #{tpu_custom_call.1} parent=0
    _
  %s21 = ssub.s32 1, %s19
  %s22 = scalar_select 0, %s21, %s19
  $region1: #{tpu_custom_call.1} parent=0
    #allocation3 [shape = 'u8[2048]{0}', space=vmem, size = 0x800, scoped, tag = 'output window, operand 0']
    #allocation4 [shape = 's32[2]{0}', space=sflag, size = 0x8, scoped, tag = 'scoped memory for tpu_custom_call.1']
    #allocation5 [shape = 'u8[1024]{0}', space=vmem, size = 0x400, scoped, tag = 'output window, operand 1, single buffered']
    #allocation6 [shape = 's32[1]{0}', space=sflag, size = 0x4, scoped, tag = 'scoped memory for tpu_custom_call.1']
    %23 = vsyncpa [#allocation4], 0
    %s24 = scalar_lea.sflag [#allocation4], 1
    %25 = vsyncpa %s24, 0
    %26 = vsyncpa [#allocation6], 0
    loop: start=0, step=1, limit=5
    $region2: #{tpu_custom_call.1} parent=1 // loop_pre_header
      _
    $region3: #{tpu_custom_call.1} parent=1 // loop_header
      %s28 = sphi 0, %s32
      %p29 = scmp.ge.s32.totalorder %s28, 5
      %s35 = sphi 0, %s47
      %s36 = sphi 0, %s43
      %s37 = sphi 0, %s35
      %s38 = sphi 0, %s36
      %s39 = sphi 0, %s37
      %s40 = sphi 0, %s38
      %s52 = sphi 0, %s54
      %s55 = sphi 0, %s52
      %s56 = sphi 0, %s55
      %s72 = sphi 0, %s56
      %s76 = sphi 0, %s76
      %s78 = sphi 0, %s76
      %s79 = sphi 0, %s78
      %s93 = sphi 0, %s79
      %s97 = sphi 0, %s97
      %s99 = sphi 0, %s97
      %s100 = sphi 0, %s99
      %s114 = sphi 0, %s100
      %s118 = sphi 0, %s118
      %s120 = sphi 0, %s118
      %s121 = sphi 0, %s120
      %s135 = sphi 0, %s121
      %s139 = sphi 0, %s139
      %s141 = sphi 0, %s139
      %s142 = sphi 0, %s141
      %s156 = sphi 0, %s142
      %s160 = sphi 0, %s160
      %s162 = sphi 0, %s160
      %s163 = sphi 0, %s162
      %s177 = sphi 0, %s163
      %s181 = sphi 0, %s181
      %s183 = sphi 0, %s181
      %s184 = sphi 0, %s183
      %s198 = sphi 0, %s184
      %s202 = sphi 0, %s202
      %s204 = sphi 0, %s202
      %s205 = sphi 0, %s204
      %s219 = sphi 0, %s205
      %s223 = sphi 0, %s223
      %s225 = sphi 0, %s223
      %s226 = sphi 0, %s225
      %s240 = sphi 0, %s226
      %s244 = sphi 0, %s244
      %s246 = sphi 0, %s244
      %s247 = sphi 0, %s246
      %s261 = sphi 0, %s247
      %s265 = sphi 0, %s265
      %s267 = sphi 0, %s265
      %s268 = sphi 0, %s267
      %s282 = sphi 0, %s268
      %s286 = sphi 0, %s286
      %s288 = sphi 0, %s286
      %s289 = sphi 0, %s288
      %s303 = sphi 0, %s289
      %s307 = sphi 0, %s307
      %s309 = sphi 0, %s307
      %s310 = sphi 0, %s309
      %s324 = sphi 0, %s310
      %s328 = sphi 0, %s328
      %s330 = sphi 0, %s328
      %s331 = sphi 0, %s330
      %s345 = sphi 0, %s331
      %s349 = sphi 0, %s349
      %s351 = sphi 0, %s349
      %s352 = sphi 0, %s351
      %s366 = sphi 0, %s352
      %s370 = sphi 0, %s370
      %s372 = sphi 0, %s370
      %s373 = sphi 0, %s372
      %s387 = sphi 0, %s373
      %s395 = sphi 0, %s397
      %s398 = sphi 0, %s395
      %s399 = sphi 0, %s398
      %s415 = sphi 0, %s399
      %s421 = sphi 0, %s423
      %s424 = sphi 0, %s421
      %s425 = sphi 0, %s424
      %s441 = sphi 0, %s425
    $region4: #{tpu_custom_call.1} parent=1 // loop_header_branch
      %31 = sbr.rel (%p29) target = $region8
    $region5: #{tpu_custom_call.1} parent=1 // loop_body
      %s33 = ssub.s32 %s28, 1
      %s34 = ssub.s32 %s28, 2
      %s41 = sadd.s32 1, %s36
      %p42 = scmp.ge.s32.totalorder %s41, 3
      %s43 = scalar_select %p42, 0, %s41
      %s44 = sadd.s32 1, %s35
      %s45 = scalar_select %p42, %s44, %s35
      %p46 = scmp.ge.s32.totalorder %s45, 1
      %s47 = scalar_select %p46, 0, %s45
      %s48 = ssub.s32 %s36, %s43
      %s49 = ssub.s32 %s35, %s47
      %s50 = sor.u32 %s48, %s49
      %p51 = scmp.eq.s32.totalorder %s50, 0
      %s53 = sadd.s32 %s52, 1
      %s54 = scalar_select %p51, %s52, %s53
      %p57 = pneg %p51
      %p58 = scmp.eq.s32.totalorder %s28, 2
      %p59 = por %p57, %p58
      %p60 = scmp.ne.s32.totalorder %s52, %s55
      %p61 = scmp.eq.s32.totalorder %s28, 0
      %p62 = por %p60, %p61
      %p63 = scmp.ne.s32.totalorder %s52, %s55
      %p64 = scmp.eq.s32.totalorder %s33, 2
      %p65 = por %p63, %p64
      %p66 = scmp.ne.s32.totalorder %s55, %s56
      %p67 = scmp.eq.s32.totalorder %s33, 0
      %p68 = por %p66, %p67
      %p69 = scmp.ne.s32.totalorder %s55, %s56
      %p70 = scmp.eq.s32.totalorder %s34, 2
      %p71 = por %p69, %p70
      %p73 = scmp.ne.s32.totalorder %s56, %s72
      %p74 = scmp.eq.s32.totalorder %s34, 0
      %p75 = por %p73, %p74
      %s77 = sadd.s32 %s76, 1
      %p80 = scmp.eq.s32.totalorder %s28, 2
      %p81 = scmp.ne.s32.totalorder %s76, %s78
      %p82 = scmp.eq.s32.totalorder %s28, 0
      %p83 = por %p81, %p82
      %p84 = scmp.ne.s32.totalorder %s76, %s78
      %p85 = scmp.eq.s32.totalorder %s33, 2
      %p86 = por %p84, %p85
      %p87 = scmp.ne.s32.totalorder %s78, %s79
      %p88 = scmp.eq.s32.totalorder %s33, 0
      %p89 = por %p87, %p88
      %p90 = scmp.ne.s32.totalorder %s78, %s79
      %p91 = scmp.eq.s32.totalorder %s34, 2
      %p92 = por %p90, %p91
      %p94 = scmp.ne.s32.totalorder %s79, %s93
      %p95 = scmp.eq.s32.totalorder %s34, 0
      %p96 = por %p94, %p95
      %s98 = sadd.s32 %s97, 1
      %p101 = scmp.eq.s32.totalorder %s28, 2
      %p102 = scmp.ne.s32.totalorder %s97, %s99
      %p103 = scmp.eq.s32.totalorder %s28, 0
      %p104 = por %p102, %p103
      %p105 = scmp.ne.s32.totalorder %s97, %s99
      %p106 = scmp.eq.s32.totalorder %s33, 2
      %p107 = por %p105, %p106
      %p108 = scmp.ne.s32.totalorder %s99, %s100
      %p109 = scmp.eq.s32.totalorder %s33, 0
      %p110 = por %p108, %p109
      %p111 = scmp.ne.s32.totalorder %s99, %s100
      %p112 = scmp.eq.s32.totalorder %s34, 2
      %p113 = por %p111, %p112
      %p115 = scmp.ne.s32.totalorder %s100, %s114
      %p116 = scmp.eq.s32.totalorder %s34, 0
      %p117 = por %p115, %p116
      %s119 = sadd.s32 %s118, 1
      %p122 = scmp.eq.s32.totalorder %s28, 2
      %p123 = scmp.ne.s32.totalorder %s118, %s120
      %p124 = scmp.eq.s32.totalorder %s28, 0
      %p125 = por %p123, %p124
      %p126 = scmp.ne.s32.totalorder %s118, %s120
      %p127 = scmp.eq.s32.totalorder %s33, 2
      %p128 = por %p126, %p127
      %p129 = scmp.ne.s32.totalorder %s120, %s121
      %p130 = scmp.eq.s32.totalorder %s33, 0
      %p131 = por %p129, %p130
      %p132 = scmp.ne.s32.totalorder %s120, %s121
      %p133 = scmp.eq.s32.totalorder %s34, 2
      %p134 = por %p132, %p133
      %p136 = scmp.ne.s32.totalorder %s121, %s135
      %p137 = scmp.eq.s32.totalorder %s34, 0
      %p138 = por %p136, %p137
      %s140 = sadd.s32 %s139, 1
      %p143 = scmp.eq.s32.totalorder %s28, 2
      %p144 = scmp.ne.s32.totalorder %s139, %s141
      %p145 = scmp.eq.s32.totalorder %s28, 0
      %p146 = por %p144, %p145
      %p147 = scmp.ne.s32.totalorder %s139, %s141
      %p148 = scmp.eq.s32.totalorder %s33, 2
      %p149 = por %p147, %p148
      %p150 = scmp.ne.s32.totalorder %s141, %s142
      %p151 = scmp.eq.s32.totalorder %s33, 0
      %p152 = por %p150, %p151
      %p153 = scmp.ne.s32.totalorder %s141, %s142
      %p154 = scmp.eq.s32.totalorder %s34, 2
      %p155 = por %p153, %p154
      %p157 = scmp.ne.s32.totalorder %s142, %s156
      %p158 = scmp.eq.s32.totalorder %s34, 0
      %p159 = por %p157, %p158
      %s161 = sadd.s32 %s160, 1
      %p164 = scmp.eq.s32.totalorder %s28, 2
      %p165 = scmp.ne.s32.totalorder %s160, %s162
      %p166 = scmp.eq.s32.totalorder %s28, 0
      %p167 = por %p165, %p166
      %p168 = scmp.ne.s32.totalorder %s160, %s162
      %p169 = scmp.eq.s32.totalorder %s33, 2
      %p170 = por %p168, %p169
      %p171 = scmp.ne.s32.totalorder %s162, %s163
      %p172 = scmp.eq.s32.totalorder %s33, 0
      %p173 = por %p171, %p172
      %p174 = scmp.ne.s32.totalorder %s162, %s163
      %p175 = scmp.eq.s32.totalorder %s34, 2
      %p176 = por %p174, %p175
      %p178 = scmp.ne.s32.totalorder %s163, %s177
      %p179 = scmp.eq.s32.totalorder %s34, 0
      %p180 = por %p178, %p179
      %s182 = sadd.s32 %s181, 1
      %p185 = scmp.eq.s32.totalorder %s28, 2
      %p186 = scmp.ne.s32.totalorder %s181, %s183
      %p187 = scmp.eq.s32.totalorder %s28, 0
      %p188 = por %p186, %p187
      %p189 = scmp.ne.s32.totalorder %s181, %s183
      %p190 = scmp.eq.s32.totalorder %s33, 2
      %p191 = por %p189, %p190
      %p192 = scmp.ne.s32.totalorder %s183, %s184
      %p193 = scmp.eq.s32.totalorder %s33, 0
      %p194 = por %p192, %p193
      %p195 = scmp.ne.s32.totalorder %s183, %s184
      %p196 = scmp.eq.s32.totalorder %s34, 2
      %p197 = por %p195, %p196
      %p199 = scmp.ne.s32.totalorder %s184, %s198
      %p200 = scmp.eq.s32.totalorder %s34, 0
      %p201 = por %p199, %p200
      %s203 = sadd.s32 %s202, 1
      %p206 = scmp.eq.s32.totalorder %s28, 2
      %p207 = scmp.ne.s32.totalorder %s202, %s204
      %p208 = scmp.eq.s32.totalorder %s28, 0
      %p209 = por %p207, %p208
      %p210 = scmp.ne.s32.totalorder %s202, %s204
      %p211 = scmp.eq.s32.totalorder %s33, 2
      %p212 = por %p210, %p211
      %p213 = scmp.ne.s32.totalorder %s204, %s205
      %p214 = scmp.eq.s32.totalorder %s33, 0
      %p215 = por %p213, %p214
      %p216 = scmp.ne.s32.totalorder %s204, %s205
      %p217 = scmp.eq.s32.totalorder %s34, 2
      %p218 = por %p216, %p217
      %p220 = scmp.ne.s32.totalorder %s205, %s219
      %p221 = scmp.eq.s32.totalorder %s34, 0
      %p222 = por %p220, %p221
      %s224 = sadd.s32 %s223, 1
      %p227 = scmp.eq.s32.totalorder %s28, 2
      %p228 = scmp.ne.s32.totalorder %s223, %s225
      %p229 = scmp.eq.s32.totalorder %s28, 0
      %p230 = por %p228, %p229
      %p231 = scmp.ne.s32.totalorder %s223, %s225
      %p232 = scmp.eq.s32.totalorder %s33, 2
      %p233 = por %p231, %p232
      %p234 = scmp.ne.s32.totalorder %s225, %s226
      %p235 = scmp.eq.s32.totalorder %s33, 0
      %p236 = por %p234, %p235
      %p237 = scmp.ne.s32.totalorder %s225, %s226
      %p238 = scmp.eq.s32.totalorder %s34, 2
      %p239 = por %p237, %p238
      %p241 = scmp.ne.s32.totalorder %s226, %s240
      %p242 = scmp.eq.s32.totalorder %s34, 0
      %p243 = por %p241, %p242
      %s245 = sadd.s32 %s244, 1
      %p248 = scmp.eq.s32.totalorder %s28, 2
      %p249 = scmp.ne.s32.totalorder %s244, %s246
      %p250 = scmp.eq.s32.totalorder %s28, 0
      %p251 = por %p249, %p250
      %p252 = scmp.ne.s32.totalorder %s244, %s246
      %p253 = scmp.eq.s32.totalorder %s33, 2
      %p254 = por %p252, %p253
      %p255 = scmp.ne.s32.totalorder %s246, %s247
      %p256 = scmp.eq.s32.totalorder %s33, 0
      %p257 = por %p255, %p256
      %p258 = scmp.ne.s32.totalorder %s246, %s247
      %p259 = scmp.eq.s32.totalorder %s34, 2
      %p260 = por %p258, %p259
      %p262 = scmp.ne.s32.totalorder %s247, %s261
      %p263 = scmp.eq.s32.totalorder %s34, 0
      %p264 = por %p262, %p263
      %s266 = sadd.s32 %s265, 1
      %p269 = scmp.eq.s32.totalorder %s28, 2
      %p270 = scmp.ne.s32.totalorder %s265, %s267
      %p271 = scmp.eq.s32.totalorder %s28, 0
      %p272 = por %p270, %p271
      %p273 = scmp.ne.s32.totalorder %s265, %s267
      %p274 = scmp.eq.s32.totalorder %s33, 2
      %p275 = por %p273, %p274
      %p276 = scmp.ne.s32.totalorder %s267, %s268
      %p277 = scmp.eq.s32.totalorder %s33, 0
      %p278 = por %p276, %p277
      %p279 = scmp.ne.s32.totalorder %s267, %s268
      %p280 = scmp.eq.s32.totalorder %s34, 2
      %p281 = por %p279, %p280
      %p283 = scmp.ne.s32.totalorder %s268, %s282
      %p284 = scmp.eq.s32.totalorder %s34, 0
      %p285 = por %p283, %p284
      %s287 = sadd.s32 %s286, 1
      %p290 = scmp.eq.s32.totalorder %s28, 2
      %p291 = scmp.ne.s32.totalorder %s286, %s288
      %p292 = scmp.eq.s32.totalorder %s28, 0
      %p293 = por %p291, %p292
      %p294 = scmp.ne.s32.totalorder %s286, %s288
      %p295 = scmp.eq.s32.totalorder %s33, 2
      %p296 = por %p294, %p295
      %p297 = scmp.ne.s32.totalorder %s288, %s289
      %p298 = scmp.eq.s32.totalorder %s33, 0
      %p299 = por %p297, %p298
      %p300 = scmp.ne.s32.totalorder %s288, %s289
      %p301 = scmp.eq.s32.totalorder %s34, 2
      %p302 = por %p300, %p301
      %p304 = scmp.ne.s32.totalorder %s289, %s303
      %p305 = scmp.eq.s32.totalorder %s34, 0
      %p306 = por %p304, %p305
      %s308 = sadd.s32 %s307, 1
      %p311 = scmp.eq.s32.totalorder %s28, 2
      %p312 = scmp.ne.s32.totalorder %s307, %s309
      %p313 = scmp.eq.s32.totalorder %s28, 0
      %p314 = por %p312, %p313
      %p315 = scmp.ne.s32.totalorder %s307, %s309
      %p316 = scmp.eq.s32.totalorder %s33, 2
      %p317 = por %p315, %p316
      %p318 = scmp.ne.s32.totalorder %s309, %s310
      %p319 = scmp.eq.s32.totalorder %s33, 0
      %p320 = por %p318, %p319
      %p321 = scmp.ne.s32.totalorder %s309, %s310
      %p322 = scmp.eq.s32.totalorder %s34, 2
      %p323 = por %p321, %p322
      %p325 = scmp.ne.s32.totalorder %s310, %s324
      %p326 = scmp.eq.s32.totalorder %s34, 0
      %p327 = por %p325, %p326
      %s329 = sadd.s32 %s328, 1
      %p332 = scmp.eq.s32.totalorder %s28, 2
      %p333 = scmp.ne.s32.totalorder %s328, %s330
      %p334 = scmp.eq.s32.totalorder %s28, 0
      %p335 = por %p333, %p334
      %p336 = scmp.ne.s32.totalorder %s328, %s330
      %p337 = scmp.eq.s32.totalorder %s33, 2
      %p338 = por %p336, %p337
      %p339 = scmp.ne.s32.totalorder %s330, %s331
      %p340 = scmp.eq.s32.totalorder %s33, 0
      %p341 = por %p339, %p340
      %p342 = scmp.ne.s32.totalorder %s330, %s331
      %p343 = scmp.eq.s32.totalorder %s34, 2
      %p344 = por %p342, %p343
      %p346 = scmp.ne.s32.totalorder %s331, %s345
      %p347 = scmp.eq.s32.totalorder %s34, 0
      %p348 = por %p346, %p347
      %s350 = sadd.s32 %s349, 1
      %p353 = scmp.eq.s32.totalorder %s28, 2
      %p354 = scmp.ne.s32.totalorder %s349, %s351
      %p355 = scmp.eq.s32.totalorder %s28, 0
      %p356 = por %p354, %p355
      %p357 = scmp.ne.s32.totalorder %s349, %s351
      %p358 = scmp.eq.s32.totalorder %s33, 2
      %p359 = por %p357, %p358
      %p360 = scmp.ne.s32.totalorder %s351, %s352
      %p361 = scmp.eq.s32.totalorder %s33, 0
      %p362 = por %p360, %p361
      %p363 = scmp.ne.s32.totalorder %s351, %s352
      %p364 = scmp.eq.s32.totalorder %s34, 2
      %p365 = por %p363, %p364
      %p367 = scmp.ne.s32.totalorder %s352, %s366
      %p368 = scmp.eq.s32.totalorder %s34, 0
      %p369 = por %p367, %p368
      %s371 = sadd.s32 %s370, 1
      %p374 = scmp.eq.s32.totalorder %s28, 2
      %p375 = scmp.ne.s32.totalorder %s370, %s372
      %p376 = scmp.eq.s32.totalorder %s28, 0
      %p377 = por %p375, %p376
      %p378 = scmp.ne.s32.totalorder %s370, %s372
      %p379 = scmp.eq.s32.totalorder %s33, 2
      %p380 = por %p378, %p379
      %p381 = scmp.ne.s32.totalorder %s372, %s373
      %p382 = scmp.eq.s32.totalorder %s33, 0
      %p383 = por %p381, %p382
      %p384 = scmp.ne.s32.totalorder %s372, %s373
      %p385 = scmp.eq.s32.totalorder %s34, 2
      %p386 = por %p384, %p385
      %p388 = scmp.ne.s32.totalorder %s373, %s387
      %p389 = scmp.eq.s32.totalorder %s34, 0
      %p390 = por %p388, %p389
      %s391 = ssub.s32 %s36, %s43
      %s392 = ssub.s32 %s35, %s47
      %s393 = sor.u32 %s391, %s392
      %p394 = scmp.eq.s32.totalorder %s393, 0
      %s396 = sadd.s32 %s395, 1
      %s397 = scalar_select %p394, %s395, %s396
      %p400 = pneg %p394
      %p401 = scmp.eq.s32.totalorder %s28, 2
      %p402 = por %p400, %p401
      %p403 = scmp.ne.s32.totalorder %s395, %s398
      %p404 = scmp.eq.s32.totalorder %s28, 0
      %p405 = por %p403, %p404
      %p406 = scmp.ne.s32.totalorder %s395, %s398
      %p407 = scmp.eq.s32.totalorder %s33, 2
      %p408 = por %p406, %p407
      %p409 = scmp.ne.s32.totalorder %s398, %s399
      %p410 = scmp.eq.s32.totalorder %s33, 0
      %p411 = por %p409, %p410
      %p412 = scmp.ne.s32.totalorder %s398, %s399
      %p413 = scmp.eq.s32.totalorder %s34, 2
      %p414 = por %p412, %p413
      %p416 = scmp.ne.s32.totalorder %s399, %s415
      %p417 = scmp.eq.s32.totalorder %s34, 0
      %p418 = por %p416, %p417
      %s419 = ssub.s32 %s35, %s47
      %p420 = scmp.eq.s32.totalorder %s419, 0
      %s422 = sadd.s32 %s421, 1
      %s423 = scalar_select %p420, %s421, %s422
      %p426 = pneg %p420
      %p427 = scmp.eq.s32.totalorder %s28, 2
      %p428 = por %p426, %p427
      %p429 = scmp.ne.s32.totalorder %s421, %s424
      %p430 = scmp.eq.s32.totalorder %s28, 0
      %p431 = por %p429, %p430
      %p432 = scmp.ne.s32.totalorder %s421, %s424
      %p433 = scmp.eq.s32.totalorder %s33, 2
      %p434 = por %p432, %p433
      %p435 = scmp.ne.s32.totalorder %s424, %s425
      %p436 = scmp.eq.s32.totalorder %s33, 0
      %p437 = por %p435, %p436
      %p438 = scmp.ne.s32.totalorder %s424, %s425
      %p439 = scmp.eq.s32.totalorder %s34, 2
      %p440 = por %p438, %p439
      %p442 = scmp.ne.s32.totalorder %s425, %s441
      %p443 = scmp.eq.s32.totalorder %s34, 0
      %p444 = por %p442, %p443
      %p445 = scmp.le.s32.totalorder 1, %s28
      %p446 = scmp.lt.s32.totalorder %s28, 4
      %p447 = pnand %p445, %p446
      %p448 = pneg %p447
      // Predicated region
      $region9: #{tpu_custom_call.1} parent=5 // pred_check
        _
      $region10: #{tpu_custom_call.1} parent=5 // pred_check_branch
        %450 = sbr.rel (%p447) target = $region12
      $region11: #{tpu_custom_call.1} parent=5 // pred_region
        %s451 = ssub.s32 %s28, 1
        // Predicated region
        $region13: #{tpu_custom_call.1} parent=11 // pred_check
          %p452 = pneg %p89
        $region14: #{tpu_custom_call.1} parent=11 // pred_check_branch
          %454 = sbr.rel (%p452) target = $region16
        $region15: #{tpu_custom_call.1} parent=11 // pred_region
          _
        $region16: #{tpu_custom_call.1} parent=11 // pred_fallthru
          _
        // Predicated region
        $region17: #{tpu_custom_call.1} parent=11 // pred_check
          %p455 = pneg %p110
        $region18: #{tpu_custom_call.1} parent=11 // pred_check_branch
          %457 = sbr.rel (%p455) target = $region20
        $region19: #{tpu_custom_call.1} parent=11 // pred_region
          _
        $region20: #{tpu_custom_call.1} parent=11 // pred_fallthru
          _
        // Predicated region
        $region21: #{tpu_custom_call.1} parent=11 // pred_check
          %p458 = pneg %p131
        $region22: #{tpu_custom_call.1} parent=11 // pred_check_branch
          %460 = sbr.rel (%p458) target = $region24
        $region23: #{tpu_custom_call.1} parent=11 // pred_region
          _
        $region24: #{tpu_custom_call.1} parent=11 // pred_fallthru
          _
        // Predicated region
        $region25: #{tpu_custom_call.1} parent=11 // pred_check
          %p461 = pneg %p152
        $region26: #{tpu_custom_call.1} parent=11 // pred_check_branch
          %463 = sbr.rel (%p461) target = $region28
        $region27: #{tpu_custom_call.1} parent=11 // pred_region
          _
        $region28: #{tpu_custom_call.1} parent=11 // pred_fallthru
          _
        // Predicated region
        $region29: #{tpu_custom_call.1} parent=11 // pred_check
          %p464 = pneg %p173
        $region30: #{tpu_custom_call.1} parent=11 // pred_check_branch
          %466 = sbr.rel (%p464) target = $region32
        $region31: #{tpu_custom_call.1} parent=11 // pred_region
          _
        $region32: #{tpu_custom_call.1} parent=11 // pred_fallthru
          _
        // Predicated region
        $region33: #{tpu_custom_call.1} parent=11 // pred_check
          %p467 = pneg %p194
        $region34: #{tpu_custom_call.1} parent=11 // pred_check_branch
          %469 = sbr.rel (%p467) target = $region36
        $region35: #{tpu_custom_call.1} parent=11 // pred_region
          _
        $region36: #{tpu_custom_call.1} parent=11 // pred_fallthru
          _
        // Predicated region
        $region37: #{tpu_custom_call.1} parent=11 // pred_check
          %p470 = pneg %p215
        $region38: #{tpu_custom_call.1} parent=11 // pred_check_branch
          %472 = sbr.rel (%p470) target = $region40
        $region39: #{tpu_custom_call.1} parent=11 // pred_region
          _
        $region40: #{tpu_custom_call.1} parent=11 // pred_fallthru
          _
        // Predicated region
        $region41: #{tpu_custom_call.1} parent=11 // pred_check
          %p473 = pneg %p236
        $region42: #{tpu_custom_call.1} parent=11 // pred_check_branch
          %475 = sbr.rel (%p473) target = $region44
        $region43: #{tpu_custom_call.1} parent=11 // pred_region
          _
        $region44: #{tpu_custom_call.1} parent=11 // pred_fallthru
          _
        // Predicated region
        $region45: #{tpu_custom_call.1} parent=11 // pred_check
          %p476 = pneg %p257
        $region46: #{tpu_custom_call.1} parent=11 // pred_check_branch
          %478 = sbr.rel (%p476) target = $region48
        $region47: #{tpu_custom_call.1} parent=11 // pred_region
          _
        $region48: #{tpu_custom_call.1} parent=11 // pred_fallthru
          _
        // Predicated region
        $region49: #{tpu_custom_call.1} parent=11 // pred_check
          %p479 = pneg %p278
        $region50: #{tpu_custom_call.1} parent=11 // pred_check_branch
          %481 = sbr.rel (%p479) target = $region52
        $region51: #{tpu_custom_call.1} parent=11 // pred_region
          _
        $region52: #{tpu_custom_call.1} parent=11 // pred_fallthru
          _
        // Predicated region
        $region53: #{tpu_custom_call.1} parent=11 // pred_check
          %p482 = pneg %p299
        $region54: #{tpu_custom_call.1} parent=11 // pred_check_branch
          %484 = sbr.rel (%p482) target = $region56
        $region55: #{tpu_custom_call.1} parent=11 // pred_region
          _
        $region56: #{tpu_custom_call.1} parent=11 // pred_fallthru
          _
        // Predicated region
        $region57: #{tpu_custom_call.1} parent=11 // pred_check
          %p485 = pneg %p320
        $region58: #{tpu_custom_call.1} parent=11 // pred_check_branch
          %487 = sbr.rel (%p485) target = $region60
        $region59: #{tpu_custom_call.1} parent=11 // pred_region
          _
        $region60: #{tpu_custom_call.1} parent=11 // pred_fallthru
          _
        // Predicated region
        $region61: #{tpu_custom_call.1} parent=11 // pred_check
          %p488 = pneg %p341
        $region62: #{tpu_custom_call.1} parent=11 // pred_check_branch
          %490 = sbr.rel (%p488) target = $region64
        $region63: #{tpu_custom_call.1} parent=11 // pred_region
          _
        $region64: #{tpu_custom_call.1} parent=11 // pred_fallthru
          _
        // Predicated region
        $region65: #{tpu_custom_call.1} parent=11 // pred_check
          %p491 = pneg %p362
        $region66: #{tpu_custom_call.1} parent=11 // pred_check_branch
          %493 = sbr.rel (%p491) target = $region68
        $region67: #{tpu_custom_call.1} parent=11 // pred_region
          _
        $region68: #{tpu_custom_call.1} parent=11 // pred_fallthru
          _
        // Predicated region
        $region69: #{tpu_custom_call.1} parent=11 // pred_check
          %p494 = pneg %p383
        $region70: #{tpu_custom_call.1} parent=11 // pred_check_branch
          %496 = sbr.rel (%p494) target = $region72
        $region71: #{tpu_custom_call.1} parent=11 // pred_region
          _
        $region72: #{tpu_custom_call.1} parent=11 // pred_fallthru
          _
      $region12: #{tpu_custom_call.1} parent=5 // pred_fallthru
        _
      %p497 = scmp.lt.s32.totalorder %s28, 3
      // Predicated region
      $region73: #{tpu_custom_call.1} parent=5 // pred_check
        %p498 = pneg %p497
      $region74: #{tpu_custom_call.1} parent=5 // pred_check_branch
        %500 = sbr.rel (%p498) target = $region76
      $region75: #{tpu_custom_call.1} parent=5 // pred_region
        // Predicated region
        $region77: #{tpu_custom_call.1} parent=75 // pred_check
          %p501 = pneg %p62
        $region78: #{tpu_custom_call.1} parent=75 // pred_check_branch
          %503 = sbr.rel (%p501) target = $region80
        $region79: #{tpu_custom_call.1} parent=75 // pred_region
          %s504 = smul.u32 2, %s35
          %p505 = scmp.lt.s32.totalorder %s36, 2
          %s506 = scalar_select %p505, %s36, 2
          %p507 = scmp.lt.s32.totalorder %s504, 1
          %s508 = scalar_select %p507, %s504, 1
          %s509 = smul.addr %s506, 2
          %s510 = sadd.s32 %s508, %s509
          %s511 = smul.addr %s510, 4
          %s512 = scalar_lea.vmem %s0, %s511
          %s513 = smul.u32 2, %s35
        $region80: #{tpu_custom_call.1} parent=75 // pred_fallthru
          _
      $region76: #{tpu_custom_call.1} parent=5 // pred_fallthru
        _
      %p514 = scmp.le.s32.totalorder 1, %s28
      %p515 = scmp.lt.s32.totalorder %s28, 4
      %p516 = pnand %p514, %p515
      %p517 = pneg %p516
      // Predicated region
      $region81: #{tpu_custom_call.1} parent=5 // pred_check
        _
      $region82: #{tpu_custom_call.1} parent=5 // pred_check_branch
        %519 = sbr.rel (%p516) target = $region84
      $region83: #{tpu_custom_call.1} parent=5 // pred_region
        %s520 = ssub.s32 %s28, 1
        %s521 = smul.u32 2, %s37
        %p522 = scmp.lt.s32.totalorder %s38, 2
        %s523 = scalar_select %p522, %s38, 2
        %p524 = scmp.lt.s32.totalorder %s521, 1
        %s525 = scalar_select %p524, %s521, 1
        %s526 = smul.addr %s523, 2
        %s527 = sadd.s32 %s525, %s526
        %s528 = smul.addr %s527, 4
        %s529 = scalar_lea.vmem %s0, %s528
        %p530 = pneg %p68
        %p531 = pneg %p65
        %p532 = pneg %p89
        %p533 = pneg %p86
        %p534 = pneg %p110
        %p535 = pneg %p107
        %p536 = pneg %p131
        %p537 = pneg %p128
        %p538 = pneg %p152
        %p539 = pneg %p149
        %p540 = pneg %p173
        %p541 = pneg %p170
        %p542 = pneg %p194
        %p543 = pneg %p191
        %p544 = pneg %p215
        %p545 = pneg %p212
        %p546 = pneg %p236
        %p547 = pneg %p233
        %p548 = pneg %p257
        %p549 = pneg %p254
        %p550 = pneg %p278
        %p551 = pneg %p275
        %p552 = pneg %p299
        %p553 = pneg %p296
        %p554 = pneg %p320
        %p555 = pneg %p317
        %p556 = pneg %p341
        %p557 = pneg %p338
        %p558 = pneg %p362
        %p559 = pneg %p359
        %p560 = pneg %p383
        %p561 = pneg %p380
        %p562 = pneg %p411
        %p563 = pneg %p408
        %s564 = sand.u32 %s398, 1
        %s565 = scalar_lea.sflag [#allocation4], %s564
        %s566 = sand.u32 %s398, 1
        %s567 = smul.addr %s566, 2
        %s568 = scalar_lea.vmem [#allocation3], %s567
        %p569 = pneg %p437
        %p570 = pneg %p434
        %s571 = smul.u32 2, %s37
        %p572 = scmp.lt.s32.totalorder %s38, 2
        %s573 = scalar_select %p572, %s38, 2
        %p574 = scmp.lt.s32.totalorder %s571, 1
        %s575 = scalar_select %p574, %s571, 1
        %s576 = smul.addr %s573, 2
        %s577 = sadd.s32 %s575, %s576
        %s578 = smul.addr %s577, 4
        %s579 = scalar_lea.vmem %s0, %s578
        %s580 = smul.u32 2, %s37
        %s582 = smul.u32 %s38, 16
        %s583 = scalar_lea.vmem %s11, %s582
        %v584 = vld [vmem:[%s583] sm:$0xff]
        %v585 = vld [vmem:[%s583 + $0x8] sm:$0x7]
        %v586 = vld [vmem:[%s579] sm:$0xf]
        %v587 = vld [vmem:[%s579 + $0x4] sm:$0xf]
        %v588 = vunpack.c.l.bf16 %v586
        %v589 = vunpack.c.l.bf16 %v587
        %vm590 = vcmask 261120
        %v591 = vsel %vm590, %v588, 0.0
        %592 = vadd.xlane.f32.xlu0 %v591
        %v593 = vpop.xlane.xlu0 %592
        %v594 = vsel %vm590, %v589, 0.0
        %595 = vadd.xlane.f32.xlu0 %v594
        %v596 = vpop.xlane.xlu0 %595
        %v597 = vrcp.pop 32.0
        %v598 = vmul.f32 %v593, %v597
        %v599 = vmul.f32 %v596, %v597
        %v600 = vsub.f32 %v588, %v598
        %v601 = vsub.f32 %v589, %v599
        %v602 = vmul.f32 %v600, %v600
        %v603 = vmul.f32 %v601, %v601
        %v604 = vsel %vm590, %v602, 0.0
        %605 = vadd.xlane.f32.xlu0 %v604
        %v606 = vpop.xlane.xlu0 %605
        %v607 = vsel %vm590, %v603, 0.0
        %608 = vadd.xlane.f32.xlu0 %v607
        %v609 = vpop.xlane.xlu0 %608
        %v610 = vmul.f32 %v606, %v597
        %v611 = vmul.f32 %v609, %v597
        %v612 = vadd.f32 %v610, 1e-05
        %v613 = vadd.f32 %v611, 1e-05
        %v614 = vrsqrt.pop %v612
        %v615 = vrsqrt.pop %v613
        %v616 = vmul.f32 %v600, %v614
        %v617 = vmul.f32 %v601, %v615
        %v618 = vlaneseq
        %v619 = vshrl.u32 %v618, 7
        %v620 = vsub.s32 0, %v619
        %v621 = vrot.slane %v584, %v620
        %v622 = vmul.f32 %v616, %v621
        %v623 = vmul.f32 %v617, %v621
        %v624 = vlaneseq
        %v625 = vshrl.u32 %v624, 7
        %v626 = vsub.s32 1, %v625
        %v627 = vrot.slane %v584, %v626
        %v628 = vadd.f32 %v622, %v627
        %v629 = vadd.f32 %v623, %v627
        %v630 = vpack.c.bf16 %v629, %v628
        %s631 = smul.u32 %s38, 48
        %s632 = smul.addr %s631, 4
        %s633 = scalar_lea.vmem %s1, %s632
        %v634 = vld [vmem:[%s633] sm:$0xf]
        %v635 = vld [vmem:[%s633 + $0x4] sm:$0xf]
        %v636 = vld [vmem:[%s633 + $0x8] sm:$0xf]
        %v637 = vld [vmem:[%s633 + $0xc] sm:$0xf]
        %v642 = vunpack.c.l.b16 %v634
        %v643 = vunpack.c.l.b16 %v635
        %v644 = vunpack.c.l.b16 %v636
        %v645 = vunpack.c.l.b16 %v637
        %v646 = vpack.c.b16 %v643, %v642
        %v647 = vpack.c.b16 %v645, %v644
        %v651 = vsel %vm590, %v630, 0
        %653 = vmatprep.subr.bf16.mxu0 0
        %654 = vmatpush1.bf16.msra.mxu0 %v646
        %655 = vmatprep.subr.bf16.mxu0 0
        %656 = vmatpush1.bf16.msra.mxu0 %v647
        %657 = vmatprep.subr.bf16.mxu0 0
        %658 = vmatpush1.bf16.msra.mxu0 0
        %659 = vmatprep.subr.bf16.mxu0 0
        %660 = vmatpush1.bf16.msra.mxu0 0
        %661 = vmatprep.subr.bf16.mxu0 0
        %662 = vmatpush1.bf16.msra.mxu0 0
        %663 = vmatprep.subr.bf16.mxu0 0
        %664 = vmatpush1.bf16.msra.mxu0 0
        %665 = vmatprep.subr.bf16.mxu0 0
        %666 = vmatpush1.bf16.msra.mxu0 0
        %667 = vmatprep.subr.bf16.mxu0 0
        %668 = vmatpush1.bf16.msra.mxu0 0
        %669 = vmatprep.subr.bf16.mxu0 0
        %670 = vmatpush1.bf16.msra.mxu0 0
        %671 = vmatprep.subr.bf16.mxu0 0
        %672 = vmatpush1.bf16.msra.mxu0 0
        %673 = vmatprep.subr.bf16.mxu0 0
        %674 = vmatpush1.bf16.msra.mxu0 0
        %675 = vmatprep.subr.bf16.mxu0 0
        %676 = vmatpush1.bf16.msra.mxu0 0
        %677 = vmatprep.subr.bf16.mxu0 0
        %678 = vmatpush1.bf16.msra.mxu0 0
        %679 = vmatprep.subr.bf16.mxu0 0
        %680 = vmatpush1.bf16.msra.mxu0 0
        %681 = vmatprep.subr.bf16.mxu0 0
        %682 = vmatpush1.bf16.msra.mxu0 0
        %683 = vmatprep.subr.bf16.mxu0 0
        %684 = vmatpush1.bf16.msra.mxu0 0
        %685 = vmatprep.mubr.bf16.mxu0 0
        %686 = vmatmul.mubr.bf16.gmra.mrb[0].mxu0 %v651
        %v687 = vpop.f32.mrb[0].mxu0
        %v688 = vadd.f32 0.0, %v687
        %v689 = vpop.f32.mrb[0].mxu0
        %v690 = vpop.f32.mrb[0].mxu0
        %v691 = vadd.f32 0.0, %v690
        %v692 = vpop.f32.mrb[0].mxu0
        %693 = vdwg.mxu0
        %s694 = sadd.s32 16, %s631
        %s695 = smul.addr %s694, 4
        %s696 = scalar_lea.vmem %s1, %s695
        %v697 = vld [vmem:[%s696] sm:$0xf]
        %v698 = vld [vmem:[%s696 + $0x4] sm:$0xf]
        %v699 = vld [vmem:[%s696 + $0x8] sm:$0xf]
        %v700 = vld [vmem:[%s696 + $0xc] sm:$0xf]
        %v705 = vunpack.c.l.b16 %v697
        %v706 = vunpack.c.l.b16 %v698
        %v707 = vunpack.c.l.b16 %v699
        %v708 = vunpack.c.l.b16 %v700
        %v709 = vpack.c.b16 %v706, %v705
        %v710 = vpack.c.b16 %v708, %v707
        %713 = vmatprep.subr.bf16.mxu0 0
        %714 = vmatpush1.bf16.msra.mxu0 %v709
        %715 = vmatprep.subr.bf16.mxu0 0
        %716 = vmatpush1.bf16.msra.mxu0 %v710
        %717 = vmatprep.subr.bf16.mxu0 0
        %718 = vmatpush1.bf16.msra.mxu0 0
        %719 = vmatprep.subr.bf16.mxu0 0
        %720 = vmatpush1.bf16.msra.mxu0 0
        %721 = vmatprep.subr.bf16.mxu0 0
        %722 = vmatpush1.bf16.msra.mxu0 0
        %723 = vmatprep.subr.bf16.mxu0 0
        %724 = vmatpush1.bf16.msra.mxu0 0
        %725 = vmatprep.subr.bf16.mxu0 0
        %726 = vmatpush1.bf16.msra.mxu0 0
        %727 = vmatprep.subr.bf16.mxu0 0
        %728 = vmatpush1.bf16.msra.mxu0 0
        %729 = vmatprep.subr.bf16.mxu0 0
        %730 = vmatpush1.bf16.msra.mxu0 0
        %731 = vmatprep.subr.bf16.mxu0 0
        %732 = vmatpush1.bf16.msra.mxu0 0
        %733 = vmatprep.subr.bf16.mxu0 0
        %734 = vmatpush1.bf16.msra.mxu0 0
        %735 = vmatprep.subr.bf16.mxu0 0
        %736 = vmatpush1.bf16.msra.mxu0 0
        %737 = vmatprep.subr.bf16.mxu0 0
        %738 = vmatpush1.bf16.msra.mxu0 0
        %739 = vmatprep.subr.bf16.mxu0 0
        %740 = vmatpush1.bf16.msra.mxu0 0
        %741 = vmatprep.subr.bf16.mxu0 0
        %742 = vmatpush1.bf16.msra.mxu0 0
        %743 = vmatprep.subr.bf16.mxu0 0
        %744 = vmatpush1.bf16.msra.mxu0 0
        %745 = vmatprep.mubr.bf16.mxu0 0
        %746 = vmatmul.mubr.bf16.gmra.mrb[0].mxu0 %v651
        %v747 = vpop.f32.mrb[0].mxu0
        %v748 = vadd.f32 0.0, %v747
        %v749 = vpop.f32.mrb[0].mxu0
        %v750 = vpop.f32.mrb[0].mxu0
        %v751 = vadd.f32 0.0, %v750
        %v752 = vpop.f32.mrb[0].mxu0
        %753 = vdwg.mxu0
        %s754 = sadd.s32 32, %s631
        %s755 = smul.addr %s754, 4
        %s756 = scalar_lea.vmem %s1, %s755
        %v757 = vld [vmem:[%s756] sm:$0xf]
        %v758 = vld [vmem:[%s756 + $0x4] sm:$0xf]
        %v759 = vld [vmem:[%s756 + $0x8] sm:$0xf]
        %v760 = vld [vmem:[%s756 + $0xc] sm:$0xf]
        %v765 = vunpack.c.l.b16 %v757
        %v766 = vunpack.c.l.b16 %v758
        %v767 = vunpack.c.l.b16 %v759
        %v768 = vunpack.c.l.b16 %v760
        %v769 = vpack.c.b16 %v766, %v765
        %v770 = vpack.c.b16 %v768, %v767
        %773 = vmatprep.subr.bf16.mxu0 0
        %774 = vmatpush1.bf16.msra.mxu0 %v769
        %775 = vmatprep.subr.bf16.mxu0 0
        %776 = vmatpush1.bf16.msra.mxu0 %v770
        %777 = vmatprep.subr.bf16.mxu0 0
        %778 = vmatpush1.bf16.msra.mxu0 0
        %779 = vmatprep.subr.bf16.mxu0 0
        %780 = vmatpush1.bf16.msra.mxu0 0
        %781 = vmatprep.subr.bf16.mxu0 0
        %782 = vmatpush1.bf16.msra.mxu0 0
        %783 = vmatprep.subr.bf16.mxu0 0
        %784 = vmatpush1.bf16.msra.mxu0 0
        %785 = vmatprep.subr.bf16.mxu0 0
        %786 = vmatpush1.bf16.msra.mxu0 0
        %787 = vmatprep.subr.bf16.mxu0 0
        %788 = vmatpush1.bf16.msra.mxu0 0
        %789 = vmatprep.subr.bf16.mxu0 0
        %790 = vmatpush1.bf16.msra.mxu0 0
        %791 = vmatprep.subr.bf16.mxu0 0
        %792 = vmatpush1.bf16.msra.mxu0 0
        %793 = vmatprep.subr.bf16.mxu0 0
        %794 = vmatpush1.bf16.msra.mxu0 0
        %795 = vmatprep.subr.bf16.mxu0 0
        %796 = vmatpush1.bf16.msra.mxu0 0
        %797 = vmatprep.subr.bf16.mxu0 0
        %798 = vmatpush1.bf16.msra.mxu0 0
        %799 = vmatprep.subr.bf16.mxu0 0
        %800 = vmatpush1.bf16.msra.mxu0 0
        %801 = vmatprep.subr.bf16.mxu0 0
        %802 = vmatpush1.bf16.msra.mxu0 0
        %803 = vmatprep.subr.bf16.mxu0 0
        %804 = vmatpush1.bf16.msra.mxu0 0
        %805 = vmatprep.mubr.bf16.mxu0 0
        %806 = vmatmul.mubr.bf16.gmra.mrb[0].mxu0 %v651
        %v807 = vpop.f32.mrb[0].mxu0
        %v808 = vadd.f32 0.0, %v807
        %v809 = vpop.f32.mrb[0].mxu0
        %v810 = vpop.f32.mrb[0].mxu0
        %v811 = vadd.f32 0.0, %v810
        %v812 = vpop.f32.mrb[0].mxu0
        %813 = vdwg.mxu0
        %v814 = vpack.c.bf16 %v691, %v688
        %v816 = vunpack.c.l.b16 %v814
        %v817 = vunpack.c.h.b16 %v814
        %v818 = vpack.c.b16 %v816, %v816
        %v819 = vpack.c.b16 %v817, %v817
        %v820 = vpack.c.bf16 %v751, %v748
        %v822 = vunpack.c.l.b16 %v820
        %v823 = vunpack.c.h.b16 %v820
        %v824 = vpack.c.b16 %v822, %v822
        %v825 = vpack.c.b16 %v823, %v823
        %v826 = vpack.c.bf16 %v811, %v808
        %v828 = vunpack.c.l.b16 %v826
        %v829 = vunpack.c.h.b16 %v826
        %v830 = vpack.c.b16 %v828, %v828
        %v831 = vpack.c.b16 %v829, %v829
        %vm832 = vcmask 523264
        %v834 = vsel %vm832, %v818, 0
        %v837 = vsel %vm832, %v824, 0
        %839 = vmatprep.subr.bf16.mxu0 0
        %840 = vmatpush1.bf16.xpose.msra.mxu0 %v837
        %841 = vmatprep.subr.bf16.mxu0 0
        %842 = vmatpush1.bf16.xpose.msra.mxu0 0
        %843 = vmatprep.subr.bf16.mxu0 0
        %844 = vmatpush1.bf16.xpose.msra.mxu0 0
        %845 = vmatprep.subr.bf16.mxu0 0
        %846 = vmatpush1.bf16.xpose.msra.mxu0 0
        %847 = vmatprep.subr.bf16.mxu0 0
        %848 = vmatpush1.bf16.xpose.msra.mxu0 0
        %849 = vmatprep.subr.bf16.mxu0 0
        %850 = vmatpush1.bf16.xpose.msra.mxu0 0
        %851 = vmatprep.subr.bf16.mxu0 0
        %852 = vmatpush1.bf16.xpose.msra.mxu0 0
        %853 = vmatprep.subr.bf16.mxu0 0
        %854 = vmatpush1.bf16.xpose.msra.mxu0 0
        %855 = vmatprep.subr.bf16.mxu0 0
        %856 = vmatpush1.bf16.xpose.msra.mxu0 0
        %857 = vmatprep.subr.bf16.mxu0 0
        %858 = vmatpush1.bf16.xpose.msra.mxu0 0
        %859 = vmatprep.subr.bf16.mxu0 0
        %860 = vmatpush1.bf16.xpose.msra.mxu0 0
        %861 = vmatprep.subr.bf16.mxu0 0
        %862 = vmatpush1.bf16.xpose.msra.mxu0 0
        %863 = vmatprep.subr.bf16.mxu0 0
        %864 = vmatpush1.bf16.xpose.msra.mxu0 0
        %865 = vmatprep.subr.bf16.mxu0 0
        %866 = vmatpush1.bf16.xpose.msra.mxu0 0
        %867 = vmatprep.subr.bf16.mxu0 0
        %868 = vmatpush1.bf16.xpose.msra.mxu0 0
        %869 = vmatprep.subr.bf16.mxu0 0
        %870 = vmatpush1.bf16.xpose.msra.mxu0 0
        %871 = vmatprep.mubr.bf16.mxu0 0
        %872 = vmatmul.mubr.bf16.gmra.mrb[0].mxu0 %v834
        %v873 = vpop.f32.mrb[0].mxu0
        %v874 = vadd.f32 0.0, %v873
        %v875 = vpop.f32.mrb[0].mxu0
        %v876 = vpop.f32.mrb[0].mxu0
        %v877 = vpop.f32.mrb[0].mxu0
        %878 = vdwg.mxu0
        %v880 = vsel %vm832, %v819, 0
        %v883 = vsel %vm832, %v825, 0
        %885 = vmatprep.subr.bf16.mxu0 0
        %886 = vmatpush1.bf16.xpose.msra.mxu0 %v883
        %887 = vmatprep.subr.bf16.mxu0 0
        %888 = vmatpush1.bf16.xpose.msra.mxu0 0
        %889 = vmatprep.subr.bf16.mxu0 0
        %890 = vmatpush1.bf16.xpose.msra.mxu0 0
        %891 = vmatprep.subr.bf16.mxu0 0
        %892 = vmatpush1.bf16.xpose.msra.mxu0 0
        %893 = vmatprep.subr.bf16.mxu0 0
        %894 = vmatpush1.bf16.xpose.msra.mxu0 0
        %895 = vmatprep.subr.bf16.mxu0 0
        %896 = vmatpush1.bf16.xpose.msra.mxu0 0
        %897 = vmatprep.subr.bf16.mxu0 0
        %898 = vmatpush1.bf16.xpose.msra.mxu0 0
        %899 = vmatprep.subr.bf16.mxu0 0
        %900 = vmatpush1.bf16.xpose.msra.mxu0 0
        %901 = vmatprep.subr.bf16.mxu0 0
        %902 = vmatpush1.bf16.xpose.msra.mxu0 0
        %903 = vmatprep.subr.bf16.mxu0 0
        %904 = vmatpush1.bf16.xpose.msra.mxu0 0
        %905 = vmatprep.subr.bf16.mxu0 0
        %906 = vmatpush1.bf16.xpose.msra.mxu0 0
        %907 = vmatprep.subr.bf16.mxu0 0
        %908 = vmatpush1.bf16.xpose.msra.mxu0 0
        %909 = vmatprep.subr.bf16.mxu0 0
        %910 = vmatpush1.bf16.xpose.msra.mxu0 0
        %911 = vmatprep.subr.bf16.mxu0 0
        %912 = vmatpush1.bf16.xpose.msra.mxu0 0
        %913 = vmatprep.subr.bf16.mxu0 0
        %914 = vmatpush1.bf16.xpose.msra.mxu0 0
        %915 = vmatprep.subr.bf16.mxu0 0
        %916 = vmatpush1.bf16.xpose.msra.mxu0 0
        %917 = vmatprep.mubr.bf16.mxu0 0
        %918 = vmatmul.mubr.bf16.gmra.mrb[0].mxu0 %v880
        %v919 = vpop.f32.mrb[0].mxu0
        %v920 = vadd.f32 0.0, %v919
        %v921 = vpop.f32.mrb[0].mxu0
        %v922 = vpop.f32.mrb[0].mxu0
        %v923 = vpop.f32.mrb[0].mxu0
        %924 = vdwg.mxu0
        %vm925 = vcmask 64512
        %v926 = vsel %vm925, %v874, -inf
        %927 = vmax.xlane.f32.xlu0 %v926
        %v928 = vpop.xlane.xlu0 %927
        %v929 = vsel %vm925, %v920, -inf
        %930 = vmax.xlane.f32.xlu0 %v929
        %v931 = vpop.xlane.xlu0 %930
        %v932 = vsub.f32 %v874, %v928
        %v933 = vsub.f32 %v920, %v931
        %v934 = vmul.f32 %v932, 1.442695
        %v935 = vpow.pop %v934
        %v936 = vmul.f32 %v933, 1.442695
        %v937 = vpow.pop %v936
        %v938 = vsel %vm925, %v935, 0.0
        %939 = vadd.xlane.f32.xlu0 %v938
        %v940 = vpop.xlane.xlu0 %939
        %v941 = vsel %vm925, %v937, 0.0
        %942 = vadd.xlane.f32.xlu0 %v941
        %v943 = vpop.xlane.xlu0 %942
        %v944 = vrcp.pop %v940
        %v945 = vrcp.pop %v943
        %v946 = vmul.f32 %v935, %v944
        %v947 = vmul.f32 %v937, %v945
        %v948 = vpack.c.bf16 %v946, %v946
        %v949 = vpack.c.bf16 %v947, %v947
        %v951 = vsel %vm925, %v948, 0
        %vm953 = vcmask 1043456
        %v955 = vsel %vm953, %v830, 0
        %957 = vmatprep.subr.bf16.mxu0 0
        %958 = vmatpush1.bf16.msra.mxu0 %v955
        %959 = vmatprep.subr.bf16.mxu0 0
        %960 = vmatpush1.bf16.msra.mxu0 0
        %961 = vmatprep.subr.bf16.mxu0 0
        %962 = vmatpush1.bf16.msra.mxu0 0
        %963 = vmatprep.subr.bf16.mxu0 0
        %964 = vmatpush1.bf16.msra.mxu0 0
        %965 = vmatprep.subr.bf16.mxu0 0
        %966 = vmatpush1.bf16.msra.mxu0 0
        %967 = vmatprep.subr.bf16.mxu0 0
        %968 = vmatpush1.bf16.msra.mxu0 0
        %969 = vmatprep.subr.bf16.mxu0 0
        %970 = vmatpush1.bf16.msra.mxu0 0
        %971 = vmatprep.subr.bf16.mxu0 0
        %972 = vmatpush1.bf16.msra.mxu0 0
        %973 = vmatprep.subr.bf16.mxu0 0
        %974 = vmatpush1.bf16.msra.mxu0 0
        %975 = vmatprep.subr.bf16.mxu0 0
        %976 = vmatpush1.bf16.msra.mxu0 0
        %977 = vmatprep.subr.bf16.mxu0 0
        %978 = vmatpush1.bf16.msra.mxu0 0
        %979 = vmatprep.subr.bf16.mxu0 0
        %980 = vmatpush1.bf16.msra.mxu0 0
        %981 = vmatprep.subr.bf16.mxu0 0
        %982 = vmatpush1.bf16.msra.mxu0 0
        %983 = vmatprep.subr.bf16.mxu0 0
        %984 = vmatpush1.bf16.msra.mxu0 0
        %985 = vmatprep.subr.bf16.mxu0 0
        %986 = vmatpush1.bf16.msra.mxu0 0
        %987 = vmatprep.subr.bf16.mxu0 0
        %988 = vmatpush1.bf16.msra.mxu0 0
        %989 = vmatprep.mubr.bf16.mxu0 0
        %990 = vmatmul.mubr.bf16.gmra.mrb[0].mxu0 %v951
        %v991 = vpop.f32.mrb[0].mxu0
        %v992 = vadd.f32 0.0, %v991
        %v993 = vpop.f32.mrb[0].mxu0
        %v994 = vpop.f32.mrb[0].mxu0
        %v995 = vpop.f32.mrb[0].mxu0
        %996 = vdwg.mxu0
        %v998 = vsel %vm925, %v949, 0
        %v1001 = vsel %vm953, %v831, 0
        %1003 = vmatprep.subr.bf16.mxu0 0
        %1004 = vmatpush1.bf16.msra.mxu0 %v1001
        %1005 = vmatprep.subr.bf16.mxu0 0
        %1006 = vmatpush1.bf16.msra.mxu0 0
        %1007 = vmatprep.subr.bf16.mxu0 0
        %1008 = vmatpush1.bf16.msra.mxu0 0
        %1009 = vmatprep.subr.bf16.mxu0 0
        %1010 = vmatpush1.bf16.msra.mxu0 0
        %1011 = vmatprep.subr.bf16.mxu0 0
        %1012 = vmatpush1.bf16.msra.mxu0 0
        %1013 = vmatprep.subr.bf16.mxu0 0
        %1014 = vmatpush1.bf16.msra.mxu0 0
        %1015 = vmatprep.subr.bf16.mxu0 0
        %1016 = vmatpush1.bf16.msra.mxu0 0
        %1017 = vmatprep.subr.bf16.mxu0 0
        %1018 = vmatpush1.bf16.msra.mxu0 0
        %1019 = vmatprep.subr.bf16.mxu0 0
        %1020 = vmatpush1.bf16.msra.mxu0 0
        %1021 = vmatprep.subr.bf16.mxu0 0
        %1022 = vmatpush1.bf16.msra.mxu0 0
        %1023 = vmatprep.subr.bf16.mxu0 0
        %1024 = vmatpush1.bf16.msra.mxu0 0
        %1025 = vmatprep.subr.bf16.mxu0 0
        %1026 = vmatpush1.bf16.msra.mxu0 0
        %1027 = vmatprep.subr.bf16.mxu0 0
        %1028 = vmatpush1.bf16.msra.mxu0 0
        %1029 = vmatprep.subr.bf16.mxu0 0
        %1030 = vmatpush1.bf16.msra.mxu0 0
        %1031 = vmatprep.subr.bf16.mxu0 0
        %1032 = vmatpush1.bf16.msra.mxu0 0
        %1033 = vmatprep.subr.bf16.mxu0 0
        %1034 = vmatpush1.bf16.msra.mxu0 0
        %1035 = vmatprep.mubr.bf16.mxu0 0
        %1036 = vmatmul.mubr.bf16.gmra.mrb[0].mxu0 %v998
        %v1037 = vpop.f32.mrb[0].mxu0
        %v1038 = vadd.f32 0.0, %v1037
        %v1039 = vpop.f32.mrb[0].mxu0
        %v1040 = vpop.f32.mrb[0].mxu0
        %v1041 = vpop.f32.mrb[0].mxu0
        %1042 = vdwg.mxu0
        %v1043 = vpack.c.bf16 %v1038, %v992
        %s1044 = smul.u32 %s38, 32
        %s1045 = smul.addr %s1044, 4
        %s1046 = scalar_lea.vmem %s2, %s1045
        %v1047 = vld [vmem:[%s1046] sm:$0xf]
        %v1048 = vld [vmem:[%s1046 + $0x4] sm:$0xf]
        %v1049 = vld [vmem:[%s1046 + $0x8] sm:$0xf]
        %v1050 = vld [vmem:[%s1046 + $0xc] sm:$0xf]
        %v1051 = vld [vmem:[%s1046 + $0x10] sm:$0xf]
        %v1052 = vld [vmem:[%s1046 + $0x14] sm:$0xf]
        %v1053 = vld [vmem:[%s1046 + $0x18] sm:$0xf]
        %v1054 = vld [vmem:[%s1046 + $0x1c] sm:$0xf]
        %s1055 = sadd.s32 4, %s631
        %s1056 = smul.addr %s1055, 4
        %s1057 = scalar_lea.vmem %s1, %s1056
        %v1058 = vld [vmem:[%s1057] sm:$0xf]
        %v1059 = vld [vmem:[%s1057 + $0x4] sm:$0xf]
        %v1060 = vld [vmem:[%s1057 + $0x8] sm:$0xf]
        %v1061 = vld [vmem:[%s1057 + $0xc] sm:$0xf]
        %v1066 = vunpack.c.l.b16 %v1058
        %v1067 = vunpack.c.l.b16 %v1059
        %v1068 = vunpack.c.l.b16 %v1060
        %v1069 = vunpack.c.l.b16 %v1061
        %v1070 = vpack.c.b16 %v1067, %v1066
        %v1071 = vpack.c.b16 %v1069, %v1068
        %1074 = vmatprep.subr.bf16.mxu0 0
        %1075 = vmatpush1.bf16.msra.mxu0 %v1070
        %1076 = vmatprep.subr.bf16.mxu0 0
        %1077 = vmatpush1.bf16.msra.mxu0 %v1071
        %1078 = vmatprep.subr.bf16.mxu0 0
        %1079 = vmatpush1.bf16.msra.mxu0 0
        %1080 = vmatprep.subr.bf16.mxu0 0
        %1081 = vmatpush1.bf16.msra.mxu0 0
        %1082 = vmatprep.subr.bf16.mxu0 0
        %1083 = vmatpush1.bf16.msra.mxu0 0
        %1084 = vmatprep.subr.bf16.mxu0 0
        %1085 = vmatpush1.bf16.msra.mxu0 0
        %1086 = vmatprep.subr.bf16.mxu0 0
        %1087 = vmatpush1.bf16.msra.mxu0 0
        %1088 = vmatprep.subr.bf16.mxu0 0
        %1089 = vmatpush1.bf16.msra.mxu0 0
        %1090 = vmatprep.subr.bf16.mxu0 0
        %1091 = vmatpush1.bf16.msra.mxu0 0
        %1092 = vmatprep.subr.bf16.mxu0 0
        %1093 = vmatpush1.bf16.msra.mxu0 0
        %1094 = vmatprep.subr.bf16.mxu0 0
        %1095 = vmatpush1.bf16.msra.mxu0 0
        %1096 = vmatprep.subr.bf16.mxu0 0
        %1097 = vmatpush1.bf16.msra.mxu0 0
        %1098 = vmatprep.subr.bf16.mxu0 0
        %1099 = vmatpush1.bf16.msra.mxu0 0
        %1100 = vmatprep.subr.bf16.mxu0 0
        %1101 = vmatpush1.bf16.msra.mxu0 0
        %1102 = vmatprep.subr.bf16.mxu0 0
        %1103 = vmatpush1.bf16.msra.mxu0 0
        %1104 = vmatprep.subr.bf16.mxu0 0
        %1105 = vmatpush1.bf16.msra.mxu0 0
        %1106 = vmatprep.mubr.bf16.mxu0 0
        %1107 = vmatmul.mubr.bf16.gmra.mrb[0].mxu0 %v651
        %v1108 = vpop.f32.mrb[0].mxu0
        %v1109 = vadd.f32 0.0, %v1108
        %v1110 = vpop.f32.mrb[0].mxu0
        %v1111 = vpop.f32.mrb[0].mxu0
        %v1112 = vadd.f32 0.0, %v1111
        %v1113 = vpop.f32.mrb[0].mxu0
        %1114 = vdwg.mxu0
        %s1115 = sadd.s32 20, %s631
        %s1116 = smul.addr %s1115, 4
        %s1117 = scalar_lea.vmem %s1, %s1116
        %v1118 = vld [vmem:[%s1117] sm:$0xf]
        %v1119 = vld [vmem:[%s1117 + $0x4] sm:$0xf]
        %v1120 = vld [vmem:[%s1117 + $0x8] sm:$0xf]
        %v1121 = vld [vmem:[%s1117 + $0xc] sm:$0xf]
        %v1126 = vunpack.c.l.b16 %v1118
        %v1127 = vunpack.c.l.b16 %v1119
        %v1128 = vunpack.c.l.b16 %v1120
        %v1129 = vunpack.c.l.b16 %v1121
        %v1130 = vpack.c.b16 %v1127, %v1126
        %v1131 = vpack.c.b16 %v1129, %v1128
        %1134 = vmatprep.subr.bf16.mxu0 0
        %1135 = vmatpush1.bf16.msra.mxu0 %v1130
        %1136 = vmatprep.subr.bf16.mxu0 0
        %1137 = vmatpush1.bf16.msra.mxu0 %v1131
        %1138 = vmatprep.subr.bf16.mxu0 0
        %1139 = vmatpush1.bf16.msra.mxu0 0
        %1140 = vmatprep.subr.bf16.mxu0 0
        %1141 = vmatpush1.bf16.msra.mxu0 0
        %1142 = vmatprep.subr.bf16.mxu0 0
        %1143 = vmatpush1.bf16.msra.mxu0 0
        %1144 = vmatprep.subr.bf16.mxu0 0
        %1145 = vmatpush1.bf16.msra.mxu0 0
        %1146 = vmatprep.subr.bf16.mxu0 0
        %1147 = vmatpush1.bf16.msra.mxu0 0
        %1148 = vmatprep.subr.bf16.mxu0 0
        %1149 = vmatpush1.bf16.msra.mxu0 0
        %1150 = vmatprep.subr.bf16.mxu0 0
        %1151 = vmatpush1.bf16.msra.mxu0 0
        %1152 = vmatprep.subr.bf16.mxu0 0
        %1153 = vmatpush1.bf16.msra.mxu0 0
        %1154 = vmatprep.subr.bf16.mxu0 0
        %1155 = vmatpush1.bf16.msra.mxu0 0
        %1156 = vmatprep.subr.bf16.mxu0 0
        %1157 = vmatpush1.bf16.msra.mxu0 0
        %1158 = vmatprep.subr.bf16.mxu0 0
        %1159 = vmatpush1.bf16.msra.mxu0 0
        %1160 = vmatprep.subr.bf16.mxu0 0
        %1161 = vmatpush1.bf16.msra.mxu0 0
        %1162 = vmatprep.subr.bf16.mxu0 0
        %1163 = vmatpush1.bf16.msra.mxu0 0
        %1164 = vmatprep.subr.bf16.mxu0 0
        %1165 = vmatpush1.bf16.msra.mxu0 0
        %1166 = vmatprep.mubr.bf16.mxu0 0
        %1167 = vmatmul.mubr.bf16.gmra.mrb[0].mxu0 %v651
        %v1168 = vpop.f32.mrb[0].mxu0
        %v1169 = vadd.f32 0.0, %v1168
        %v1170 = vpop.f32.mrb[0].mxu0
        %v1171 = vpop.f32.mrb[0].mxu0
        %v1172 = vadd.f32 0.0, %v1171
        %v1173 = vpop.f32.mrb[0].mxu0
        %1174 = vdwg.mxu0
        %s1175 = sadd.s32 36, %s631
        %s1176 = smul.addr %s1175, 4
        %s1177 = scalar_lea.vmem %s1, %s1176
        %v1178 = vld [vmem:[%s1177] sm:$0xf]
        %v1179 = vld [vmem:[%s1177 + $0x4] sm:$0xf]
        %v1180 = vld [vmem:[%s1177 + $0x8] sm:$0xf]
        %v1181 = vld [vmem:[%s1177 + $0xc] sm:$0xf]
        %v1186 = vunpack.c.l.b16 %v1178
        %v1187 = vunpack.c.l.b16 %v1179
        %v1188 = vunpack.c.l.b16 %v1180
        %v1189 = vunpack.c.l.b16 %v1181
        %v1190 = vpack.c.b16 %v1187, %v1186
        %v1191 = vpack.c.b16 %v1189, %v1188
        %1194 = vmatprep.subr.bf16.mxu0 0
        %1195 = vmatpush1.bf16.msra.mxu0 %v1190
        %1196 = vmatprep.subr.bf16.mxu0 0
        %1197 = vmatpush1.bf16.msra.mxu0 %v1191
        %1198 = vmatprep.subr.bf16.mxu0 0
        %1199 = vmatpush1.bf16.msra.mxu0 0
        %1200 = vmatprep.subr.bf16.mxu0 0
        %1201 = vmatpush1.bf16.msra.mxu0 0
        %1202 = vmatprep.subr.bf16.mxu0 0
        %1203 = vmatpush1.bf16.msra.mxu0 0
        %1204 = vmatprep.subr.bf16.mxu0 0
        %1205 = vmatpush1.bf16.msra.mxu0 0
        %1206 = vmatprep.subr.bf16.mxu0 0
        %1207 = vmatpush1.bf16.msra.mxu0 0
        %1208 = vmatprep.subr.bf16.mxu0 0
        %1209 = vmatpush1.bf16.msra.mxu0 0
        %1210 = vmatprep.subr.bf16.mxu0 0
        %1211 = vmatpush1.bf16.msra.mxu0 0
        %1212 = vmatprep.subr.bf16.mxu0 0
        %1213 = vmatpush1.bf16.msra.mxu0 0
        %1214 = vmatprep.subr.bf16.mxu0 0
        %1215 = vmatpush1.bf16.msra.mxu0 0
        %1216 = vmatprep.subr.bf16.mxu0 0
        %1217 = vmatpush1.bf16.msra.mxu0 0
        %1218 = vmatprep.subr.bf16.mxu0 0
        %1219 = vmatpush1.bf16.msra.mxu0 0
        %1220 = vmatprep.subr.bf16.mxu0 0
        %1221 = vmatpush1.bf16.msra.mxu0 0
        %1222 = vmatprep.subr.bf16.mxu0 0
        %1223 = vmatpush1.bf16.msra.mxu0 0
        %1224 = vmatprep.subr.bf16.mxu0 0
        %1225 = vmatpush1.bf16.msra.mxu0 0
        %1226 = vmatprep.mubr.bf16.mxu0 0
        %1227 = vmatmul.mubr.bf16.gmra.mrb[0].mxu0 %v651
        %v1228 = vpop.f32.mrb[0].mxu0
        %v1229 = vadd.f32 0.0, %v1228
        %v1230 = vpop.f32.mrb[0].mxu0
        %v1231 = vpop.f32.mrb[0].mxu0
        %v1232 = vadd.f32 0.0, %v1231
        %v1233 = vpop.f32.mrb[0].mxu0
        %1234 = vdwg.mxu0
        %v1235 = vpack.c.bf16 %v1112, %v1109
        %v1237 = vunpack.c.l.b16 %v1235
        %v1238 = vunpack.c.h.b16 %v1235
        %v1239 = vpack.c.b16 %v1237, %v1237
        %v1240 = vpack.c.b16 %v1238, %v1238
        %v1241 = vpack.c.bf16 %v1172, %v1169
        %v1243 = vunpack.c.l.b16 %v1241
        %v1244 = vunpack.c.h.b16 %v1241
        %v1245 = vpack.c.b16 %v1243, %v1243
        %v1246 = vpack.c.b16 %v1244, %v1244
        %v1247 = vpack.c.bf16 %v1232, %v1229
        %v1249 = vunpack.c.l.b16 %v1247
        %v1250 = vunpack.c.h.b16 %v1247
        %v1251 = vpack.c.b16 %v1249, %v1249
        %v1252 = vpack.c.b16 %v1250, %v1250
        %v1254 = vsel %vm832, %v1239, 0
        %v1257 = vsel %vm832, %v1245, 0
        %1259 = vmatprep.subr.bf16.mxu0 0
        %1260 = vmatpush1.bf16.xpose.msra.mxu0 %v1257
        %1261 = vmatprep.subr.bf16.mxu0 0
        %1262 = vmatpush1.bf16.xpose.msra.mxu0 0
        %1263 = vmatprep.subr.bf16.mxu0 0
        %1264 = vmatpush1.bf16.xpose.msra.mxu0 0
        %1265 = vmatprep.subr.bf16.mxu0 0
        %1266 = vmatpush1.bf16.xpose.msra.mxu0 0
        %1267 = vmatprep.subr.bf16.mxu0 0
        %1268 = vmatpush1.bf16.xpose.msra.mxu0 0
        %1269 = vmatprep.subr.bf16.mxu0 0
        %1270 = vmatpush1.bf16.xpose.msra.mxu0 0
        %1271 = vmatprep.subr.bf16.mxu0 0
        %1272 = vmatpush1.bf16.xpose.msra.mxu0 0
        %1273 = vmatprep.subr.bf16.mxu0 0
        %1274 = vmatpush1.bf16.xpose.msra.mxu0 0
        %1275 = vmatprep.subr.bf16.mxu0 0
        %1276 = vmatpush1.bf16.xpose.msra.mxu0 0
        %1277 = vmatprep.subr.bf16.mxu0 0
        %1278 = vmatpush1.bf16.xpose.msra.mxu0 0
        %1279 = vmatprep.subr.bf16.mxu0 0
        %1280 = vmatpush1.bf16.xpose.msra.mxu0 0
        %1281 = vmatprep.subr.bf16.mxu0 0
        %1282 = vmatpush1.bf16.xpose.msra.mxu0 0
        %1283 = vmatprep.subr.bf16.mxu0 0
        %1284 = vmatpush1.bf16.xpose.msra.mxu0 0
        %1285 = vmatprep.subr.bf16.mxu0 0
        %1286 = vmatpush1.bf16.xpose.msra.mxu0 0
        %1287 = vmatprep.subr.bf16.mxu0 0
        %1288 = vmatpush1.bf16.xpose.msra.mxu0 0
        %1289 = vmatprep.subr.bf16.mxu0 0
        %1290 = vmatpush1.bf16.xpose.msra.mxu0 0
        %1291 = vmatprep.mubr.bf16.mxu0 0
        %1292 = vmatmul.mubr.bf16.gmra.mrb[0].mxu0 %v1254
        %v1293 = vpop.f32.mrb[0].mxu0
        %v1294 = vadd.f32 0.0, %v1293
        %v1295 = vpop.f32.mrb[0].mxu0
        %v1296 = vpop.f32.mrb[0].mxu0
        %v1297 = vpop.f32.mrb[0].mxu0
        %1298 = vdwg.mxu0
        %v1300 = vsel %vm832, %v1240, 0
        %v1303 = vsel %vm832, %v1246, 0
        %1305 = vmatprep.subr.bf16.mxu0 0
        %1306 = vmatpush1.bf16.xpose.msra.mxu0 %v1303
        %1307 = vmatprep.subr.bf16.mxu0 0
        %1308 = vmatpush1.bf16.xpose.msra.mxu0 0
        %1309 = vmatprep.subr.bf16.mxu0 0
        %1310 = vmatpush1.bf16.xpose.msra.mxu0 0
        %1311 = vmatprep.subr.bf16.mxu0 0
        %1312 = vmatpush1.bf16.xpose.msra.mxu0 0
        %1313 = vmatprep.subr.bf16.mxu0 0
        %1314 = vmatpush1.bf16.xpose.msra.mxu0 0
        %1315 = vmatprep.subr.bf16.mxu0 0
        %1316 = vmatpush1.bf16.xpose.msra.mxu0 0
        %1317 = vmatprep.subr.bf16.mxu0 0
        %1318 = vmatpush1.bf16.xpose.msra.mxu0 0
        %1319 = vmatprep.subr.bf16.mxu0 0
        %1320 = vmatpush1.bf16.xpose.msra.mxu0 0
        %1321 = vmatprep.subr.bf16.mxu0 0
        %1322 = vmatpush1.bf16.xpose.msra.mxu0 0
        %1323 = vmatprep.subr.bf16.mxu0 0
        %1324 = vmatpush1.bf16.xpose.msra.mxu0 0
        %1325 = vmatprep.subr.bf16.mxu0 0
        %1326 = vmatpush1.bf16.xpose.msra.mxu0 0
        %1327 = vmatprep.subr.bf16.mxu0 0
        %1328 = vmatpush1.bf16.xpose.msra.mxu0 0
        %1329 = vmatprep.subr.bf16.mxu0 0
        %1330 = vmatpush1.bf16.xpose.msra.mxu0 0
        %1331 = vmatprep.subr.bf16.mxu0 0
        %1332 = vmatpush1.bf16.xpose.msra.mxu0 0
        %1333 = vmatprep.subr.bf16.mxu0 0
        %1334 = vmatpush1.bf16.xpose.msra.mxu0 0
        %1335 = vmatprep.subr.bf16.mxu0 0
        %1336 = vmatpush1.bf16.xpose.msra.mxu0 0
        %1337 = vmatprep.mubr.bf16.mxu0 0
        %1338 = vmatmul.mubr.bf16.gmra.mrb[0].mxu0 %v1300
        %v1339 = vpop.f32.mrb[0].mxu0
        %v1340 = vadd.f32 0.0, %v1339
        %v1341 = vpop.f32.mrb[0].mxu0
        %v1342 = vpop.f32.mrb[0].mxu0
        %v1343 = vpop.f32.mrb[0].mxu0
        %1344 = vdwg.mxu0
        %v1345 = vsel %vm925, %v1294, -inf
        %1346 = vmax.xlane.f32.xlu0 %v1345
        %v1347 = vpop.xlane.xlu0 %1346
        %v1348 = vsel %vm925, %v1340, -inf
        %1349 = vmax.xlane.f32.xlu0 %v1348
        %v1350 = vpop.xlane.xlu0 %1349
        %v1351 = vsub.f32 %v1294, %v1347
        %v1352 = vsub.f32 %v1340, %v1350
        %v1353 = vmul.f32 %v1351, 1.442695
        %v1354 = vpow.pop %v1353
        %v1355 = vmul.f32 %v1352, 1.442695
        %v1356 = vpow.pop %v1355
        %v1357 = vsel %vm925, %v1354, 0.0
        %1358 = vadd.xlane.f32.xlu0 %v1357
        %v1359 = vpop.xlane.xlu0 %1358
        %v1360 = vsel %vm925, %v1356, 0.0
        %1361 = vadd.xlane.f32.xlu0 %v1360
        %v1362 = vpop.xlane.xlu0 %1361
        %v1363 = vrcp.pop %v1359
        %v1364 = vrcp.pop %v1362
        %v1365 = vmul.f32 %v1354, %v1363
        %v1366 = vmul.f32 %v1356, %v1364
        %v1367 = vpack.c.bf16 %v1365, %v1365
        %v1368 = vpack.c.bf16 %v1366, %v1366
        %v1370 = vsel %vm925, %v1367, 0
        %v1373 = vsel %vm953, %v1251, 0
        %1375 = vmatprep.subr.bf16.mxu0 0
        %1376 = vmatpush1.bf16.msra.mxu0 %v1373
        %1377 = vmatprep.subr.bf16.mxu0 0
        %1378 = vmatpush1.bf16.msra.mxu0 0
        %1379 = vmatprep.subr.bf16.mxu0 0
        %1380 = vmatpush1.bf16.msra.mxu0 0
        %1381 = vmatprep.subr.bf16.mxu0 0
        %1382 = vmatpush1.bf16.msra.mxu0 0
        %1383 = vmatprep.subr.bf16.mxu0 0
        %1384 = vmatpush1.bf16.msra.mxu0 0
        %1385 = vmatprep.subr.bf16.mxu0 0
        %1386 = vmatpush1.bf16.msra.mxu0 0
        %1387 = vmatprep.subr.bf16.mxu0 0
        %1388 = vmatpush1.bf16.msra.mxu0 0
        %1389 = vmatprep.subr.bf16.mxu0 0
        %1390 = vmatpush1.bf16.msra.mxu0 0
        %1391 = vmatprep.subr.bf16.mxu0 0
        %1392 = vmatpush1.bf16.msra.mxu0 0
        %1393 = vmatprep.subr.bf16.mxu0 0
        %1394 = vmatpush1.bf16.msra.mxu0 0
        %1395 = vmatprep.subr.bf16.mxu0 0
        %1396 = vmatpush1.bf16.msra.mxu0 0
        %1397 = vmatprep.subr.bf16.mxu0 0
        %1398 = vmatpush1.bf16.msra.mxu0 0
        %1399 = vmatprep.subr.bf16.mxu0 0
        %1400 = vmatpush1.bf16.msra.mxu0 0
        %1401 = vmatprep.subr.bf16.mxu0 0
        %1402 = vmatpush1.bf16.msra.mxu0 0
        %1403 = vmatprep.subr.bf16.mxu0 0
        %1404 = vmatpush1.bf16.msra.mxu0 0
        %1405 = vmatprep.subr.bf16.mxu0 0
        %1406 = vmatpush1.bf16.msra.mxu0 0
        %1407 = vmatprep.mubr.bf16.mxu0 0
        %1408 = vmatmul.mubr.bf16.gmra.mrb[0].mxu0 %v1370
        %v1409 = vpop.f32.mrb[0].mxu0
        %v1410 = vadd.f32 0.0, %v1409
        %v1411 = vpop.f32.mrb[0].mxu0
        %v1412 = vpop.f32.mrb[0].mxu0
        %v1413 = vpop.f32.mrb[0].mxu0
        %1414 = vdwg.mxu0
        %v1416 = vsel %vm925, %v1368, 0
        %v1419 = vsel %vm953, %v1252, 0
        %1421 = vmatprep.subr.bf16.mxu0 0
        %1422 = vmatpush1.bf16.msra.mxu0 %v1419
        %1423 = vmatprep.subr.bf16.mxu0 0
        %1424 = vmatpush1.bf16.msra.mxu0 0
        %1425 = vmatprep.subr.bf16.mxu0 0
        %1426 = vmatpush1.bf16.msra.mxu0 0
        %1427 = vmatprep.subr.bf16.mxu0 0
        %1428 = vmatpush1.bf16.msra.mxu0 0
        %1429 = vmatprep.subr.bf16.mxu0 0
        %1430 = vmatpush1.bf16.msra.mxu0 0
        %1431 = vmatprep.subr.bf16.mxu0 0
        %1432 = vmatpush1.bf16.msra.mxu0 0
        %1433 = vmatprep.subr.bf16.mxu0 0
        %1434 = vmatpush1.bf16.msra.mxu0 0
        %1435 = vmatprep.subr.bf16.mxu0 0
        %1436 = vmatpush1.bf16.msra.mxu0 0
        %1437 = vmatprep.subr.bf16.mxu0 0
        %1438 = vmatpush1.bf16.msra.mxu0 0
        %1439 = vmatprep.subr.bf16.mxu0 0
        %1440 = vmatpush1.bf16.msra.mxu0 0
        %1441 = vmatprep.subr.bf16.mxu0 0
        %1442 = vmatpush1.bf16.msra.mxu0 0
        %1443 = vmatprep.subr.bf16.mxu0 0
        %1444 = vmatpush1.bf16.msra.mxu0 0
        %1445 = vmatprep.subr.bf16.mxu0 0
        %1446 = vmatpush1.bf16.msra.mxu0 0
        %1447 = vmatprep.subr.bf16.mxu0 0
        %1448 = vmatpush1.bf16.msra.mxu0 0
        %1449 = vmatprep.subr.bf16.mxu0 0
        %1450 = vmatpush1.bf16.msra.mxu0 0
        %1451 = vmatprep.subr.bf16.mxu0 0
        %1452 = vmatpush1.bf16.msra.mxu0 0
        %1453 = vmatprep.mubr.bf16.mxu0 0
        %1454 = vmatmul.mubr.bf16.gmra.mrb[0].mxu0 %v1416
        %v1455 = vpop.f32.mrb[0].mxu0
        %v1456 = vadd.f32 0.0, %v1455
        %v1457 = vpop.f32.mrb[0].mxu0
        %v1458 = vpop.f32.mrb[0].mxu0
        %v1459 = vpop.f32.mrb[0].mxu0
        %1460 = vdwg.mxu0
        %v1461 = vpack.c.bf16 %v1456, %v1410
        %s1462 = sadd.s32 8, %s1044
        %s1463 = smul.addr %s1462, 4
        %s1464 = scalar_lea.vmem %s2, %s1463
        %v1465 = vld [vmem:[%s1464] sm:$0xf]
        %v1466 = vld [vmem:[%s1464 + $0x4] sm:$0xf]
        %v1467 = vld [vmem:[%s1464 + $0x8] sm:$0xf]
        %v1468 = vld [vmem:[%s1464 + $0xc] sm:$0xf]
        %v1469 = vld [vmem:[%s1464 + $0x10] sm:$0xf]
        %v1470 = vld [vmem:[%s1464 + $0x14] sm:$0xf]
        %v1471 = vld [vmem:[%s1464 + $0x18] sm:$0xf]
        %v1472 = vld [vmem:[%s1464 + $0x1c] sm:$0xf]
        %v1481 = vunpack.c.l.b16 %v1465
        %v1482 = vunpack.c.l.b16 %v1466
        %v1483 = vunpack.c.l.b16 %v1467
        %v1484 = vunpack.c.l.b16 %v1468
        %v1485 = vunpack.c.l.b16 %v1469
        %v1486 = vunpack.c.l.b16 %v1470
        %v1487 = vunpack.c.l.b16 %v1471
        %v1488 = vunpack.c.l.b16 %v1472
        %v1489 = vpack.c.b16 %v1482, %v1481
        %v1490 = vpack.c.b16 %v1484, %v1483
        %v1491 = vpack.c.b16 %v1486, %v1485
        %v1492 = vpack.c.b16 %v1488, %v1487
        %v1498 = vsel %vm832, %v1461, 0
        %1500 = vmatprep.subr.bf16.mxu0 0
        %1501 = vmatpush1.bf16.msra.mxu0 %v1489
        %1502 = vmatprep.subr.bf16.mxu0 0
        %1503 = vmatpush1.bf16.msra.mxu0 %v1490
        %1504 = vmatprep.subr.bf16.mxu0 0
        %1505 = vmatpush1.bf16.msra.mxu0 %v1491
        %1506 = vmatprep.subr.bf16.mxu0 0
        %1507 = vmatpush1.bf16.msra.mxu0 %v1492
        %1508 = vmatprep.subr.bf16.mxu0 0
        %1509 = vmatpush1.bf16.msra.mxu0 0
        %1510 = vmatprep.subr.bf16.mxu0 0
        %1511 = vmatpush1.bf16.msra.mxu0 0
        %1512 = vmatprep.subr.bf16.mxu0 0
        %1513 = vmatpush1.bf16.msra.mxu0 0
        %1514 = vmatprep.subr.bf16.mxu0 0
        %1515 = vmatpush1.bf16.msra.mxu0 0
        %1516 = vmatprep.subr.bf16.mxu0 0
        %1517 = vmatpush1.bf16.msra.mxu0 0
        %1518 = vmatprep.subr.bf16.mxu0 0
        %1519 = vmatpush1.bf16.msra.mxu0 0
        %1520 = vmatprep.subr.bf16.mxu0 0
        %1521 = vmatpush1.bf16.msra.mxu0 0
        %1522 = vmatprep.subr.bf16.mxu0 0
        %1523 = vmatpush1.bf16.msra.mxu0 0
        %1524 = vmatprep.subr.bf16.mxu0 0
        %1525 = vmatpush1.bf16.msra.mxu0 0
        %1526 = vmatprep.subr.bf16.mxu0 0
        %1527 = vmatpush1.bf16.msra.mxu0 0
        %1528 = vmatprep.subr.bf16.mxu0 0
        %1529 = vmatpush1.bf16.msra.mxu0 0
        %1530 = vmatprep.subr.bf16.mxu0 0
        %1531 = vmatpush1.bf16.msra.mxu0 0
        %1532 = vmatprep.mubr.bf16.mxu0 0
        %1533 = vmatmul.mubr.bf16.gmra.mrb[0].mxu0 %v1498
        %v1534 = vpop.f32.mrb[0].mxu0
        %v1535 = vadd.f32 0.0, %v1534
        %v1536 = vpop.f32.mrb[0].mxu0
        %v1537 = vpop.f32.mrb[0].mxu0
        %v1538 = vadd.f32 0.0, %v1537
        %v1539 = vpop.f32.mrb[0].mxu0
        %1540 = vdwg.mxu0
        %v1549 = vunpack.c.l.b16 %v1047
        %v1550 = vunpack.c.l.b16 %v1048
        %v1551 = vunpack.c.l.b16 %v1049
        %v1552 = vunpack.c.l.b16 %v1050
        %v1553 = vunpack.c.l.b16 %v1051
        %v1554 = vunpack.c.l.b16 %v1052
        %v1555 = vunpack.c.l.b16 %v1053
        %v1556 = vunpack.c.l.b16 %v1054
        %v1557 = vpack.c.b16 %v1550, %v1549
        %v1558 = vpack.c.b16 %v1552, %v1551
        %v1559 = vpack.c.b16 %v1554, %v1553
        %v1560 = vpack.c.b16 %v1556, %v1555
        %v1566 = vsel %vm832, %v1043, 0
        %1568 = vmatprep.subr.bf16.mxu0 0
        %1569 = vmatpush1.bf16.msra.mxu0 %v1557
        %1570 = vmatprep.subr.bf16.mxu0 0
        %1571 = vmatpush1.bf16.msra.mxu0 %v1558
        %1572 = vmatprep.subr.bf16.mxu0 0
        %1573 = vmatpush1.bf16.msra.mxu0 %v1559
        %1574 = vmatprep.subr.bf16.mxu0 0
        %1575 = vmatpush1.bf16.msra.mxu0 %v1560
        %1576 = vmatprep.subr.bf16.mxu0 0
        %1577 = vmatpush1.bf16.msra.mxu0 0
        %1578 = vmatprep.subr.bf16.mxu0 0
        %1579 = vmatpush1.bf16.msra.mxu0 0
        %1580 = vmatprep.subr.bf16.mxu0 0
        %1581 = vmatpush1.bf16.msra.mxu0 0
        %1582 = vmatprep.subr.bf16.mxu0 0
        %1583 = vmatpush1.bf16.msra.mxu0 0
        %1584 = vmatprep.subr.bf16.mxu0 0
        %1585 = vmatpush1.bf16.msra.mxu0 0
        %1586 = vmatprep.subr.bf16.mxu0 0
        %1587 = vmatpush1.bf16.msra.mxu0 0
        %1588 = vmatprep.subr.bf16.mxu0 0
        %1589 = vmatpush1.bf16.msra.mxu0 0
        %1590 = vmatprep.subr.bf16.mxu0 0
        %1591 = vmatpush1.bf16.msra.mxu0 0
        %1592 = vmatprep.subr.bf16.mxu0 0
        %1593 = vmatpush1.bf16.msra.mxu0 0
        %1594 = vmatprep.subr.bf16.mxu0 0
        %1595 = vmatpush1.bf16.msra.mxu0 0
        %1596 = vmatprep.subr.bf16.mxu0 0
        %1597 = vmatpush1.bf16.msra.mxu0 0
        %1598 = vmatprep.subr.bf16.mxu0 0
        %1599 = vmatpush1.bf16.msra.mxu0 0
        %1600 = vmatprep.mubr.bf16.mxu0 0
        %1601 = vmatmul.mubr.bf16.gmra.mrb[0].mxu0 %v1566
        %v1602 = vpop.f32.mrb[0].mxu0
        %v1603 = vadd.f32 %v1535, %v1602
        %v1604 = vpop.f32.mrb[0].mxu0
        %v1605 = vpop.f32.mrb[0].mxu0
        %v1606 = vadd.f32 %v1538, %v1605
        %v1607 = vpop.f32.mrb[0].mxu0
        %1608 = vdwg.mxu0
        %s1609 = sadd.s32 8, %s631
        %s1610 = smul.addr %s1609, 4
        %s1611 = scalar_lea.vmem %s1, %s1610
        %v1612 = vld [vmem:[%s1611] sm:$0xf]
        %v1613 = vld [vmem:[%s1611 + $0x4] sm:$0xf]
        %v1614 = vld [vmem:[%s1611 + $0x8] sm:$0xf]
        %v1615 = vld [vmem:[%s1611 + $0xc] sm:$0xf]
        %v1620 = vunpack.c.l.b16 %v1612
        %v1621 = vunpack.c.l.b16 %v1613
        %v1622 = vunpack.c.l.b16 %v1614
        %v1623 = vunpack.c.l.b16 %v1615
        %v1624 = vpack.c.b16 %v1621, %v1620
        %v1625 = vpack.c.b16 %v1623, %v1622
        %1628 = vmatprep.subr.bf16.mxu0 0
        %1629 = vmatpush1.bf16.msra.mxu0 %v1624
        %1630 = vmatprep.subr.bf16.mxu0 0
        %1631 = vmatpush1.bf16.msra.mxu0 %v1625
        %1632 = vmatprep.subr.bf16.mxu0 0
        %1633 = vmatpush1.bf16.msra.mxu0 0
        %1634 = vmatprep.subr.bf16.mxu0 0
        %1635 = vmatpush1.bf16.msra.mxu0 0
        %1636 = vmatprep.subr.bf16.mxu0 0
        %1637 = vmatpush1.bf16.msra.mxu0 0
        %1638 = vmatprep.subr.bf16.mxu0 0
        %1639 = vmatpush1.bf16.msra.mxu0 0
        %1640 = vmatprep.subr.bf16.mxu0 0
        %1641 = vmatpush1.bf16.msra.mxu0 0
        %1642 = vmatprep.subr.bf16.mxu0 0
        %1643 = vmatpush1.bf16.msra.mxu0 0
        %1644 = vmatprep.subr.bf16.mxu0 0
        %1645 = vmatpush1.bf16.msra.mxu0 0
        %1646 = vmatprep.subr.bf16.mxu0 0
        %1647 = vmatpush1.bf16.msra.mxu0 0
        %1648 = vmatprep.subr.bf16.mxu0 0
        %1649 = vmatpush1.bf16.msra.mxu0 0
        %1650 = vmatprep.subr.bf16.mxu0 0
        %1651 = vmatpush1.bf16.msra.mxu0 0
        %1652 = vmatprep.subr.bf16.mxu0 0
        %1653 = vmatpush1.bf16.msra.mxu0 0
        %1654 = vmatprep.subr.bf16.mxu0 0
        %1655 = vmatpush1.bf16.msra.mxu0 0
        %1656 = vmatprep.subr.bf16.mxu0 0
        %1657 = vmatpush1.bf16.msra.mxu0 0
        %1658 = vmatprep.subr.bf16.mxu0 0
        %1659 = vmatpush1.bf16.msra.mxu0 0
        %1660 = vmatprep.mubr.bf16.mxu0 0
        %1661 = vmatmul.mubr.bf16.gmra.mrb[0].mxu0 %v651
        %v1662 = vpop.f32.mrb[0].mxu0
        %v1663 = vadd.f32 0.0, %v1662
        %v1664 = vpop.f32.mrb[0].mxu0
        %v1665 = vpop.f32.mrb[0].mxu0
        %v1666 = vadd.f32 0.0, %v1665
        %v1667 = vpop.f32.mrb[0].mxu0
        %1668 = vdwg.mxu0
        %s1669 = sadd.s32 24, %s631
        %s1670 = smul.addr %s1669, 4
        %s1671 = scalar_lea.vmem %s1, %s1670
        %v1672 = vld [vmem:[%s1671] sm:$0xf]
        %v1673 = vld [vmem:[%s1671 + $0x4] sm:$0xf]
        %v1674 = vld [vmem:[%s1671 + $0x8] sm:$0xf]
        %v1675 = vld [vmem:[%s1671 + $0xc] sm:$0xf]
        %v1680 = vunpack.c.l.b16 %v1672
        %v1681 = vunpack.c.l.b16 %v1673
        %v1682 = vunpack.c.l.b16 %v1674
        %v1683 = vunpack.c.l.b16 %v1675
        %v1684 = vpack.c.b16 %v1681, %v1680
        %v1685 = vpack.c.b16 %v1683, %v1682
        %1688 = vmatprep.subr.bf16.mxu0 0
        %1689 = vmatpush1.bf16.msra.mxu0 %v1684
        %1690 = vmatprep.subr.bf16.mxu0 0
        %1691 = vmatpush1.bf16.msra.mxu0 %v1685
        %1692 = vmatprep.subr.bf16.mxu0 0
        %1693 = vmatpush1.bf16.msra.mxu0 0
        %1694 = vmatprep.subr.bf16.mxu0 0
        %1695 = vmatpush1.bf16.msra.mxu0 0
        %1696 = vmatprep.subr.bf16.mxu0 0
        %1697 = vmatpush1.bf16.msra.mxu0 0
        %1698 = vmatprep.subr.bf16.mxu0 0
        %1699 = vmatpush1.bf16.msra.mxu0 0
        %1700 = vmatprep.subr.bf16.mxu0 0
        %1701 = vmatpush1.bf16.msra.mxu0 0
        %1702 = vmatprep.subr.bf16.mxu0 0
        %1703 = vmatpush1.bf16.msra.mxu0 0
        %1704 = vmatprep.subr.bf16.mxu0 0
        %1705 = vmatpush1.bf16.msra.mxu0 0
        %1706 = vmatprep.subr.bf16.mxu0 0
        %1707 = vmatpush1.bf16.msra.mxu0 0
        %1708 = vmatprep.subr.bf16.mxu0 0
        %1709 = vmatpush1.bf16.msra.mxu0 0
        %1710 = vmatprep.subr.bf16.mxu0 0
        %1711 = vmatpush1.bf16.msra.mxu0 0
        %1712 = vmatprep.subr.bf16.mxu0 0
        %1713 = vmatpush1.bf16.msra.mxu0 0
        %1714 = vmatprep.subr.bf16.mxu0 0
        %1715 = vmatpush1.bf16.msra.mxu0 0
        %1716 = vmatprep.subr.bf16.mxu0 0
        %1717 = vmatpush1.bf16.msra.mxu0 0
        %1718 = vmatprep.subr.bf16.mxu0 0
        %1719 = vmatpush1.bf16.msra.mxu0 0
        %1720 = vmatprep.mubr.bf16.mxu0 0
        %1721 = vmatmul.mubr.bf16.gmra.mrb[0].mxu0 %v651
        %v1722 = vpop.f32.mrb[0].mxu0
        %v1723 = vadd.f32 0.0, %v1722
        %v1724 = vpop.f32.mrb[0].mxu0
        %v1725 = vpop.f32.mrb[0].mxu0
        %v1726 = vadd.f32 0.0, %v1725
        %v1727 = vpop.f32.mrb[0].mxu0
        %1728 = vdwg.mxu0
        %s1729 = sadd.s32 40, %s631
        %s1730 = smul.addr %s1729, 4
        %s1731 = scalar_lea.vmem %s1, %s1730
        %v1732 = vld [vmem:[%s1731] sm:$0xf]
        %v1733 = vld [vmem:[%s1731 + $0x4] sm:$0xf]
        %v1734 = vld [vmem:[%s1731 + $0x8] sm:$0xf]
        %v1735 = vld [vmem:[%s1731 + $0xc] sm:$0xf]
        %v1740 = vunpack.c.l.b16 %v1732
        %v1741 = vunpack.c.l.b16 %v1733
        %v1742 = vunpack.c.l.b16 %v1734
        %v1743 = vunpack.c.l.b16 %v1735
        %v1744 = vpack.c.b16 %v1741, %v1740
        %v1745 = vpack.c.b16 %v1743, %v1742
        %1748 = vmatprep.subr.bf16.mxu0 0
        %1749 = vmatpush1.bf16.msra.mxu0 %v1744
        %1750 = vmatprep.subr.bf16.mxu0 0
        %1751 = vmatpush1.bf16.msra.mxu0 %v1745
        %1752 = vmatprep.subr.bf16.mxu0 0
        %1753 = vmatpush1.bf16.msra.mxu0 0
        %1754 = vmatprep.subr.bf16.mxu0 0
        %1755 = vmatpush1.bf16.msra.mxu0 0
        %1756 = vmatprep.subr.bf16.mxu0 0
        %1757 = vmatpush1.bf16.msra.mxu0 0
        %1758 = vmatprep.subr.bf16.mxu0 0
        %1759 = vmatpush1.bf16.msra.mxu0 0
        %1760 = vmatprep.subr.bf16.mxu0 0
        %1761 = vmatpush1.bf16.msra.mxu0 0
        %1762 = vmatprep.subr.bf16.mxu0 0
        %1763 = vmatpush1.bf16.msra.mxu0 0
        %1764 = vmatprep.subr.bf16.mxu0 0
        %1765 = vmatpush1.bf16.msra.mxu0 0
        %1766 = vmatprep.subr.bf16.mxu0 0
        %1767 = vmatpush1.bf16.msra.mxu0 0
        %1768 = vmatprep.subr.bf16.mxu0 0
        %1769 = vmatpush1.bf16.msra.mxu0 0
        %1770 = vmatprep.subr.bf16.mxu0 0
        %1771 = vmatpush1.bf16.msra.mxu0 0
        %1772 = vmatprep.subr.bf16.mxu0 0
        %1773 = vmatpush1.bf16.msra.mxu0 0
        %1774 = vmatprep.subr.bf16.mxu0 0
        %1775 = vmatpush1.bf16.msra.mxu0 0
        %1776 = vmatprep.subr.bf16.mxu0 0
        %1777 = vmatpush1.bf16.msra.mxu0 0
        %1778 = vmatprep.subr.bf16.mxu0 0
        %1779 = vmatpush1.bf16.msra.mxu0 0
        %1780 = vmatprep.mubr.bf16.mxu0 0
        %1781 = vmatmul.mubr.bf16.gmra.mrb[0].mxu0 %v651
        %v1782 = vpop.f32.mrb[0].mxu0
        %v1783 = vadd.f32 0.0, %v1782
        %v1784 = vpop.f32.mrb[0].mxu0
        %v1785 = vpop.f32.mrb[0].mxu0
        %v1786 = vadd.f32 0.0, %v1785
        %v1787 = vpop.f32.mrb[0].mxu0
        %1788 = vdwg.mxu0
        %v1789 = vpack.c.bf16 %v1666, %v1663
        %v1791 = vunpack.c.l.b16 %v1789
        %v1792 = vunpack.c.h.b16 %v1789
        %v1793 = vpack.c.b16 %v1791, %v1791
        %v1794 = vpack.c.b16 %v1792, %v1792
        %v1795 = vpack.c.bf16 %v1726, %v1723
        %v1797 = vunpack.c.l.b16 %v1795
        %v1798 = vunpack.c.h.b16 %v1795
        %v1799 = vpack.c.b16 %v1797, %v1797
        %v1800 = vpack.c.b16 %v1798, %v1798
        %v1801 = vpack.c.bf16 %v1786, %v1783
        %v1803 = vunpack.c.l.b16 %v1801
        %v1804 = vunpack.c.h.b16 %v1801
        %v1805 = vpack.c.b16 %v1803, %v1803
        %v1806 = vpack.c.b16 %v1804, %v1804
        %v1808 = vsel %vm832, %v1793, 0
        %v1811 = vsel %vm832, %v1799, 0
        %1813 = vmatprep.subr.bf16.mxu0 0
        %1814 = vmatpush1.bf16.xpose.msra.mxu0 %v1811
        %1815 = vmatprep.subr.bf16.mxu0 0
        %1816 = vmatpush1.bf16.xpose.msra.mxu0 0
        %1817 = vmatprep.subr.bf16.mxu0 0
        %1818 = vmatpush1.bf16.xpose.msra.mxu0 0
        %1819 = vmatprep.subr.bf16.mxu0 0
        %1820 = vmatpush1.bf16.xpose.msra.mxu0 0
        %1821 = vmatprep.subr.bf16.mxu0 0
        %1822 = vmatpush1.bf16.xpose.msra.mxu0 0
        %1823 = vmatprep.subr.bf16.mxu0 0
        %1824 = vmatpush1.bf16.xpose.msra.mxu0 0
        %1825 = vmatprep.subr.bf16.mxu0 0
        %1826 = vmatpush1.bf16.xpose.msra.mxu0 0
        %1827 = vmatprep.subr.bf16.mxu0 0
        %1828 = vmatpush1.bf16.xpose.msra.mxu0 0
        %1829 = vmatprep.subr.bf16.mxu0 0
        %1830 = vmatpush1.bf16.xpose.msra.mxu0 0
        %1831 = vmatprep.subr.bf16.mxu0 0
        %1832 = vmatpush1.bf16.xpose.msra.mxu0 0
        %1833 = vmatprep.subr.bf16.mxu0 0
        %1834 = vmatpush1.bf16.xpose.msra.mxu0 0
        %1835 = vmatprep.subr.bf16.mxu0 0
        %1836 = vmatpush1.bf16.xpose.msra.mxu0 0
        %1837 = vmatprep.subr.bf16.mxu0 0
        %1838 = vmatpush1.bf16.xpose.msra.mxu0 0
        %1839 = vmatprep.subr.bf16.mxu0 0
        %1840 = vmatpush1.bf16.xpose.msra.mxu0 0
        %1841 = vmatprep.subr.bf16.mxu0 0
        %1842 = vmatpush1.bf16.xpose.msra.mxu0 0
        %1843 = vmatprep.subr.bf16.mxu0 0
        %1844 = vmatpush1.bf16.xpose.msra.mxu0 0
        %1845 = vmatprep.mubr.bf16.mxu0 0
        %1846 = vmatmul.mubr.bf16.gmra.mrb[0].mxu0 %v1808
        %v1847 = vpop.f32.mrb[0].mxu0
        %v1848 = vadd.f32 0.0, %v1847
        %v1849 = vpop.f32.mrb[0].mxu0
        %v1850 = vpop.f32.mrb[0].mxu0
        %v1851 = vpop.f32.mrb[0].mxu0
        %1852 = vdwg.mxu0
        %v1854 = vsel %vm832, %v1794, 0
        %v1857 = vsel %vm832, %v1800, 0
        %1859 = vmatprep.subr.bf16.mxu0 0
        %1860 = vmatpush1.bf16.xpose.msra.mxu0 %v1857
        %1861 = vmatprep.subr.bf16.mxu0 0
        %1862 = vmatpush1.bf16.xpose.msra.mxu0 0
        %1863 = vmatprep.subr.bf16.mxu0 0
        %1864 = vmatpush1.bf16.xpose.msra.mxu0 0
        %1865 = vmatprep.subr.bf16.mxu0 0
        %1866 = vmatpush1.bf16.xpose.msra.mxu0 0
        %1867 = vmatprep.subr.bf16.mxu0 0
        %1868 = vmatpush1.bf16.xpose.msra.mxu0 0
        %1869 = vmatprep.subr.bf16.mxu0 0
        %1870 = vmatpush1.bf16.xpose.msra.mxu0 0
        %1871 = vmatprep.subr.bf16.mxu0 0
        %1872 = vmatpush1.bf16.xpose.msra.mxu0 0
        %1873 = vmatprep.subr.bf16.mxu0 0
        %1874 = vmatpush1.bf16.xpose.msra.mxu0 0
        %1875 = vmatprep.subr.bf16.mxu0 0
        %1876 = vmatpush1.bf16.xpose.msra.mxu0 0
        %1877 = vmatprep.subr.bf16.mxu0 0
        %1878 = vmatpush1.bf16.xpose.msra.mxu0 0
        %1879 = vmatprep.subr.bf16.mxu0 0
        %1880 = vmatpush1.bf16.xpose.msra.mxu0 0
        %1881 = vmatprep.subr.bf16.mxu0 0
        %1882 = vmatpush1.bf16.xpose.msra.mxu0 0
        %1883 = vmatprep.subr.bf16.mxu0 0
        %1884 = vmatpush1.bf16.xpose.msra.mxu0 0
        %1885 = vmatprep.subr.bf16.mxu0 0
        %1886 = vmatpush1.bf16.xpose.msra.mxu0 0
        %1887 = vmatprep.subr.bf16.mxu0 0
        %1888 = vmatpush1.bf16.xpose.msra.mxu0 0
        %1889 = vmatprep.subr.bf16.mxu0 0
        %1890 = vmatpush1.bf16.xpose.msra.mxu0 0
        %1891 = vmatprep.mubr.bf16.mxu0 0
        %1892 = vmatmul.mubr.bf16.gmra.mrb[0].mxu0 %v1854
        %v1893 = vpop.f32.mrb[0].mxu0
        %v1894 = vadd.f32 0.0, %v1893
        %v1895 = vpop.f32.mrb[0].mxu0
        %v1896 = vpop.f32.mrb[0].mxu0
        %v1897 = vpop.f32.mrb[0].mxu0
        %1898 = vdwg.mxu0
        %v1899 = vsel %vm925, %v1848, -inf
        %1900 = vmax.xlane.f32.xlu0 %v1899
        %v1901 = vpop.xlane.xlu0 %1900
        %v1902 = vsel %vm925, %v1894, -inf
        %1903 = vmax.xlane.f32.xlu0 %v1902
        %v1904 = vpop.xlane.xlu0 %1903
        %v1905 = vsub.f32 %v1848, %v1901
        %v1906 = vsub.f32 %v1894, %v1904
        %v1907 = vmul.f32 %v1905, 1.442695
        %v1908 = vpow.pop %v1907
        %v1909 = vmul.f32 %v1906, 1.442695
        %v1910 = vpow.pop %v1909
        %v1911 = vsel %vm925, %v1908, 0.0
        %1912 = vadd.xlane.f32.xlu0 %v1911
        %v1913 = vpop.xlane.xlu0 %1912
        %v1914 = vsel %vm925, %v1910, 0.0
        %1915 = vadd.xlane.f32.xlu0 %v1914
        %v1916 = vpop.xlane.xlu0 %1915
        %v1917 = vrcp.pop %v1913
        %v1918 = vrcp.pop %v1916
        %v1919 = vmul.f32 %v1908, %v1917
        %v1920 = vmul.f32 %v1910, %v1918
        %v1921 = vpack.c.bf16 %v1919, %v1919
        %v1922 = vpack.c.bf16 %v1920, %v1920
        %v1924 = vsel %vm925, %v1921, 0
        %v1927 = vsel %vm953, %v1805, 0
        %1929 = vmatprep.subr.bf16.mxu0 0
        %1930 = vmatpush1.bf16.msra.mxu0 %v1927
        %1931 = vmatprep.subr.bf16.mxu0 0
        %1932 = vmatpush1.bf16.msra.mxu0 0
        %1933 = vmatprep.subr.bf16.mxu0 0
        %1934 = vmatpush1.bf16.msra.mxu0 0
        %1935 = vmatprep.subr.bf16.mxu0 0
        %1936 = vmatpush1.bf16.msra.mxu0 0
        %1937 = vmatprep.subr.bf16.mxu0 0
        %1938 = vmatpush1.bf16.msra.mxu0 0
        %1939 = vmatprep.subr.bf16.mxu0 0
        %1940 = vmatpush1.bf16.msra.mxu0 0
        %1941 = vmatprep.subr.bf16.mxu0 0
        %1942 = vmatpush1.bf16.msra.mxu0 0
        %1943 = vmatprep.subr.bf16.mxu0 0
        %1944 = vmatpush1.bf16.msra.mxu0 0
        %1945 = vmatprep.subr.bf16.mxu0 0
        %1946 = vmatpush1.bf16.msra.mxu0 0
        %1947 = vmatprep.subr.bf16.mxu0 0
        %1948 = vmatpush1.bf16.msra.mxu0 0
        %1949 = vmatprep.subr.bf16.mxu0 0
        %1950 = vmatpush1.bf16.msra.mxu0 0
        %1951 = vmatprep.subr.bf16.mxu0 0
        %1952 = vmatpush1.bf16.msra.mxu0 0
        %1953 = vmatprep.subr.bf16.mxu0 0
        %1954 = vmatpush1.bf16.msra.mxu0 0
        %1955 = vmatprep.subr.bf16.mxu0 0
        %1956 = vmatpush1.bf16.msra.mxu0 0
        %1957 = vmatprep.subr.bf16.mxu0 0
        %1958 = vmatpush1.bf16.msra.mxu0 0
        %1959 = vmatprep.subr.bf16.mxu0 0
        %1960 = vmatpush1.bf16.msra.mxu0 0
        %1961 = vmatprep.mubr.bf16.mxu0 0
        %1962 = vmatmul.mubr.bf16.gmra.mrb[0].mxu0 %v1924
        %v1963 = vpop.f32.mrb[0].mxu0
        %v1964 = vadd.f32 0.0, %v1963
        %v1965 = vpop.f32.mrb[0].mxu0
        %v1966 = vpop.f32.mrb[0].mxu0
        %v1967 = vpop.f32.mrb[0].mxu0
        %1968 = vdwg.mxu0
        %v1970 = vsel %vm925, %v1922, 0
        %v1973 = vsel %vm953, %v1806, 0
        %1975 = vmatprep.subr.bf16.mxu0 0
        %1976 = vmatpush1.bf16.msra.mxu0 %v1973
        %1977 = vmatprep.subr.bf16.mxu0 0
        %1978 = vmatpush1.bf16.msra.mxu0 0
        %1979 = vmatprep.subr.bf16.mxu0 0
        %1980 = vmatpush1.bf16.msra.mxu0 0
        %1981 = vmatprep.subr.bf16.mxu0 0
        %1982 = vmatpush1.bf16.msra.mxu0 0
        %1983 = vmatprep.subr.bf16.mxu0 0
        %1984 = vmatpush1.bf16.msra.mxu0 0
        %1985 = vmatprep.subr.bf16.mxu0 0
        %1986 = vmatpush1.bf16.msra.mxu0 0
        %1987 = vmatprep.subr.bf16.mxu0 0
        %1988 = vmatpush1.bf16.msra.mxu0 0
        %1989 = vmatprep.subr.bf16.mxu0 0
        %1990 = vmatpush1.bf16.msra.mxu0 0
        %1991 = vmatprep.subr.bf16.mxu0 0
        %1992 = vmatpush1.bf16.msra.mxu0 0
        %1993 = vmatprep.subr.bf16.mxu0 0
        %1994 = vmatpush1.bf16.msra.mxu0 0
        %1995 = vmatprep.subr.bf16.mxu0 0
        %1996 = vmatpush1.bf16.msra.mxu0 0
        %1997 = vmatprep.subr.bf16.mxu0 0
        %1998 = vmatpush1.bf16.msra.mxu0 0
        %1999 = vmatprep.subr.bf16.mxu0 0
        %2000 = vmatpush1.bf16.msra.mxu0 0
        %2001 = vmatprep.subr.bf16.mxu0 0
        %2002 = vmatpush1.bf16.msra.mxu0 0
        %2003 = vmatprep.subr.bf16.mxu0 0
        %2004 = vmatpush1.bf16.msra.mxu0 0
        %2005 = vmatprep.subr.bf16.mxu0 0
        %2006 = vmatpush1.bf16.msra.mxu0 0
        %2007 = vmatprep.mubr.bf16.mxu0 0
        %2008 = vmatmul.mubr.bf16.gmra.mrb[0].mxu0 %v1970
        %v2009 = vpop.f32.mrb[0].mxu0
        %v2010 = vadd.f32 0.0, %v2009
        %v2011 = vpop.f32.mrb[0].mxu0
        %v2012 = vpop.f32.mrb[0].mxu0
        %v2013 = vpop.f32.mrb[0].mxu0
        %2014 = vdwg.mxu0
        %v2015 = vpack.c.bf16 %v2010, %v1964
        %s2016 = sadd.s32 16, %s1044
        %s2017 = smul.addr %s2016, 4
        %s2018 = scalar_lea.vmem %s2, %s2017
        %v2019 = vld [vmem:[%s2018] sm:$0xf]
        %v2020 = vld [vmem:[%s2018 + $0x4] sm:$0xf]
        %v2021 = vld [vmem:[%s2018 + $0x8] sm:$0xf]
        %v2022 = vld [vmem:[%s2018 + $0xc] sm:$0xf]
        %v2023 = vld [vmem:[%s2018 + $0x10] sm:$0xf]
        %v2024 = vld [vmem:[%s2018 + $0x14] sm:$0xf]
        %v2025 = vld [vmem:[%s2018 + $0x18] sm:$0xf]
        %v2026 = vld [vmem:[%s2018 + $0x1c] sm:$0xf]
        %v2035 = vunpack.c.l.b16 %v2019
        %v2036 = vunpack.c.l.b16 %v2020
        %v2037 = vunpack.c.l.b16 %v2021
        %v2038 = vunpack.c.l.b16 %v2022
        %v2039 = vunpack.c.l.b16 %v2023
        %v2040 = vunpack.c.l.b16 %v2024
        %v2041 = vunpack.c.l.b16 %v2025
        %v2042 = vunpack.c.l.b16 %v2026
        %v2043 = vpack.c.b16 %v2036, %v2035
        %v2044 = vpack.c.b16 %v2038, %v2037
        %v2045 = vpack.c.b16 %v2040, %v2039
        %v2046 = vpack.c.b16 %v2042, %v2041
        %v2052 = vsel %vm832, %v2015, 0
        %2054 = vmatprep.subr.bf16.mxu0 0
        %2055 = vmatpush1.bf16.msra.mxu0 %v2043
        %2056 = vmatprep.subr.bf16.mxu0 0
        %2057 = vmatpush1.bf16.msra.mxu0 %v2044
        %2058 = vmatprep.subr.bf16.mxu0 0
        %2059 = vmatpush1.bf16.msra.mxu0 %v2045
        %2060 = vmatprep.subr.bf16.mxu0 0
        %2061 = vmatpush1.bf16.msra.mxu0 %v2046
        %2062 = vmatprep.subr.bf16.mxu0 0
        %2063 = vmatpush1.bf16.msra.mxu0 0
        %2064 = vmatprep.subr.bf16.mxu0 0
        %2065 = vmatpush1.bf16.msra.mxu0 0
        %2066 = vmatprep.subr.bf16.mxu0 0
        %2067 = vmatpush1.bf16.msra.mxu0 0
        %2068 = vmatprep.subr.bf16.mxu0 0
        %2069 = vmatpush1.bf16.msra.mxu0 0
        %2070 = vmatprep.subr.bf16.mxu0 0
        %2071 = vmatpush1.bf16.msra.mxu0 0
        %2072 = vmatprep.subr.bf16.mxu0 0
        %2073 = vmatpush1.bf16.msra.mxu0 0
        %2074 = vmatprep.subr.bf16.mxu0 0
        %2075 = vmatpush1.bf16.msra.mxu0 0
        %2076 = vmatprep.subr.bf16.mxu0 0
        %2077 = vmatpush1.bf16.msra.mxu0 0
        %2078 = vmatprep.subr.bf16.mxu0 0
        %2079 = vmatpush1.bf16.msra.mxu0 0
        %2080 = vmatprep.subr.bf16.mxu0 0
        %2081 = vmatpush1.bf16.msra.mxu0 0
        %2082 = vmatprep.subr.bf16.mxu0 0
        %2083 = vmatpush1.bf16.msra.mxu0 0
        %2084 = vmatprep.subr.bf16.mxu0 0
        %2085 = vmatpush1.bf16.msra.mxu0 0
        %2086 = vmatprep.mubr.bf16.mxu0 0
        %2087 = vmatmul.mubr.bf16.gmra.mrb[0].mxu0 %v2052
        %v2088 = vpop.f32.mrb[0].mxu0
        %v2089 = vadd.f32 0.0, %v2088
        %v2090 = vpop.f32.mrb[0].mxu0
        %v2091 = vpop.f32.mrb[0].mxu0
        %v2092 = vadd.f32 0.0, %v2091
        %v2093 = vpop.f32.mrb[0].mxu0
        %2094 = vdwg.mxu0
        %v2095 = vadd.f32 %v1603, %v2089
        %v2096 = vadd.f32 %v1606, %v2092
        %s2097 = sadd.s32 12, %s631
        %s2098 = smul.addr %s2097, 4
        %s2099 = scalar_lea.vmem %s1, %s2098
        %v2100 = vld [vmem:[%s2099] sm:$0xf]
        %v2101 = vld [vmem:[%s2099 + $0x4] sm:$0xf]
        %v2102 = vld [vmem:[%s2099 + $0x8] sm:$0xf]
        %v2103 = vld [vmem:[%s2099 + $0xc] sm:$0xf]
        %v2108 = vunpack.c.l.b16 %v2100
        %v2109 = vunpack.c.l.b16 %v2101
        %v2110 = vunpack.c.l.b16 %v2102
        %v2111 = vunpack.c.l.b16 %v2103
        %v2112 = vpack.c.b16 %v2109, %v2108
        %v2113 = vpack.c.b16 %v2111, %v2110
        %2116 = vmatprep.subr.bf16.mxu0 0
        %2117 = vmatpush1.bf16.msra.mxu0 %v2112
        %2118 = vmatprep.subr.bf16.mxu0 0
        %2119 = vmatpush1.bf16.msra.mxu0 %v2113
        %2120 = vmatprep.subr.bf16.mxu0 0
        %2121 = vmatpush1.bf16.msra.mxu0 0
        %2122 = vmatprep.subr.bf16.mxu0 0
        %2123 = vmatpush1.bf16.msra.mxu0 0
        %2124 = vmatprep.subr.bf16.mxu0 0
        %2125 = vmatpush1.bf16.msra.mxu0 0
        %2126 = vmatprep.subr.bf16.mxu0 0
        %2127 = vmatpush1.bf16.msra.mxu0 0
        %2128 = vmatprep.subr.bf16.mxu0 0
        %2129 = vmatpush1.bf16.msra.mxu0 0
        %2130 = vmatprep.subr.bf16.mxu0 0
        %2131 = vmatpush1.bf16.msra.mxu0 0
        %2132 = vmatprep.subr.bf16.mxu0 0
        %2133 = vmatpush1.bf16.msra.mxu0 0
        %2134 = vmatprep.subr.bf16.mxu0 0
        %2135 = vmatpush1.bf16.msra.mxu0 0
        %2136 = vmatprep.subr.bf16.mxu0 0
        %2137 = vmatpush1.bf16.msra.mxu0 0
        %2138 = vmatprep.subr.bf16.mxu0 0
        %2139 = vmatpush1.bf16.msra.mxu0 0
        %2140 = vmatprep.subr.bf16.mxu0 0
        %2141 = vmatpush1.bf16.msra.mxu0 0
        %2142 = vmatprep.subr.bf16.mxu0 0
        %2143 = vmatpush1.bf16.msra.mxu0 0
        %2144 = vmatprep.subr.bf16.mxu0 0
        %2145 = vmatpush1.bf16.msra.mxu0 0
        %2146 = vmatprep.subr.bf16.mxu0 0
        %2147 = vmatpush1.bf16.msra.mxu0 0
        %2148 = vmatprep.mubr.bf16.mxu0 0
        %2149 = vmatmul.mubr.bf16.gmra.mrb[0].mxu0 %v651
        %v2150 = vpop.f32.mrb[0].mxu0
        %v2151 = vadd.f32 0.0, %v2150
        %v2152 = vpop.f32.mrb[0].mxu0
        %v2153 = vpop.f32.mrb[0].mxu0
        %v2154 = vadd.f32 0.0, %v2153
        %v2155 = vpop.f32.mrb[0].mxu0
        %2156 = vdwg.mxu0
        %s2157 = sadd.s32 28, %s631
        %s2158 = smul.addr %s2157, 4
        %s2159 = scalar_lea.vmem %s1, %s2158
        %v2160 = vld [vmem:[%s2159] sm:$0xf]
        %v2161 = vld [vmem:[%s2159 + $0x4] sm:$0xf]
        %v2162 = vld [vmem:[%s2159 + $0x8] sm:$0xf]
        %v2163 = vld [vmem:[%s2159 + $0xc] sm:$0xf]
        %v2168 = vunpack.c.l.b16 %v2160
        %v2169 = vunpack.c.l.b16 %v2161
        %v2170 = vunpack.c.l.b16 %v2162
        %v2171 = vunpack.c.l.b16 %v2163
        %v2172 = vpack.c.b16 %v2169, %v2168
        %v2173 = vpack.c.b16 %v2171, %v2170
        %2176 = vmatprep.subr.bf16.mxu0 0
        %2177 = vmatpush1.bf16.msra.mxu0 %v2172
        %2178 = vmatprep.subr.bf16.mxu0 0
        %2179 = vmatpush1.bf16.msra.mxu0 %v2173
        %2180 = vmatprep.subr.bf16.mxu0 0
        %2181 = vmatpush1.bf16.msra.mxu0 0
        %2182 = vmatprep.subr.bf16.mxu0 0
        %2183 = vmatpush1.bf16.msra.mxu0 0
        %2184 = vmatprep.subr.bf16.mxu0 0
        %2185 = vmatpush1.bf16.msra.mxu0 0
        %2186 = vmatprep.subr.bf16.mxu0 0
        %2187 = vmatpush1.bf16.msra.mxu0 0
        %2188 = vmatprep.subr.bf16.mxu0 0
        %2189 = vmatpush1.bf16.msra.mxu0 0
        %2190 = vmatprep.subr.bf16.mxu0 0
        %2191 = vmatpush1.bf16.msra.mxu0 0
        %2192 = vmatprep.subr.bf16.mxu0 0
        %2193 = vmatpush1.bf16.msra.mxu0 0
        %2194 = vmatprep.subr.bf16.mxu0 0
        %2195 = vmatpush1.bf16.msra.mxu0 0
        %2196 = vmatprep.subr.bf16.mxu0 0
        %2197 = vmatpush1.bf16.msra.mxu0 0
        %2198 = vmatprep.subr.bf16.mxu0 0
        %2199 = vmatpush1.bf16.msra.mxu0 0
        %2200 = vmatprep.subr.bf16.mxu0 0
        %2201 = vmatpush1.bf16.msra.mxu0 0
        %2202 = vmatprep.subr.bf16.mxu0 0
        %2203 = vmatpush1.bf16.msra.mxu0 0
        %2204 = vmatprep.subr.bf16.mxu0 0
        %2205 = vmatpush1.bf16.msra.mxu0 0
        %2206 = vmatprep.subr.bf16.mxu0 0
        %2207 = vmatpush1.bf16.msra.mxu0 0
        %2208 = vmatprep.mubr.bf16.mxu0 0
        %2209 = vmatmul.mubr.bf16.gmra.mrb[0].mxu0 %v651
        %v2210 = vpop.f32.mrb[0].mxu0
        %v2211 = vadd.f32 0.0, %v2210
        %v2212 = vpop.f32.mrb[0].mxu0
        %v2213 = vpop.f32.mrb[0].mxu0
        %v2214 = vadd.f32 0.0, %v2213
        %v2215 = vpop.f32.mrb[0].mxu0
        %2216 = vdwg.mxu0
        %s2217 = sadd.s32 44, %s631
        %s2218 = smul.addr %s2217, 4
        %s2219 = scalar_lea.vmem %s1, %s2218
        %v2220 = vld [vmem:[%s2219] sm:$0xf]
        %v2221 = vld [vmem:[%s2219 + $0x4] sm:$0xf]
        %v2222 = vld [vmem:[%s2219 + $0x8] sm:$0xf]
        %v2223 = vld [vmem:[%s2219 + $0xc] sm:$0xf]
        %v2228 = vunpack.c.l.b16 %v2220
        %v2229 = vunpack.c.l.b16 %v2221
        %v2230 = vunpack.c.l.b16 %v2222
        %v2231 = vunpack.c.l.b16 %v2223
        %v2232 = vpack.c.b16 %v2229, %v2228
        %v2233 = vpack.c.b16 %v2231, %v2230
        %2236 = vmatprep.subr.bf16.mxu0 0
        %2237 = vmatpush1.bf16.msra.mxu0 %v2232
        %2238 = vmatprep.subr.bf16.mxu0 0
        %2239 = vmatpush1.bf16.msra.mxu0 %v2233
        %2240 = vmatprep.subr.bf16.mxu0 0
        %2241 = vmatpush1.bf16.msra.mxu0 0
        %2242 = vmatprep.subr.bf16.mxu0 0
        %2243 = vmatpush1.bf16.msra.mxu0 0
        %2244 = vmatprep.subr.bf16.mxu0 0
        %2245 = vmatpush1.bf16.msra.mxu0 0
        %2246 = vmatprep.subr.bf16.mxu0 0
        %2247 = vmatpush1.bf16.msra.mxu0 0
        %2248 = vmatprep.subr.bf16.mxu0 0
        %2249 = vmatpush1.bf16.msra.mxu0 0
        %2250 = vmatprep.subr.bf16.mxu0 0
        %2251 = vmatpush1.bf16.msra.mxu0 0
        %2252 = vmatprep.subr.bf16.mxu0 0
        %2253 = vmatpush1.bf16.msra.mxu0 0
        %2254 = vmatprep.subr.bf16.mxu0 0
        %2255 = vmatpush1.bf16.msra.mxu0 0
        %2256 = vmatprep.subr.bf16.mxu0 0
        %2257 = vmatpush1.bf16.msra.mxu0 0
        %2258 = vmatprep.subr.bf16.mxu0 0
        %2259 = vmatpush1.bf16.msra.mxu0 0
        %2260 = vmatprep.subr.bf16.mxu0 0
        %2261 = vmatpush1.bf16.msra.mxu0 0
        %2262 = vmatprep.subr.bf16.mxu0 0
        %2263 = vmatpush1.bf16.msra.mxu0 0
        %2264 = vmatprep.subr.bf16.mxu0 0
        %2265 = vmatpush1.bf16.msra.mxu0 0
        %2266 = vmatprep.subr.bf16.mxu0 0
        %2267 = vmatpush1.bf16.msra.mxu0 0
        %2268 = vmatprep.mubr.bf16.mxu0 0
        %2269 = vmatmul.mubr.bf16.gmra.mrb[0].mxu0 %v651
        %v2270 = vpop.f32.mrb[0].mxu0
        %v2271 = vadd.f32 0.0, %v2270
        %v2272 = vpop.f32.mrb[0].mxu0
        %v2273 = vpop.f32.mrb[0].mxu0
        %v2274 = vadd.f32 0.0, %v2273
        %v2275 = vpop.f32.mrb[0].mxu0
        %2276 = vdwg.mxu0
        %v2277 = vpack.c.bf16 %v2154, %v2151
        %v2279 = vunpack.c.l.b16 %v2277
        %v2280 = vunpack.c.h.b16 %v2277
        %v2281 = vpack.c.b16 %v2279, %v2279
        %v2282 = vpack.c.b16 %v2280, %v2280
        %v2283 = vpack.c.bf16 %v2214, %v2211
        %v2285 = vunpack.c.l.b16 %v2283
        %v2286 = vunpack.c.h.b16 %v2283
        %v2287 = vpack.c.b16 %v2285, %v2285
        %v2288 = vpack.c.b16 %v2286, %v2286
        %v2289 = vpack.c.bf16 %v2274, %v2271
        %v2291 = vunpack.c.l.b16 %v2289
        %v2292 = vunpack.c.h.b16 %v2289
        %v2293 = vpack.c.b16 %v2291, %v2291
        %v2294 = vpack.c.b16 %v2292, %v2292
        %v2296 = vsel %vm832, %v2281, 0
        %v2299 = vsel %vm832, %v2287, 0
        %2301 = vmatprep.subr.bf16.mxu0 0
        %2302 = vmatpush1.bf16.xpose.msra.mxu0 %v2299
        %2303 = vmatprep.subr.bf16.mxu0 0
        %2304 = vmatpush1.bf16.xpose.msra.mxu0 0
        %2305 = vmatprep.subr.bf16.mxu0 0
        %2306 = vmatpush1.bf16.xpose.msra.mxu0 0
        %2307 = vmatprep.subr.bf16.mxu0 0
        %2308 = vmatpush1.bf16.xpose.msra.mxu0 0
        %2309 = vmatprep.subr.bf16.mxu0 0
        %2310 = vmatpush1.bf16.xpose.msra.mxu0 0
        %2311 = vmatprep.subr.bf16.mxu0 0
        %2312 = vmatpush1.bf16.xpose.msra.mxu0 0
        %2313 = vmatprep.subr.bf16.mxu0 0
        %2314 = vmatpush1.bf16.xpose.msra.mxu0 0
        %2315 = vmatprep.subr.bf16.mxu0 0
        %2316 = vmatpush1.bf16.xpose.msra.mxu0 0
        %2317 = vmatprep.subr.bf16.mxu0 0
        %2318 = vmatpush1.bf16.xpose.msra.mxu0 0
        %2319 = vmatprep.subr.bf16.mxu0 0
        %2320 = vmatpush1.bf16.xpose.msra.mxu0 0
        %2321 = vmatprep.subr.bf16.mxu0 0
        %2322 = vmatpush1.bf16.xpose.msra.mxu0 0
        %2323 = vmatprep.subr.bf16.mxu0 0
        %2324 = vmatpush1.bf16.xpose.msra.mxu0 0
        %2325 = vmatprep.subr.bf16.mxu0 0
        %2326 = vmatpush1.bf16.xpose.msra.mxu0 0
        %2327 = vmatprep.subr.bf16.mxu0 0
        %2328 = vmatpush1.bf16.xpose.msra.mxu0 0
        %2329 = vmatprep.subr.bf16.mxu0 0
        %2330 = vmatpush1.bf16.xpose.msra.mxu0 0
        %2331 = vmatprep.subr.bf16.mxu0 0
        %2332 = vmatpush1.bf16.xpose.msra.mxu0 0
        %2333 = vmatprep.mubr.bf16.mxu0 0
        %2334 = vmatmul.mubr.bf16.gmra.mrb[0].mxu0 %v2296
        %v2335 = vpop.f32.mrb[0].mxu0
        %v2336 = vadd.f32 0.0, %v2335
        %v2337 = vpop.f32.mrb[0].mxu0
        %v2338 = vpop.f32.mrb[0].mxu0
        %v2339 = vpop.f32.mrb[0].mxu0
        %2340 = vdwg.mxu0
        %v2342 = vsel %vm832, %v2282, 0
        %v2345 = vsel %vm832, %v2288, 0
        %2347 = vmatprep.subr.bf16.mxu0 0
        %2348 = vmatpush1.bf16.xpose.msra.mxu0 %v2345
        %2349 = vmatprep.subr.bf16.mxu0 0
        %2350 = vmatpush1.bf16.xpose.msra.mxu0 0
        %2351 = vmatprep.subr.bf16.mxu0 0
        %2352 = vmatpush1.bf16.xpose.msra.mxu0 0
        %2353 = vmatprep.subr.bf16.mxu0 0
        %2354 = vmatpush1.bf16.xpose.msra.mxu0 0
        %2355 = vmatprep.subr.bf16.mxu0 0
        %2356 = vmatpush1.bf16.xpose.msra.mxu0 0
        %2357 = vmatprep.subr.bf16.mxu0 0
        %2358 = vmatpush1.bf16.xpose.msra.mxu0 0
        %2359 = vmatprep.subr.bf16.mxu0 0
        %2360 = vmatpush1.bf16.xpose.msra.mxu0 0
        %2361 = vmatprep.subr.bf16.mxu0 0
        %2362 = vmatpush1.bf16.xpose.msra.mxu0 0
        %2363 = vmatprep.subr.bf16.mxu0 0
        %2364 = vmatpush1.bf16.xpose.msra.mxu0 0
        %2365 = vmatprep.subr.bf16.mxu0 0
        %2366 = vmatpush1.bf16.xpose.msra.mxu0 0
        %2367 = vmatprep.subr.bf16.mxu0 0
        %2368 = vmatpush1.bf16.xpose.msra.mxu0 0
        %2369 = vmatprep.subr.bf16.mxu0 0
        %2370 = vmatpush1.bf16.xpose.msra.mxu0 0
        %2371 = vmatprep.subr.bf16.mxu0 0
        %2372 = vmatpush1.bf16.xpose.msra.mxu0 0
        %2373 = vmatprep.subr.bf16.mxu0 0
        %2374 = vmatpush1.bf16.xpose.msra.mxu0 0
        %2375 = vmatprep.subr.bf16.mxu0 0
        %2376 = vmatpush1.bf16.xpose.msra.mxu0 0
        %2377 = vmatprep.subr.bf16.mxu0 0
        %2378 = vmatpush1.bf16.xpose.msra.mxu0 0
        %2379 = vmatprep.mubr.bf16.mxu0 0
        %2380 = vmatmul.mubr.bf16.gmra.mrb[0].mxu0 %v2342
        %v2381 = vpop.f32.mrb[0].mxu0
        %v2382 = vadd.f32 0.0, %v2381
        %v2383 = vpop.f32.mrb[0].mxu0
        %v2384 = vpop.f32.mrb[0].mxu0
        %v2385 = vpop.f32.mrb[0].mxu0
        %2386 = vdwg.mxu0
        %v2387 = vsel %vm925, %v2336, -inf
        %2388 = vmax.xlane.f32.xlu0 %v2387
        %v2389 = vpop.xlane.xlu0 %2388
        %v2390 = vsel %vm925, %v2382, -inf
        %2391 = vmax.xlane.f32.xlu0 %v2390
        %v2392 = vpop.xlane.xlu0 %2391
        %v2393 = vsub.f32 %v2336, %v2389
        %v2394 = vsub.f32 %v2382, %v2392
        %v2395 = vmul.f32 %v2393, 1.442695
        %v2396 = vpow.pop %v2395
        %v2397 = vmul.f32 %v2394, 1.442695
        %v2398 = vpow.pop %v2397
        %v2399 = vsel %vm925, %v2396, 0.0
        %2400 = vadd.xlane.f32.xlu0 %v2399
        %v2401 = vpop.xlane.xlu0 %2400
        %v2402 = vsel %vm925, %v2398, 0.0
        %2403 = vadd.xlane.f32.xlu0 %v2402
        %v2404 = vpop.xlane.xlu0 %2403
        %v2405 = vrcp.pop %v2401
        %v2406 = vrcp.pop %v2404
        %v2407 = vmul.f32 %v2396, %v2405
        %v2408 = vmul.f32 %v2398, %v2406
        %v2409 = vpack.c.bf16 %v2407, %v2407
        %v2410 = vpack.c.bf16 %v2408, %v2408
        %v2412 = vsel %vm925, %v2409, 0
        %v2415 = vsel %vm953, %v2293, 0
        %2417 = vmatprep.subr.bf16.mxu0 0
        %2418 = vmatpush1.bf16.msra.mxu0 %v2415
        %2419 = vmatprep.subr.bf16.mxu0 0
        %2420 = vmatpush1.bf16.msra.mxu0 0
        %2421 = vmatprep.subr.bf16.mxu0 0
        %2422 = vmatpush1.bf16.msra.mxu0 0
        %2423 = vmatprep.subr.bf16.mxu0 0
        %2424 = vmatpush1.bf16.msra.mxu0 0
        %2425 = vmatprep.subr.bf16.mxu0 0
        %2426 = vmatpush1.bf16.msra.mxu0 0
        %2427 = vmatprep.subr.bf16.mxu0 0
        %2428 = vmatpush1.bf16.msra.mxu0 0
        %2429 = vmatprep.subr.bf16.mxu0 0
        %2430 = vmatpush1.bf16.msra.mxu0 0
        %2431 = vmatprep.subr.bf16.mxu0 0
        %2432 = vmatpush1.bf16.msra.mxu0 0
        %2433 = vmatprep.subr.bf16.mxu0 0
        %2434 = vmatpush1.bf16.msra.mxu0 0
        %2435 = vmatprep.subr.bf16.mxu0 0
        %2436 = vmatpush1.bf16.msra.mxu0 0
        %2437 = vmatprep.subr.bf16.mxu0 0
        %2438 = vmatpush1.bf16.msra.mxu0 0
        %2439 = vmatprep.subr.bf16.mxu0 0
        %2440 = vmatpush1.bf16.msra.mxu0 0
        %2441 = vmatprep.subr.bf16.mxu0 0
        %2442 = vmatpush1.bf16.msra.mxu0 0
        %2443 = vmatprep.subr.bf16.mxu0 0
        %2444 = vmatpush1.bf16.msra.mxu0 0
        %2445 = vmatprep.subr.bf16.mxu0 0
        %2446 = vmatpush1.bf16.msra.mxu0 0
        %2447 = vmatprep.subr.bf16.mxu0 0
        %2448 = vmatpush1.bf16.msra.mxu0 0
        %2449 = vmatprep.mubr.bf16.mxu0 0
        %2450 = vmatmul.mubr.bf16.gmra.mrb[0].mxu0 %v2412
        %v2451 = vpop.f32.mrb[0].mxu0
        %v2452 = vadd.f32 0.0, %v2451
        %v2453 = vpop.f32.mrb[0].mxu0
        %v2454 = vpop.f32.mrb[0].mxu0
        %v2455 = vpop.f32.mrb[0].mxu0
        %2456 = vdwg.mxu0
        %v2458 = vsel %vm925, %v2410, 0
        %v2461 = vsel %vm953, %v2294, 0
        %2463 = vmatprep.subr.bf16.mxu0 0
        %2464 = vmatpush1.bf16.msra.mxu0 %v2461
        %2465 = vmatprep.subr.bf16.mxu0 0
        %2466 = vmatpush1.bf16.msra.mxu0 0
        %2467 = vmatprep.subr.bf16.mxu0 0
        %2468 = vmatpush1.bf16.msra.mxu0 0
        %2469 = vmatprep.subr.bf16.mxu0 0
        %2470 = vmatpush1.bf16.msra.mxu0 0
        %2471 = vmatprep.subr.bf16.mxu0 0
        %2472 = vmatpush1.bf16.msra.mxu0 0
        %2473 = vmatprep.subr.bf16.mxu0 0
        %2474 = vmatpush1.bf16.msra.mxu0 0
        %2475 = vmatprep.subr.bf16.mxu0 0
        %2476 = vmatpush1.bf16.msra.mxu0 0
        %2477 = vmatprep.subr.bf16.mxu0 0
        %2478 = vmatpush1.bf16.msra.mxu0 0
        %2479 = vmatprep.subr.bf16.mxu0 0
        %2480 = vmatpush1.bf16.msra.mxu0 0
        %2481 = vmatprep.subr.bf16.mxu0 0
        %2482 = vmatpush1.bf16.msra.mxu0 0
        %2483 = vmatprep.subr.bf16.mxu0 0
        %2484 = vmatpush1.bf16.msra.mxu0 0
        %2485 = vmatprep.subr.bf16.mxu0 0
        %2486 = vmatpush1.bf16.msra.mxu0 0
        %2487 = vmatprep.subr.bf16.mxu0 0
        %2488 = vmatpush1.bf16.msra.mxu0 0
        %2489 = vmatprep.subr.bf16.mxu0 0
        %2490 = vmatpush1.bf16.msra.mxu0 0
        %2491 = vmatprep.subr.bf16.mxu0 0
        %2492 = vmatpush1.bf16.msra.mxu0 0
        %2493 = vmatprep.subr.bf16.mxu0 0
        %2494 = vmatpush1.bf16.msra.mxu0 0
        %2495 = vmatprep.mubr.bf16.mxu0 0
        %2496 = vmatmul.mubr.bf16.gmra.mrb[0].mxu0 %v2458
        %v2497 = vpop.f32.mrb[0].mxu0
        %v2498 = vadd.f32 0.0, %v2497
        %v2499 = vpop.f32.mrb[0].mxu0
        %v2500 = vpop.f32.mrb[0].mxu0
        %v2501 = vpop.f32.mrb[0].mxu0
        %2502 = vdwg.mxu0
        %v2503 = vpack.c.bf16 %v2498, %v2452
        %s2504 = sadd.s32 24, %s1044
        %s2505 = smul.addr %s2504, 4
        %s2506 = scalar_lea.vmem %s2, %s2505
        %v2507 = vld [vmem:[%s2506] sm:$0xf]
        %v2508 = vld [vmem:[%s2506 + $0x4] sm:$0xf]
        %v2509 = vld [vmem:[%s2506 + $0x8] sm:$0xf]
        %v2510 = vld [vmem:[%s2506 + $0xc] sm:$0xf]
        %v2511 = vld [vmem:[%s2506 + $0x10] sm:$0xf]
        %v2512 = vld [vmem:[%s2506 + $0x14] sm:$0xf]
        %v2513 = vld [vmem:[%s2506 + $0x18] sm:$0xf]
        %v2514 = vld [vmem:[%s2506 + $0x1c] sm:$0xf]
        %v2523 = vunpack.c.l.b16 %v2507
        %v2524 = vunpack.c.l.b16 %v2508
        %v2525 = vunpack.c.l.b16 %v2509
        %v2526 = vunpack.c.l.b16 %v2510
        %v2527 = vunpack.c.l.b16 %v2511
        %v2528 = vunpack.c.l.b16 %v2512
        %v2529 = vunpack.c.l.b16 %v2513
        %v2530 = vunpack.c.l.b16 %v2514
        %v2531 = vpack.c.b16 %v2524, %v2523
        %v2532 = vpack.c.b16 %v2526, %v2525
        %v2533 = vpack.c.b16 %v2528, %v2527
        %v2534 = vpack.c.b16 %v2530, %v2529
        %v2540 = vsel %vm832, %v2503, 0
        %2542 = vmatprep.subr.bf16.mxu0 0
        %2543 = vmatpush1.bf16.msra.mxu0 %v2531
        %2544 = vmatprep.subr.bf16.mxu0 0
        %2545 = vmatpush1.bf16.msra.mxu0 %v2532
        %2546 = vmatprep.subr.bf16.mxu0 0
        %2547 = vmatpush1.bf16.msra.mxu0 %v2533
        %2548 = vmatprep.subr.bf16.mxu0 0
        %2549 = vmatpush1.bf16.msra.mxu0 %v2534
        %2550 = vmatprep.subr.bf16.mxu0 0
        %2551 = vmatpush1.bf16.msra.mxu0 0
        %2552 = vmatprep.subr.bf16.mxu0 0
        %2553 = vmatpush1.bf16.msra.mxu0 0
        %2554 = vmatprep.subr.bf16.mxu0 0
        %2555 = vmatpush1.bf16.msra.mxu0 0
        %2556 = vmatprep.subr.bf16.mxu0 0
        %2557 = vmatpush1.bf16.msra.mxu0 0
        %2558 = vmatprep.subr.bf16.mxu0 0
        %2559 = vmatpush1.bf16.msra.mxu0 0
        %2560 = vmatprep.subr.bf16.mxu0 0
        %2561 = vmatpush1.bf16.msra.mxu0 0
        %2562 = vmatprep.subr.bf16.mxu0 0
        %2563 = vmatpush1.bf16.msra.mxu0 0
        %2564 = vmatprep.subr.bf16.mxu0 0
        %2565 = vmatpush1.bf16.msra.mxu0 0
        %2566 = vmatprep.subr.bf16.mxu0 0
        %2567 = vmatpush1.bf16.msra.mxu0 0
        %2568 = vmatprep.subr.bf16.mxu0 0
        %2569 = vmatpush1.bf16.msra.mxu0 0
        %2570 = vmatprep.subr.bf16.mxu0 0
        %2571 = vmatpush1.bf16.msra.mxu0 0
        %2572 = vmatprep.subr.bf16.mxu0 0
        %2573 = vmatpush1.bf16.msra.mxu0 0
        %2574 = vmatprep.mubr.bf16.mxu0 0
        %2575 = vmatmul.mubr.bf16.gmra.mrb[0].mxu0 %v2540
        %v2576 = vpop.f32.mrb[0].mxu0
        %v2577 = vadd.f32 0.0, %v2576
        %v2578 = vpop.f32.mrb[0].mxu0
        %v2579 = vpop.f32.mrb[0].mxu0
        %v2580 = vadd.f32 0.0, %v2579
        %v2581 = vpop.f32.mrb[0].mxu0
        %2582 = vdwg.mxu0
        %v2583 = vadd.f32 %v2095, %v2577
        %v2584 = vadd.f32 %v2096, %v2580
        %v2585 = vlaneseq
        %v2586 = vshrl.u32 %v2585, 7
        %v2587 = vsub.s32 2, %v2586
        %v2588 = vrot.slane %v584, %v2587
        %v2589 = vadd.f32 %v2583, %v2588
        %v2590 = vadd.f32 %v2584, %v2588
        %v2591 = vadd.f32 %v588, %v2589
        %v2592 = vadd.f32 %v589, %v2590
        %v2593 = vsel %vm590, %v2591, 0.0
        %2594 = vadd.xlane.f32.xlu0 %v2593
        %v2595 = vpop.xlane.xlu0 %2594
        %v2596 = vsel %vm590, %v2592, 0.0
        %2597 = vadd.xlane.f32.xlu0 %v2596
        %v2598 = vpop.xlane.xlu0 %2597
        %v2599 = vmul.f32 %v2595, %v597
        %v2600 = vmul.f32 %v2598, %v597
        %v2601 = vsub.f32 %v2591, %v2599
        %v2602 = vsub.f32 %v2592, %v2600
        %v2603 = vmul.f32 %v2601, %v2601
        %v2604 = vmul.f32 %v2602, %v2602
        %v2605 = vsel %vm590, %v2603, 0.0
        %2606 = vadd.xlane.f32.xlu0 %v2605
        %v2607 = vpop.xlane.xlu0 %2606
        %v2608 = vsel %vm590, %v2604, 0.0
        %2609 = vadd.xlane.f32.xlu0 %v2608
        %v2610 = vpop.xlane.xlu0 %2609
        %v2611 = vmul.f32 %v2607, %v597
        %v2612 = vmul.f32 %v2610, %v597
        %v2613 = vadd.f32 %v2611, 1e-05
        %v2614 = vadd.f32 %v2612, 1e-05
        %v2615 = vrsqrt.pop %v2613
        %v2616 = vrsqrt.pop %v2614
        %v2617 = vmul.f32 %v2601, %v2615
        %v2618 = vmul.f32 %v2602, %v2616
        %v2619 = vlaneseq
        %v2620 = vshrl.u32 %v2619, 7
        %v2621 = vsub.s32 3, %v2620
        %v2622 = vrot.slane %v584, %v2621
        %v2623 = vmul.f32 %v2617, %v2622
        %v2624 = vmul.f32 %v2618, %v2622
        %v2625 = vlaneseq
        %v2626 = vshrl.u32 %v2625, 7
        %v2627 = vsub.s32 4, %v2626
        %v2628 = vrot.slane %v584, %v2627
        %v2629 = vadd.f32 %v2623, %v2628
        %v2630 = vadd.f32 %v2624, %v2628
        %v2631 = vpack.c.bf16 %v2630, %v2629
        %s2632 = smul.u32 %s38, 8
        %s2633 = smul.addr %s2632, 4
        %s2634 = scalar_lea.vmem %s3, %s2633
        %v2635 = vld [vmem:[%s2634] sm:$0xff]
        %v2636 = vld [vmem:[%s2634 + $0x8] sm:$0xff]
        %v2637 = vld [vmem:[%s2634 + $0x10] sm:$0xff]
        %v2638 = vld [vmem:[%s2634 + $0x18] sm:$0xff]
        %s2639 = smul.u32 %s38, 2
        %s2640 = scalar_lea.vmem %s4, %s2639
        %v2641 = vld [vmem:[%s2640] sm:$0x3]
        %v2643 = vlaneseq
        %v2644 = vshrl.u32 %v2643, 7
        %v2645 = vsub.s32 0, %v2644
        %v2646 = vrot.slane %v2641, %v2645
        %v2647 = vlaneseq
        %v2648 = vshrl.u32 %v2647, 7
        %v2649 = vsub.s32 1, %v2648
        %v2650 = vrot.slane %v2641, %v2649
        %v2657 = vunpack.c.l.b16 %v2635
        %v2658 = vunpack.c.h.b16 %v2635
        %v2659 = vunpack.c.l.b16 %v2636
        %v2660 = vunpack.c.h.b16 %v2636
        %v2661 = vunpack.c.l.b16 %v2637
        %v2662 = vunpack.c.h.b16 %v2637
        %v2663 = vunpack.c.l.b16 %v2638
        %v2664 = vunpack.c.h.b16 %v2638
        %v2665 = vpack.c.b16 %v2659, %v2657
        %v2666 = vpack.c.b16 %v2660, %v2658
        %v2667 = vpack.c.b16 %v2663, %v2661
        %v2668 = vpack.c.b16 %v2664, %v2662
        %v2674 = vsel %vm590, %v2631, 0
        %2676 = vmatprep.subr.bf16.mxu0 %v2666
        %2677 = vmatpush1.bf16.msra.mxu0 %v2665
        %2678 = vmatprep.subr.bf16.mxu0 %v2668
        %2679 = vmatpush1.bf16.msra.mxu0 %v2667
        %2680 = vmatprep.subr.bf16.mxu0 0
        %2681 = vmatpush1.bf16.msra.mxu0 0
        %2682 = vmatprep.subr.bf16.mxu0 0
        %2683 = vmatpush1.bf16.msra.mxu0 0
        %2684 = vmatprep.subr.bf16.mxu0 0
        %2685 = vmatpush1.bf16.msra.mxu0 0
        %2686 = vmatprep.subr.bf16.mxu0 0
        %2687 = vmatpush1.bf16.msra.mxu0 0
        %2688 = vmatprep.subr.bf16.mxu0 0
        %2689 = vmatpush1.bf16.msra.mxu0 0
        %2690 = vmatprep.subr.bf16.mxu0 0
        %2691 = vmatpush1.bf16.msra.mxu0 0
        %2692 = vmatprep.subr.bf16.mxu0 0
        %2693 = vmatpush1.bf16.msra.mxu0 0
        %2694 = vmatprep.subr.bf16.mxu0 0
        %2695 = vmatpush1.bf16.msra.mxu0 0
        %2696 = vmatprep.subr.bf16.mxu0 0
        %2697 = vmatpush1.bf16.msra.mxu0 0
        %2698 = vmatprep.subr.bf16.mxu0 0
        %2699 = vmatpush1.bf16.msra.mxu0 0
        %2700 = vmatprep.subr.bf16.mxu0 0
        %2701 = vmatpush1.bf16.msra.mxu0 0
        %2702 = vmatprep.subr.bf16.mxu0 0
        %2703 = vmatpush1.bf16.msra.mxu0 0
        %2704 = vmatprep.subr.bf16.mxu0 0
        %2705 = vmatpush1.bf16.msra.mxu0 0
        %2706 = vmatprep.subr.bf16.mxu0 0
        %2707 = vmatpush1.bf16.msra.mxu0 0
        %2708 = vmatprep.mubr.bf16.mxu0 0
        %2709 = vmatmul.mubr.bf16.gmra.mrb[0].mxu0 %v2674
        %v2710 = vpop.f32.mrb[0].mxu0
        %v2711 = vadd.f32 %v2646, %v2710
        %v2712 = vpop.f32.mrb[0].mxu0
        %v2713 = vadd.f32 %v2650, %v2712
        %v2714 = vpop.f32.mrb[0].mxu0
        %v2715 = vadd.f32 %v2646, %v2714
        %v2716 = vpop.f32.mrb[0].mxu0
        %v2717 = vadd.f32 %v2650, %v2716
        %2718 = vdwg.mxu0
        %v2719 = vmul.f32 %v2711, 0.5
        %v2720 = vmul.f32 %v2713, 0.5
        %v2721 = vmul.f32 %v2715, 0.5
        %v2722 = vmul.f32 %v2717, 0.5
        %v2723 = vmul.f32 %v2711, 0.044715
        %v2724 = vmul.f32 %v2713, 0.044715
        %v2725 = vmul.f32 %v2715, 0.044715
        %v2726 = vmul.f32 %v2717, 0.044715
        %v2727 = vmul.f32 %v2723, %v2711
        %v2728 = vmul.f32 %v2724, %v2713
        %v2729 = vmul.f32 %v2725, %v2715
        %v2730 = vmul.f32 %v2726, %v2717
        %v2731 = vmul.f32 %v2727, %v2711
        %v2732 = vmul.f32 %v2728, %v2713
        %v2733 = vmul.f32 %v2729, %v2715
        %v2734 = vmul.f32 %v2730, %v2717
        %v2735 = vadd.f32 %v2711, %v2731
        %v2736 = vadd.f32 %v2713, %v2732
        %v2737 = vadd.f32 %v2715, %v2733
        %v2738 = vadd.f32 %v2717, %v2734
        %v2739 = vmul.f32 %v2735, 0.7978846
        %v2740 = vmul.f32 %v2736, 0.7978846
        %v2741 = vmul.f32 %v2737, 0.7978846
        %v2742 = vmul.f32 %v2738, 0.7978846
        %v2743 = vtanh.pop %v2739
        %v2744 = vtanh.pop %v2740
        %v2745 = vtanh.pop %v2741
        %v2746 = vtanh.pop %v2742
        %v2747 = vadd.f32 %v2743, 1.0
        %v2748 = vadd.f32 %v2744, 1.0
        %v2749 = vadd.f32 %v2745, 1.0
        %v2750 = vadd.f32 %v2746, 1.0
        %v2751 = vmul.f32 %v2719, %v2747
        %v2752 = vmul.f32 %v2720, %v2748
        %v2753 = vmul.f32 %v2721, %v2749
        %v2754 = vmul.f32 %v2722, %v2750
        %v2755 = vpack.c.bf16 %v2753, %v2751
        %v2756 = vpack.c.bf16 %v2754, %v2752
        %s2757 = smul.addr %s1044, 4
        %s2758 = scalar_lea.vmem %s5, %s2757
        %v2759 = vld [vmem:[%s2758] sm:$0xf]
        %v2760 = vld [vmem:[%s2758 + $0x4] sm:$0xf]
        %v2761 = vld [vmem:[%s2758 + $0x8] sm:$0xf]
        %v2762 = vld [vmem:[%s2758 + $0xc] sm:$0xf]
        %v2763 = vld [vmem:[%s2758 + $0x10] sm:$0xf]
        %v2764 = vld [vmem:[%s2758 + $0x14] sm:$0xf]
        %v2765 = vld [vmem:[%s2758 + $0x18] sm:$0xf]
        %v2766 = vld [vmem:[%s2758 + $0x1c] sm:$0xf]
        %v2767 = vld [vmem:[%s2758 + $0x20] sm:$0xf]
        %v2768 = vld [vmem:[%s2758 + $0x24] sm:$0xf]
        %v2769 = vld [vmem:[%s2758 + $0x28] sm:$0xf]
        %v2770 = vld [vmem:[%s2758 + $0x2c] sm:$0xf]
        %v2771 = vld [vmem:[%s2758 + $0x30] sm:$0xf]
        %v2772 = vld [vmem:[%s2758 + $0x34] sm:$0xf]
        %v2773 = vld [vmem:[%s2758 + $0x38] sm:$0xf]
        %v2774 = vld [vmem:[%s2758 + $0x3c] sm:$0xf]
        %v2775 = vld [vmem:[%s2758 + $0x40] sm:$0xf]
        %v2776 = vld [vmem:[%s2758 + $0x44] sm:$0xf]
        %v2777 = vld [vmem:[%s2758 + $0x48] sm:$0xf]
        %v2778 = vld [vmem:[%s2758 + $0x4c] sm:$0xf]
        %v2779 = vld [vmem:[%s2758 + $0x50] sm:$0xf]
        %v2780 = vld [vmem:[%s2758 + $0x54] sm:$0xf]
        %v2781 = vld [vmem:[%s2758 + $0x58] sm:$0xf]
        %v2782 = vld [vmem:[%s2758 + $0x5c] sm:$0xf]
        %v2783 = vld [vmem:[%s2758 + $0x60] sm:$0xf]
        %v2784 = vld [vmem:[%s2758 + $0x64] sm:$0xf]
        %v2785 = vld [vmem:[%s2758 + $0x68] sm:$0xf]
        %v2786 = vld [vmem:[%s2758 + $0x6c] sm:$0xf]
        %v2787 = vld [vmem:[%s2758 + $0x70] sm:$0xf]
        %v2788 = vld [vmem:[%s2758 + $0x74] sm:$0xf]
        %v2789 = vld [vmem:[%s2758 + $0x78] sm:$0xf]
        %v2790 = vld [vmem:[%s2758 + $0x7c] sm:$0xf]
        %v2791 = vlaneseq
        %v2792 = vshrl.u32 %v2791, 7
        %v2793 = vsub.s32 5, %v2792
        %v2794 = vrot.slane %v584, %v2793
        %v2827 = vunpack.c.l.b16 %v2759
        %v2828 = vunpack.c.l.b16 %v2760
        %v2829 = vunpack.c.l.b16 %v2761
        %v2830 = vunpack.c.l.b16 %v2762
        %v2831 = vunpack.c.l.b16 %v2763
        %v2832 = vunpack.c.l.b16 %v2764
        %v2833 = vunpack.c.l.b16 %v2765
        %v2834 = vunpack.c.l.b16 %v2766
        %v2835 = vunpack.c.l.b16 %v2767
        %v2836 = vunpack.c.l.b16 %v2768
        %v2837 = vunpack.c.l.b16 %v2769
        %v2838 = vunpack.c.l.b16 %v2770
        %v2839 = vunpack.c.l.b16 %v2771
        %v2840 = vunpack.c.l.b16 %v2772
        %v2841 = vunpack.c.l.b16 %v2773
        %v2842 = vunpack.c.l.b16 %v2774
        %v2843 = vunpack.c.l.b16 %v2775
        %v2844 = vunpack.c.l.b16 %v2776
        %v2845 = vunpack.c.l.b16 %v2777
        %v2846 = vunpack.c.l.b16 %v2778
        %v2847 = vunpack.c.l.b16 %v2779
        %v2848 = vunpack.c.l.b16 %v2780
        %v2849 = vunpack.c.l.b16 %v2781
        %v2850 = vunpack.c.l.b16 %v2782
        %v2851 = vunpack.c.l.b16 %v2783
        %v2852 = vunpack.c.l.b16 %v2784
        %v2853 = vunpack.c.l.b16 %v2785
        %v2854 = vunpack.c.l.b16 %v2786
        %v2855 = vunpack.c.l.b16 %v2787
        %v2856 = vunpack.c.l.b16 %v2788
        %v2857 = vunpack.c.l.b16 %v2789
        %v2858 = vunpack.c.l.b16 %v2790
        %v2859 = vpack.c.b16 %v2828, %v2827
        %v2860 = vpack.c.b16 %v2830, %v2829
        %v2861 = vpack.c.b16 %v2832, %v2831
        %v2862 = vpack.c.b16 %v2834, %v2833
        %v2863 = vpack.c.b16 %v2836, %v2835
        %v2864 = vpack.c.b16 %v2838, %v2837
        %v2865 = vpack.c.b16 %v2840, %v2839
        %v2866 = vpack.c.b16 %v2842, %v2841
        %v2867 = vpack.c.b16 %v2844, %v2843
        %v2868 = vpack.c.b16 %v2846, %v2845
        %v2869 = vpack.c.b16 %v2848, %v2847
        %v2870 = vpack.c.b16 %v2850, %v2849
        %v2871 = vpack.c.b16 %v2852, %v2851
        %v2872 = vpack.c.b16 %v2854, %v2853
        %v2873 = vpack.c.b16 %v2856, %v2855
        %v2874 = vpack.c.b16 %v2858, %v2857
        %2891 = vmatprep.subr.bf16.mxu0 0
        %2892 = vmatpush1.bf16.msra.mxu0 %v2859
        %2893 = vmatprep.subr.bf16.mxu0 0
        %2894 = vmatpush1.bf16.msra.mxu0 %v2860
        %2895 = vmatprep.subr.bf16.mxu0 0
        %2896 = vmatpush1.bf16.msra.mxu0 %v2861
        %2897 = vmatprep.subr.bf16.mxu0 0
        %2898 = vmatpush1.bf16.msra.mxu0 %v2862
        %2899 = vmatprep.subr.bf16.mxu0 0
        %2900 = vmatpush1.bf16.msra.mxu0 %v2863
        %2901 = vmatprep.subr.bf16.mxu0 0
        %2902 = vmatpush1.bf16.msra.mxu0 %v2864
        %2903 = vmatprep.subr.bf16.mxu0 0
        %2904 = vmatpush1.bf16.msra.mxu0 %v2865
        %2905 = vmatprep.subr.bf16.mxu0 0
        %2906 = vmatpush1.bf16.msra.mxu0 %v2866
        %2907 = vmatprep.subr.bf16.mxu0 0
        %2908 = vmatpush1.bf16.msra.mxu0 %v2867
        %2909 = vmatprep.subr.bf16.mxu0 0
        %2910 = vmatpush1.bf16.msra.mxu0 %v2868
        %2911 = vmatprep.subr.bf16.mxu0 0
        %2912 = vmatpush1.bf16.msra.mxu0 %v2869
        %2913 = vmatprep.subr.bf16.mxu0 0
        %2914 = vmatpush1.bf16.msra.mxu0 %v2870
        %2915 = vmatprep.subr.bf16.mxu0 0
        %2916 = vmatpush1.bf16.msra.mxu0 %v2871
        %2917 = vmatprep.subr.bf16.mxu0 0
        %2918 = vmatpush1.bf16.msra.mxu0 %v2872
        %2919 = vmatprep.subr.bf16.mxu0 0
        %2920 = vmatpush1.bf16.msra.mxu0 %v2873
        %2921 = vmatprep.subr.bf16.mxu0 0
        %2922 = vmatpush1.bf16.msra.mxu0 %v2874
        %2923 = vmatprep.mubr.bf16.mxu0 %v2756
        %2924 = vmatmul.mubr.bf16.gmra.mrb[0].mxu0 %v2755
        %v2925 = vpop.f32.mrb[0].mxu0
        %v2926 = vadd.f32 %v2794, %v2925
        %v2927 = vpop.f32.mrb[0].mxu0
        %v2928 = vpop.f32.mrb[0].mxu0
        %v2929 = vadd.f32 %v2794, %v2928
        %v2930 = vpop.f32.mrb[0].mxu0
        %2931 = vdwg.mxu0
        %v2932 = vadd.f32 %v2591, %v2926
        %v2933 = vadd.f32 %v2592, %v2929
        %v2934 = vadd.f32 %v2932, %v588
        %v2935 = vadd.f32 %v2933, %v589
        %v2936 = vpack.c.bf16 %v2935, %v2934
        %v2937 = vsel %vm590, %v2934, 0.0
        %v2938 = vrot.slane %v2937, 4
        %v2939 = vadd.f32 %v2937, %v2938
        %v2940 = vrot.slane %v2939, 2
        %v2941 = vadd.f32 %v2939, %v2940
        %v2942 = vrot.slane %v2941, 1
        %v2943 = vadd.f32 %v2941, %v2942
        %v2944 = vsel %vm590, %v2935, 0.0
        %v2945 = vrot.slane %v2944, 4
        %v2946 = vadd.f32 %v2944, %v2945
        %v2947 = vrot.slane %v2946, 2
        %v2948 = vadd.f32 %v2946, %v2947
        %v2949 = vrot.slane %v2948, 1
        %v2950 = vadd.f32 %v2948, %v2949
        %v2951 = vrcp.pop 8.0
        %v2952 = vmul.f32 %v2943, %v2951
        %v2953 = vmul.f32 %v2950, %v2951
        %v2954 = vpack.c.bf16 %v2952, %v2952
        %v2955 = vpack.c.bf16 %v2953, %v2953
        %s2956 = smul.u32 %s38, 4
        %s2957 = smul.addr %s2956, 4
        %s2958 = scalar_lea.vmem %s6, %s2957
        %v2959 = vld [vmem:[%s2958] sm:$0xf]
        %v2960 = vld [vmem:[%s2958 + $0x4] sm:$0xf]
        %v2961 = vld [vmem:[%s2958 + $0x8] sm:$0xf]
        %v2962 = vld [vmem:[%s2958 + $0xc] sm:$0xf]
        %v2963 = vlaneseq
        %v2964 = vshrl.u32 %v2963, 7
        %v2965 = vsub.s32 6, %v2964
        %v2966 = vrot.slane %v584, %v2965
        %v2969 = vunpack.c.l.b16 %v2954
        %v2970 = vunpack.c.l.b16 %v2955
        %vm2971 = vcmask 1041409
        %v2972 = vsel %vm2971, %v2970, %v2969
        %v2973 = vpack.c.b16 %v2972, %v2972
        %v2978 = vunpack.c.l.b16 %v2959
        %v2979 = vunpack.c.l.b16 %v2960
        %v2980 = vunpack.c.l.b16 %v2961
        %v2981 = vunpack.c.l.b16 %v2962
        %v2982 = vpack.c.b16 %v2979, %v2978
        %v2983 = vpack.c.b16 %v2981, %v2980
        %v2987 = vsel %vm590, %v2973, 0
        %2989 = vmatprep.subr.bf16.mxu0 0
        %2990 = vmatpush1.bf16.msra.mxu0 %v2982
        %2991 = vmatprep.subr.bf16.mxu0 0
        %2992 = vmatpush1.bf16.msra.mxu0 %v2983
        %2993 = vmatprep.subr.bf16.mxu0 0
        %2994 = vmatpush1.bf16.msra.mxu0 0
        %2995 = vmatprep.subr.bf16.mxu0 0
        %2996 = vmatpush1.bf16.msra.mxu0 0
        %2997 = vmatprep.subr.bf16.mxu0 0
        %2998 = vmatpush1.bf16.msra.mxu0 0
        %2999 = vmatprep.subr.bf16.mxu0 0
        %3000 = vmatpush1.bf16.msra.mxu0 0
        %3001 = vmatprep.subr.bf16.mxu0 0
        %3002 = vmatpush1.bf16.msra.mxu0 0
        %3003 = vmatprep.subr.bf16.mxu0 0
        %3004 = vmatpush1.bf16.msra.mxu0 0
        %3005 = vmatprep.subr.bf16.mxu0 0
        %3006 = vmatpush1.bf16.msra.mxu0 0
        %3007 = vmatprep.subr.bf16.mxu0 0
        %3008 = vmatpush1.bf16.msra.mxu0 0
        %3009 = vmatprep.subr.bf16.mxu0 0
        %3010 = vmatpush1.bf16.msra.mxu0 0
        %3011 = vmatprep.subr.bf16.mxu0 0
        %3012 = vmatpush1.bf16.msra.mxu0 0
        %3013 = vmatprep.subr.bf16.mxu0 0
        %3014 = vmatpush1.bf16.msra.mxu0 0
        %3015 = vmatprep.subr.bf16.mxu0 0
        %3016 = vmatpush1.bf16.msra.mxu0 0
        %3017 = vmatprep.subr.bf16.mxu0 0
        %3018 = vmatpush1.bf16.msra.mxu0 0
        %3019 = vmatprep.subr.bf16.mxu0 0
        %3020 = vmatpush1.bf16.msra.mxu0 0
        %3021 = vmatprep.mubr.bf16.mxu0 0
        %3022 = vmatmul.mubr.bf16.gmra.mrb[0].mxu0 %v2987
        %v3023 = vpop.f32.mrb[0].mxu0
        %v3024 = vadd.f32 %v2966, %v3023
        %v3025 = vpop.f32.mrb[0].mxu0
        %v3026 = vpop.f32.mrb[0].mxu0
        %v3027 = vpop.f32.mrb[0].mxu0
        %3028 = vdwg.mxu0
        %v3029 = vpack.c.bf16 %v3024, %v3024
        %s3030 = smul.addr %s2956, 4
        %s3031 = scalar_lea.vmem %s7, %s3030
        %v3032 = vld [vmem:[%s3031] sm:$0xf]
        %v3033 = vld [vmem:[%s3031 + $0x4] sm:$0xf]
        %v3034 = vld [vmem:[%s3031 + $0x8] sm:$0xf]
        %v3035 = vld [vmem:[%s3031 + $0xc] sm:$0xf]
        %s3036 = scalar_lea.vmem %s8, %s38
        %v3037 = vld [vmem:[%s3036] sm:$0x1]
        %v3039 = vlaneseq
        %v3040 = vshrl.u32 %v3039, 7
        %v3041 = vsub.s32 0, %v3040
        %v3042 = vrot.slane %v3037, %v3041
        %v3048 = vunpack.c.l.b16 %v3032
        %v3049 = vunpack.c.l.b16 %v3033
        %v3050 = vunpack.c.l.b16 %v3034
        %v3051 = vunpack.c.l.b16 %v3035
        %v3052 = vpack.c.b16 %v3049, %v3048
        %v3053 = vpack.c.b16 %v3051, %v3050
        %v3057 = vsel %vm590, %v3029, 0
        %3059 = vmatprep.subr.bf16.mxu0 0
        %3060 = vmatpush1.bf16.msra.mxu0 %v3052
        %3061 = vmatprep.subr.bf16.mxu0 0
        %3062 = vmatpush1.bf16.msra.mxu0 %v3053
        %3063 = vmatprep.subr.bf16.mxu0 0
        %3064 = vmatpush1.bf16.msra.mxu0 0
        %3065 = vmatprep.subr.bf16.mxu0 0
        %3066 = vmatpush1.bf16.msra.mxu0 0
        %3067 = vmatprep.subr.bf16.mxu0 0
        %3068 = vmatpush1.bf16.msra.mxu0 0
        %3069 = vmatprep.subr.bf16.mxu0 0
        %3070 = vmatpush1.bf16.msra.mxu0 0
        %3071 = vmatprep.subr.bf16.mxu0 0
        %3072 = vmatpush1.bf16.msra.mxu0 0
        %3073 = vmatprep.subr.bf16.mxu0 0
        %3074 = vmatpush1.bf16.msra.mxu0 0
        %3075 = vmatprep.subr.bf16.mxu0 0
        %3076 = vmatpush1.bf16.msra.mxu0 0
        %3077 = vmatprep.subr.bf16.mxu0 0
        %3078 = vmatpush1.bf16.msra.mxu0 0
        %3079 = vmatprep.subr.bf16.mxu0 0
        %3080 = vmatpush1.bf16.msra.mxu0 0
        %3081 = vmatprep.subr.bf16.mxu0 0
        %3082 = vmatpush1.bf16.msra.mxu0 0
        %3083 = vmatprep.subr.bf16.mxu0 0
        %3084 = vmatpush1.bf16.msra.mxu0 0
        %3085 = vmatprep.subr.bf16.mxu0 0
        %3086 = vmatpush1.bf16.msra.mxu0 0
        %3087 = vmatprep.subr.bf16.mxu0 0
        %3088 = vmatpush1.bf16.msra.mxu0 0
        %3089 = vmatprep.subr.bf16.mxu0 0
        %3090 = vmatpush1.bf16.msra.mxu0 0
        %3091 = vmatprep.mubr.bf16.mxu0 0
        %3092 = vmatmul.mubr.bf16.gmra.mrb[0].mxu0 %v3057
        %v3093 = vpop.f32.mrb[0].mxu0
        %v3094 = vadd.f32 %v3042, %v3093
        %v3095 = vpop.f32.mrb[0].mxu0
        %v3096 = vpop.f32.mrb[0].mxu0
        %v3097 = vpop.f32.mrb[0].mxu0
        %3098 = vdwg.mxu0
        %vm3099 = vcmp.gt.f32.partialorder %v3094, 20.0
        %v3100 = vmin.f32 %v3094, 20.0
        %v3101 = vmul.f32 %v3100, 1.442695
        %v3102 = vpow.pop %v3101
        %v3103 = vadd.f32 %v3102, 1.0
        %v3104 = vlog2.pop %v3103
        %v3105 = vmul.f32 %v3104, 0.6931472
        %v3106 = vsel %vm3099, %v3094, %v3105
        %vm3107 = vcmask 25600
        %3108 = vst.msk [vmem:[%s568] sm:$0x3] %vm3107, %v3106
        %v3109 = vsel %vm3107, %v3106, 0.0
        %3110 = vadd.xlane.f32.xlu0 %v3109
        %v3111 = vpop.xlane.xlu0 %3110
        %v3112 = vadd.f32 %v3111, 4.0
        %v3113 = vrcp.pop %v3112
        %v3114 = vmul.f32 4.0, %v3113
        %v3115 = vsub.f32 1.0, %v3114
        %s3116 = smul.addr %s2956, 4
        %s3117 = scalar_lea.vmem %s9, %s3116
        %v3118 = vld [vmem:[%s3117] sm:$0xf]
        %v3119 = vld [vmem:[%s3117 + $0x4] sm:$0xf]
        %v3120 = vld [vmem:[%s3117 + $0x8] sm:$0xf]
        %v3121 = vld [vmem:[%s3117 + $0xc] sm:$0xf]
        %v3122 = vlaneseq
        %v3123 = vshrl.u32 %v3122, 7
        %v3124 = vsub.s32 7, %v3123
        %v3125 = vrot.slane %v584, %v3124
        %v3130 = vunpack.c.l.b16 %v3118
        %v3131 = vunpack.c.l.b16 %v3119
        %v3132 = vunpack.c.l.b16 %v3120
        %v3133 = vunpack.c.l.b16 %v3121
        %v3134 = vpack.c.b16 %v3131, %v3130
        %v3135 = vpack.c.b16 %v3133, %v3132
        %v3139 = vsel %vm590, %v2936, 0
        %3141 = vmatprep.subr.bf16.mxu0 0
        %3142 = vmatpush1.bf16.msra.mxu0 %v3134
        %3143 = vmatprep.subr.bf16.mxu0 0
        %3144 = vmatpush1.bf16.msra.mxu0 %v3135
        %3145 = vmatprep.subr.bf16.mxu0 0
        %3146 = vmatpush1.bf16.msra.mxu0 0
        %3147 = vmatprep.subr.bf16.mxu0 0
        %3148 = vmatpush1.bf16.msra.mxu0 0
        %3149 = vmatprep.subr.bf16.mxu0 0
        %3150 = vmatpush1.bf16.msra.mxu0 0
        %3151 = vmatprep.subr.bf16.mxu0 0
        %3152 = vmatpush1.bf16.msra.mxu0 0
        %3153 = vmatprep.subr.bf16.mxu0 0
        %3154 = vmatpush1.bf16.msra.mxu0 0
        %3155 = vmatprep.subr.bf16.mxu0 0
        %3156 = vmatpush1.bf16.msra.mxu0 0
        %3157 = vmatprep.subr.bf16.mxu0 0
        %3158 = vmatpush1.bf16.msra.mxu0 0
        %3159 = vmatprep.subr.bf16.mxu0 0
        %3160 = vmatpush1.bf16.msra.mxu0 0
        %3161 = vmatprep.subr.bf16.mxu0 0
        %3162 = vmatpush1.bf16.msra.mxu0 0
        %3163 = vmatprep.subr.bf16.mxu0 0
        %3164 = vmatpush1.bf16.msra.mxu0 0
        %3165 = vmatprep.subr.bf16.mxu0 0
        %3166 = vmatpush1.bf16.msra.mxu0 0
        %3167 = vmatprep.subr.bf16.mxu0 0
        %3168 = vmatpush1.bf16.msra.mxu0 0
        %3169 = vmatprep.subr.bf16.mxu0 0
        %3170 = vmatpush1.bf16.msra.mxu0 0
        %3171 = vmatprep.subr.bf16.mxu0 0
        %3172 = vmatpush1.bf16.msra.mxu0 0
        %3173 = vmatprep.mubr.bf16.mxu0 0
        %3174 = vmatmul.mubr.bf16.gmra.mrb[0].mxu0 %v3139
        %v3175 = vpop.f32.mrb[0].mxu0
        %v3176 = vadd.f32 %v3125, %v3175
        %v3177 = vpop.f32.mrb[0].mxu0
        %v3178 = vpop.f32.mrb[0].mxu0
        %v3179 = vadd.f32 %v3125, %v3178
        %v3180 = vpop.f32.mrb[0].mxu0
        %3181 = vdwg.mxu0
        %v3182 = vmul.f32 %v3176, 0.5
        %v3183 = vmul.f32 %v3179, 0.5
        %v3184 = vmul.f32 %v3176, 0.044715
        %v3185 = vmul.f32 %v3179, 0.044715
        %v3186 = vmul.f32 %v3184, %v3176
        %v3187 = vmul.f32 %v3185, %v3179
        %v3188 = vmul.f32 %v3186, %v3176
        %v3189 = vmul.f32 %v3187, %v3179
        %v3190 = vadd.f32 %v3176, %v3188
        %v3191 = vadd.f32 %v3179, %v3189
        %v3192 = vmul.f32 %v3190, 0.7978846
        %v3193 = vmul.f32 %v3191, 0.7978846
        %v3194 = vtanh.pop %v3192
        %v3195 = vtanh.pop %v3193
        %v3196 = vadd.f32 %v3194, 1.0
        %v3197 = vadd.f32 %v3195, 1.0
        %v3198 = vmul.f32 %v3182, %v3196
        %v3199 = vmul.f32 %v3183, %v3197
        %v3200 = vpack.c.bf16 %v3199, %v3198
        %s3201 = smul.addr %s2956, 4
        %s3202 = scalar_lea.vmem %s10, %s3201
        %v3203 = vld [vmem:[%s3202] sm:$0xf]
        %v3204 = vld [vmem:[%s3202 + $0x4] sm:$0xf]
        %v3205 = vld [vmem:[%s3202 + $0x8] sm:$0xf]
        %v3206 = vld [vmem:[%s3202 + $0xc] sm:$0xf]
        %v3207 = vlaneseq
        %v3208 = vshrl.u32 %v3207, 7
        %v3209 = vsub.s32 0, %v3208
        %v3210 = vrot.slane %v585, %v3209
        %v3215 = vunpack.c.l.b16 %v3203
        %v3216 = vunpack.c.l.b16 %v3204
        %v3217 = vunpack.c.l.b16 %v3205
        %v3218 = vunpack.c.l.b16 %v3206
        %v3219 = vpack.c.b16 %v3216, %v3215
        %v3220 = vpack.c.b16 %v3218, %v3217
        %v3224 = vsel %vm590, %v3200, 0
        %3226 = vmatprep.subr.bf16.mxu0 0
        %3227 = vmatpush1.bf16.msra.mxu0 %v3219
        %3228 = vmatprep.subr.bf16.mxu0 0
        %3229 = vmatpush1.bf16.msra.mxu0 %v3220
        %3230 = vmatprep.subr.bf16.mxu0 0
        %3231 = vmatpush1.bf16.msra.mxu0 0
        %3232 = vmatprep.subr.bf16.mxu0 0
        %3233 = vmatpush1.bf16.msra.mxu0 0
        %3234 = vmatprep.subr.bf16.mxu0 0
        %3235 = vmatpush1.bf16.msra.mxu0 0
        %3236 = vmatprep.subr.bf16.mxu0 0
        %3237 = vmatpush1.bf16.msra.mxu0 0
        %3238 = vmatprep.subr.bf16.mxu0 0
        %3239 = vmatpush1.bf16.msra.mxu0 0
        %3240 = vmatprep.subr.bf16.mxu0 0
        %3241 = vmatpush1.bf16.msra.mxu0 0
        %3242 = vmatprep.subr.bf16.mxu0 0
        %3243 = vmatpush1.bf16.msra.mxu0 0
        %3244 = vmatprep.subr.bf16.mxu0 0
        %3245 = vmatpush1.bf16.msra.mxu0 0
        %3246 = vmatprep.subr.bf16.mxu0 0
        %3247 = vmatpush1.bf16.msra.mxu0 0
        %3248 = vmatprep.subr.bf16.mxu0 0
        %3249 = vmatpush1.bf16.msra.mxu0 0
        %3250 = vmatprep.subr.bf16.mxu0 0
        %3251 = vmatpush1.bf16.msra.mxu0 0
        %3252 = vmatprep.subr.bf16.mxu0 0
        %3253 = vmatpush1.bf16.msra.mxu0 0
        %3254 = vmatprep.subr.bf16.mxu0 0
        %3255 = vmatpush1.bf16.msra.mxu0 0
        %3256 = vmatprep.subr.bf16.mxu0 0
        %3257 = vmatpush1.bf16.msra.mxu0 0
        %3258 = vmatprep.mubr.bf16.mxu0 0
        %3259 = vmatmul.mubr.bf16.gmra.mrb[0].mxu0 %v3224
        %v3260 = vpop.f32.mrb[0].mxu0
        %v3261 = vadd.f32 %v3210, %v3260
        %v3262 = vpop.f32.mrb[0].mxu0
        %v3263 = vpop.f32.mrb[0].mxu0
        %v3264 = vadd.f32 %v3210, %v3263
        %v3265 = vpop.f32.mrb[0].mxu0
        %3266 = vdwg.mxu0
        %v3267 = vsel %vm590, %v3261, 0.0
        %3268 = vadd.xlane.f32.xlu0 %v3267
        %v3269 = vpop.xlane.xlu0 %3268
        %v3270 = vsel %vm590, %v3264, 0.0
        %3271 = vadd.xlane.f32.xlu0 %v3270
        %v3272 = vpop.xlane.xlu0 %3271
        %v3273 = vmul.f32 %v3269, %v597
        %v3274 = vmul.f32 %v3272, %v597
        %v3275 = vsub.f32 %v3261, %v3273
        %v3276 = vsub.f32 %v3264, %v3274
        %v3277 = vmul.f32 %v3275, %v3275
        %v3278 = vmul.f32 %v3276, %v3276
        %v3279 = vsel %vm590, %v3277, 0.0
        %3280 = vadd.xlane.f32.xlu0 %v3279
        %v3281 = vpop.xlane.xlu0 %3280
        %v3282 = vsel %vm590, %v3278, 0.0
        %3283 = vadd.xlane.f32.xlu0 %v3282
        %v3284 = vpop.xlane.xlu0 %3283
        %v3285 = vmul.f32 %v3281, %v597
        %v3286 = vmul.f32 %v3284, %v597
        %v3287 = vadd.f32 %v3285, 1e-05
        %v3288 = vadd.f32 %v3286, 1e-05
        %v3289 = vrsqrt.pop %v3287
        %v3290 = vrsqrt.pop %v3288
        %v3291 = vmul.f32 %v3275, %v3289
        %v3292 = vmul.f32 %v3276, %v3290
        %v3293 = vlaneseq
        %v3294 = vshrl.u32 %v3293, 7
        %v3295 = vsub.s32 1, %v3294
        %v3296 = vrot.slane %v585, %v3295
        %v3297 = vmul.f32 %v3291, %v3296
        %v3298 = vmul.f32 %v3292, %v3296
        %v3299 = vlaneseq
        %v3300 = vshrl.u32 %v3299, 7
        %v3301 = vsub.s32 2, %v3300
        %v3302 = vrot.slane %v585, %v3301
        %v3303 = vadd.f32 %v3297, %v3302
        %v3304 = vadd.f32 %v3298, %v3302
        %v3305 = vadd.f32 %v3303, %v2934
        %v3306 = vadd.f32 %v3304, %v2935
        %v3307 = vsel %vm590, %v3305, 0.0
        %v3308 = vrot.slane %v3307, 4
        %v3309 = vadd.f32 %v3307, %v3308
        %v3310 = vrot.slane %v3309, 2
        %v3311 = vadd.f32 %v3309, %v3310
        %v3312 = vrot.slane %v3311, 1
        %v3313 = vadd.f32 %v3311, %v3312
        %v3314 = vsel %vm590, %v3306, 0.0
        %v3315 = vrot.slane %v3314, 4
        %v3316 = vadd.f32 %v3314, %v3315
        %v3317 = vrot.slane %v3316, 2
        %v3318 = vadd.f32 %v3316, %v3317
        %v3319 = vrot.slane %v3318, 1
        %v3320 = vadd.f32 %v3318, %v3319
        %v3321 = vmul.f32 %v3313, %v2951
        %v3322 = vmul.f32 %v3320, %v2951
        %p3323 = scmp.eq.s32.totalorder %s38, 0
        // Predicated region
        $region85: #{tpu_custom_call.1} parent=83 // pred_check
          %p3324 = pneg %p3323
        $region86: #{tpu_custom_call.1} parent=83 // pred_check_branch
          %3326 = sbr.rel (%p3324) target = $region88
        $region87: #{tpu_custom_call.1} parent=83 // pred_region
          %vm3327 = vcmask 254976
          %3328 = vst.msk [vmem:[#allocation2] sm:$0x3] %vm3327, 0.0
        $region88: #{tpu_custom_call.1} parent=83 // pred_fallthru
          _
        %v3329 = vld [vmem:[#allocation2] sm:$0x3]
        %v3332 = vsel %vm2971, %v3322, %v3321
        %v3334 = vmul.f32 %v3115, %v3332
        %v3335 = vadd.f32 %v3329, %v3334
        %vm3336 = vcmask 254976
        %3337 = vst.msk [vmem:[#allocation2] sm:$0x3] %vm3336, %v3335
        %p3338 = scmp.eq.s32.totalorder %s38, 2
        // Predicated region
        $region89: #{tpu_custom_call.1} parent=83 // pred_check
          %p3339 = pneg %p3338
        $region90: #{tpu_custom_call.1} parent=83 // pred_check_branch
          %3341 = sbr.rel (%p3339) target = $region92
        $region91: #{tpu_custom_call.1} parent=83 // pred_region
          %v3342 = vld [vmem:[#allocation2] sm:$0x3]
          %v3343 = vpack.c.bf16 %v3342, %v3342
          %v3344 = vld [vmem:[%s12] sm:$0xf]
          %v3345 = vld [vmem:[%s12 + $0x4] sm:$0xf]
          %v3346 = vld [vmem:[%s12 + $0x8] sm:$0xf]
          %v3347 = vld [vmem:[%s12 + $0xc] sm:$0xf]
          %v3348 = vld [vmem:[%s13] sm:$0x1]
          %v3350 = vlaneseq
          %v3351 = vshrl.u32 %v3350, 7
          %v3352 = vsub.s32 0, %v3351
          %v3353 = vrot.slane %v3348, %v3352
          %v3359 = vunpack.c.l.b16 %v3344
          %v3360 = vunpack.c.l.b16 %v3345
          %v3361 = vunpack.c.l.b16 %v3346
          %v3362 = vunpack.c.l.b16 %v3347
          %v3363 = vpack.c.b16 %v3360, %v3359
          %v3364 = vpack.c.b16 %v3362, %v3361
          %v3368 = vsel %vm590, %v3343, 0
          %3370 = vmatprep.subr.bf16.mxu0 0
          %3371 = vmatpush1.bf16.msra.mxu0 %v3363
          %3372 = vmatprep.subr.bf16.mxu0 0
          %3373 = vmatpush1.bf16.msra.mxu0 %v3364
          %3374 = vmatprep.subr.bf16.mxu0 0
          %3375 = vmatpush1.bf16.msra.mxu0 0
          %3376 = vmatprep.subr.bf16.mxu0 0
          %3377 = vmatpush1.bf16.msra.mxu0 0
          %3378 = vmatprep.subr.bf16.mxu0 0
          %3379 = vmatpush1.bf16.msra.mxu0 0
          %3380 = vmatprep.subr.bf16.mxu0 0
          %3381 = vmatpush1.bf16.msra.mxu0 0
          %3382 = vmatprep.subr.bf16.mxu0 0
          %3383 = vmatpush1.bf16.msra.mxu0 0
          %3384 = vmatprep.subr.bf16.mxu0 0
          %3385 = vmatpush1.bf16.msra.mxu0 0
          %3386 = vmatprep.subr.bf16.mxu0 0
          %3387 = vmatpush1.bf16.msra.mxu0 0
          %3388 = vmatprep.subr.bf16.mxu0 0
          %3389 = vmatpush1.bf16.msra.mxu0 0
          %3390 = vmatprep.subr.bf16.mxu0 0
          %3391 = vmatpush1.bf16.msra.mxu0 0
          %3392 = vmatprep.subr.bf16.mxu0 0
          %3393 = vmatpush1.bf16.msra.mxu0 0
          %3394 = vmatprep.subr.bf16.mxu0 0
          %3395 = vmatpush1.bf16.msra.mxu0 0
          %3396 = vmatprep.subr.bf16.mxu0 0
          %3397 = vmatpush1.bf16.msra.mxu0 0
          %3398 = vmatprep.subr.bf16.mxu0 0
          %3399 = vmatpush1.bf16.msra.mxu0 0
          %3400 = vmatprep.subr.bf16.mxu0 0
          %3401 = vmatpush1.bf16.msra.mxu0 0
          %3402 = vmatprep.mubr.bf16.mxu0 0
          %3403 = vmatmul.mubr.bf16.gmra.mrb[0].mxu0 %v3368
          %v3404 = vpop.f32.mrb[0].mxu0
          %v3405 = vadd.f32 %v3353, %v3404
          %v3406 = vpop.f32.mrb[0].mxu0
          %v3407 = vpop.f32.mrb[0].mxu0
          %v3408 = vpop.f32.mrb[0].mxu0
          %3409 = vdwg.mxu0
          %v3410 = vpack.c.bf16 %v3405, %v3405
          %v3411 = vld [vmem:[%s14] sm:$0xf]
          %v3412 = vld [vmem:[%s14 + $0x4] sm:$0xf]
          %v3413 = vld [vmem:[%s14 + $0x8] sm:$0xf]
          %v3414 = vld [vmem:[%s14 + $0xc] sm:$0xf]
          %v3415 = vld [vmem:[%s15] sm:$0x1]
          %v3417 = vlaneseq
          %v3418 = vshrl.u32 %v3417, 7
          %v3419 = vsub.s32 0, %v3418
          %v3420 = vrot.slane %v3415, %v3419
          %v3426 = vunpack.c.l.b16 %v3411
          %v3427 = vunpack.c.l.b16 %v3412
          %v3428 = vunpack.c.l.b16 %v3413
          %v3429 = vunpack.c.l.b16 %v3414
          %v3430 = vpack.c.b16 %v3427, %v3426
          %v3431 = vpack.c.b16 %v3429, %v3428
          %v3435 = vsel %vm590, %v3410, 0
          %3437 = vmatprep.subr.bf16.mxu0 0
          %3438 = vmatpush1.bf16.msra.mxu0 %v3430
          %3439 = vmatprep.subr.bf16.mxu0 0
          %3440 = vmatpush1.bf16.msra.mxu0 %v3431
          %3441 = vmatprep.subr.bf16.mxu0 0
          %3442 = vmatpush1.bf16.msra.mxu0 0
          %3443 = vmatprep.subr.bf16.mxu0 0
          %3444 = vmatpush1.bf16.msra.mxu0 0
          %3445 = vmatprep.subr.bf16.mxu0 0
          %3446 = vmatpush1.bf16.msra.mxu0 0
          %3447 = vmatprep.subr.bf16.mxu0 0
          %3448 = vmatpush1.bf16.msra.mxu0 0
          %3449 = vmatprep.subr.bf16.mxu0 0
          %3450 = vmatpush1.bf16.msra.mxu0 0
          %3451 = vmatprep.subr.bf16.mxu0 0
          %3452 = vmatpush1.bf16.msra.mxu0 0
          %3453 = vmatprep.subr.bf16.mxu0 0
          %3454 = vmatpush1.bf16.msra.mxu0 0
          %3455 = vmatprep.subr.bf16.mxu0 0
          %3456 = vmatpush1.bf16.msra.mxu0 0
          %3457 = vmatprep.subr.bf16.mxu0 0
          %3458 = vmatpush1.bf16.msra.mxu0 0
          %3459 = vmatprep.subr.bf16.mxu0 0
          %3460 = vmatpush1.bf16.msra.mxu0 0
          %3461 = vmatprep.subr.bf16.mxu0 0
          %3462 = vmatpush1.bf16.msra.mxu0 0
          %3463 = vmatprep.subr.bf16.mxu0 0
          %3464 = vmatpush1.bf16.msra.mxu0 0
          %3465 = vmatprep.subr.bf16.mxu0 0
          %3466 = vmatpush1.bf16.msra.mxu0 0
          %3467 = vmatprep.subr.bf16.mxu0 0
          %3468 = vmatpush1.bf16.msra.mxu0 0
          %3469 = vmatprep.mubr.bf16.mxu0 0
          %3470 = vmatmul.mubr.bf16.gmra.mrb[0].mxu0 %v3435
          %v3471 = vpop.f32.mrb[0].mxu0
          %v3472 = vadd.f32 %v3420, %v3471
          %v3473 = vpop.f32.mrb[0].mxu0
          %v3474 = vpop.f32.mrb[0].mxu0
          %v3475 = vpop.f32.mrb[0].mxu0
          %3476 = vdwg.mxu0
          %3477 = vst.msk [vmem:[#allocation5] sm:$0x3] %vm3107, %v3472
        $region92: #{tpu_custom_call.1} parent=83 // pred_fallthru
          _
        %s3478 = sand.u32 %s398, 1
        %s3479 = scalar_lea.sflag [#allocation4], %s3478
        %s3480 = sand.u32 %s398, 1
        %s3481 = smul.addr %s3480, 2
        %s3482 = scalar_lea.vmem [#allocation3], %s3481
        // Predicated region
        $region93: #{tpu_custom_call.1} parent=83 // pred_check
          %p3483 = pneg %p408
        $region94: #{tpu_custom_call.1} parent=83 // pred_check_branch
          %3485 = sbr.rel (%p3483) target = $region96
        $region95: #{tpu_custom_call.1} parent=83 // pred_region
          %s3487 = ssub.s32 32, 32
          %3488 = vsyncadd %s3479, %s3487
          %s3489 = sadd.s32 %s37, %s38
          %s3490 = smul.addr %s3489, 32
          %s3491 = scalar_lea.hbm %s16, %s3490
          %s3493 = sshll.u32 %s3482, 4
          %s3494 = int_to_ptr.vmem [resolvable:$true] %s3493
          %3496 = dma.vmem_to_hbm [thread:$0]  %s3494, 32, %s3491, %s3479
        $region96: #{tpu_custom_call.1} parent=83 // pred_fallthru
          _
        // Predicated region
        $region97: #{tpu_custom_call.1} parent=83 // pred_check
          %p3497 = pneg %p434
        $region98: #{tpu_custom_call.1} parent=83 // pred_check_branch
          %3499 = sbr.rel (%p3497) target = $region100
        $region99: #{tpu_custom_call.1} parent=83 // pred_region
          %s3501 = ssub.s32 32, 32
          %3502 = vsyncadd [#allocation6], %s3501
          %s3503 = smul.addr %s37, 32
          %s3504 = scalar_lea.hbm %s17, %s3503
          %s3506 = sshll.u32 [#allocation5], 4
          %s3507 = int_to_ptr.vmem [resolvable:$true] %s3506
          %3509 = dma.vmem_to_hbm [thread:$0]  %s3507, 32, %s3504, [#allocation6]
        $region100: #{tpu_custom_call.1} parent=83 // pred_fallthru
          _
        // Predicated region
        $region101: #{tpu_custom_call.1} parent=83 // pred_check
          %p3510 = pneg %p434
        $region102: #{tpu_custom_call.1} parent=83 // pred_check_branch
          %3512 = sbr.rel (%p3510) target = $region104
        $region103: #{tpu_custom_call.1} parent=83 // pred_region
          %3513 = dma.done [#allocation6], 32
        $region104: #{tpu_custom_call.1} parent=83 // pred_fallthru
          _
      $region84: #{tpu_custom_call.1} parent=5 // pred_fallthru
        _
      %p3514 = scmp.le.s32.totalorder 2, %s28
      // Predicated region
      $region105: #{tpu_custom_call.1} parent=5 // pred_check
        %p3515 = pneg %p3514
      $region106: #{tpu_custom_call.1} parent=5 // pred_check_branch
        %3517 = sbr.rel (%p3515) target = $region108
      $region107: #{tpu_custom_call.1} parent=5 // pred_region
        %s3518 = ssub.s32 %s28, 2
        // Predicated region
        $region109: #{tpu_custom_call.1} parent=107 // pred_check
          %p3519 = pneg %p414
        $region110: #{tpu_custom_call.1} parent=107 // pred_check_branch
          %3521 = sbr.rel (%p3519) target = $region112
        $region111: #{tpu_custom_call.1} parent=107 // pred_region
          %s3522 = sand.u32 %s399, 1
          %s3523 = scalar_lea.sflag [#allocation4], %s3522
          %s3524 = sand.u32 %s399, 1
          %s3525 = smul.addr %s3524, 2
          %s3526 = scalar_lea.vmem [#allocation3], %s3525
          %3527 = dma.done %s3523, 32
        $region112: #{tpu_custom_call.1} parent=107 // pred_fallthru
          _
      $region108: #{tpu_custom_call.1} parent=5 // pred_fallthru
        _
    $region6: #{tpu_custom_call.1} parent=1 // loop_footer
      %s32 = sadd.s32 1, %s28
    $region7: #{tpu_custom_call.1} parent=1 // loop_footer_branch
      %27 = sbr.rel target = $region3
    $region8: #{tpu_custom_call.1} parent=1 // loop_exit
      _
    %3528 = vsyncpa [#allocation4], 1
    %s3529 = scalar_lea.sflag [#allocation4], 1
    %3530 = vsyncpa %s3529, 1
    %3531 = vsyncpa [#allocation6], 1

</llo_original>
